<compile_context>
chip_gen: v6e
topology: v6e:2x2x1
jax: 0.10.0
libtpu: 0.0.40
codegen_flags: <defaults>
</compile_context>

<pallas_src>
import jax
import jax.numpy as jnp
from jax.experimental import pallas as pl
from jax.experimental.pallas import tpu as pltpu


PAD = 5          # canvas zero border; covers pad=1 (cv1), 3 (pool), 5 (h/v conv)
DWK = 11         # depthwise kernel length


# ------------------------------ fused kernel ------------------------------

def _make_caa_kernel(C, H, W, Hp, Wp, M, LM, shortcut):
    """Fused CAA_Bottleneck kernel for one batch element.

    Feature maps live in VMEM as (C, L) with L = Hp*Wp: a zero-padded
    (Hp, Wp) canvas flattened onto the lane axis.  A flat shift d is a 2-D
    shift of (d // Wp, d % Wp).  Canvases carry a zeroed flat margin (M lanes
    left, LM-M-L lanes right, both >= 5*Wp+5) so every shifted view
    ref[:, M+d : M+d+L] is in-bounds and reads zeros outside the canvas.
    """
    L = Hp * Wp

    def sigmoid(v):
        # divide on the EUP slot (approx reciprocal); exp also on EUP.
        return pl.reciprocal(1.0 + jnp.exp(-v), approx=True)

    def silu(v):
        return v * sigmoid(v)

    def kernel(x_ref, mask_ref,
               wcv1_ref, bcv1_ref, w1_ref, b1_ref,
               wh_ref, bh_ref, wv_ref, bv_ref, w2_ref, b2_ref,
               out_ref, buf_a, buf_b, col_ref):
        mask = mask_ref[...]                         # (1, L): 1 inside valid HxW

        # buf_a's full zero doubles as the zero padding of the input canvas
        # (VMEM stores only, no HBM traffic).  buf_b interior is always fully
        # overwritten before being read, so only its margins need clearing.
        buf_a[...] = jnp.zeros_like(buf_a)
        buf_b[:, :M] = jnp.zeros((C, M), jnp.float32)
        buf_b[:, M + L:] = jnp.zeros((C, LM - M - L), jnp.float32)

        # Scatter the compact (C, H*W) input into the canvas valid region.
        for i in range(H):
            off = M + (PAD + i) * Wp + PAD
            buf_a[:, off:off + W] = x_ref[0, :, i * W:(i + 1) * W]

        def shifted(ref, d):                         # (C, L) canvas view at +d
            return ref[:, M + d:M + d + L]

        # ---- cv1: 3x3 conv (+folded BN) + SiLU -> im2col + one MXU matmul ----
        for kh in range(3):
            for kw in range(3):
                k = kh * 3 + kw
                d = (kh - 1) * Wp + (kw - 1)
                col_ref[k * C:(k + 1) * C, :] = shifted(buf_a, d)
        y1 = jnp.dot(wcv1_ref[...], col_ref[...].astype(jnp.bfloat16),
                     preferred_element_type=jnp.float32)
        buf_b[:, M:M + L] = silu(y1 + bcv1_ref[...]) * mask     # zero border

        # ---- AvgPool2d(7,1,3), count_include_pad: separable 7 + 7 adds ----
        acc = shifted(buf_b, -3)                     # row pass (along W)
        for dw in range(-2, 4):
            acc = acc + shifted(buf_b, dw)
        buf_a[:, M:M + L] = acc                      # per-row 7-tap sums
        acc = shifted(buf_a, -3 * Wp)                # column pass (along H)
        for dh in range(-2, 4):
            acc = acc + shifted(buf_a, dh * Wp)
        pooled = acc * (1.0 / 49.0)

        # ---- conv1: 1x1 (+folded BN) + SiLU -> MXU matmul ----
        t1 = jnp.dot(w1_ref[...], pooled.astype(jnp.bfloat16),
                     preferred_element_type=jnp.float32)
        buf_b[:, M:M + L] = silu(t1 + b1_ref[...]) * mask

        # ---- h_conv: depthwise (1, 11) + bias ----
        wh = wh_ref[...]                             # (C, 11)
        acc = wh[:, 0:1] * shifted(buf_b, -(DWK // 2))
        for k in range(1, DWK):
            acc = acc + wh[:, k:k + 1] * shifted(buf_b, k - DWK // 2)
        buf_a[:, M:M + L] = (acc + bh_ref[...]) * mask

        # ---- v_conv: depthwise (11, 1) + bias ----
        wv = wv_ref[...]                             # (C, 11)
        acc = wv[:, 0:1] * shifted(buf_a, -(DWK // 2) * Wp)
        for k in range(1, DWK):
            acc = acc + wv[:, k:k + 1] * shifted(buf_a, (k - DWK // 2) * Wp)
        tv = acc + bv_ref[...]

        # ---- conv2: 1x1 (+folded BN) + SiLU, Sigmoid ----
        t2 = jnp.dot(w2_ref[...], tv.astype(jnp.bfloat16),
                     preferred_element_type=jnp.float32)
        buf_b[:, M:M + L] = sigmoid(silu(t2 + b2_ref[...]))

        # ---- compact output gather (+ fused residual) ----
        for i in range(H):
            off = M + (PAD + i) * Wp + PAD
            row = buf_b[:, off:off + W]
            if shortcut:                             # trace-time branch
                row = row + x_ref[0, :, i * W:(i + 1) * W]
            out_ref[0, :, i * W:(i + 1) * W] = row

    return kernel


# ------------------------------- wrapper ----------------------------------

def caa_bottleneck_pallas(x, p, shortcut=True):
    N, C, H, W = x.shape
    Hp, Wp = H + 2 * PAD, W + 2 * PAD
    L = Hp * Wp
    HW = H * W

    # Lane-aligned margins; must stay >= largest flat shift (5*Wp + 5, v_conv).
    max_shift = PAD * Wp + PAD
    M = ((max_shift + 127) // 128) * 128
    LM = ((M + L + max_shift + 127) // 128) * 128

    x_flat = x.reshape(N, C, HW)                     # compact lane-dense input

    rows = jnp.arange(Hp)
    cols = jnp.arange(Wp)
    valid = (((rows >= PAD) & (rows < PAD + H))[:, None]
             & ((cols >= PAD) & (cols < PAD + W))[None, :])
    mask = valid.astype(jnp.float32).reshape(1, L)

    # im2col weight layout: [o, (kh*3+kw)*C + i] = w_cv1[o, i, kh, kw]
    wcv1 = jnp.transpose(p["w_cv1"], (0, 2, 3, 1)).reshape(C, 9 * C)
    wcv1 = wcv1.astype(jnp.bfloat16)
    w1 = p["w1"].reshape(C, C).astype(jnp.bfloat16)
    w2 = p["w2"].reshape(C, C).astype(jnp.bfloat16)
    wh = p["wh"].reshape(C, DWK)
    wv = p["wv"].reshape(C, DWK)
    bcv1, b1, bh, bv, b2 = [p[k].reshape(C, 1)
                            for k in ("b_cv1", "b1", "bh", "bv", "b2")]

    weights = (mask, wcv1, bcv1, w1, b1, wh, bh, wv, bv, w2, b2)

    def resident(a):
        nd = a.ndim
        return pl.BlockSpec(a.shape, lambda n, _nd=nd: (0,) * _nd)

    flops = N * C * L * (2 * 9 * C + 2 * C + 2 * C + 4 * DWK + 14 + 12)
    transcend = N * 8 * C * L                        # 4 sigmoids: exp + rcp over L lanes
    bytes_acc = (2 * N * C * HW * 4
                 + sum(int(a.size) * a.dtype.itemsize for a in weights))

    kernel = _make_caa_kernel(C, H, W, Hp, Wp, M, LM, shortcut)

    out_flat = pl.pallas_call(
        kernel,
        out_shape=jax.ShapeDtypeStruct((N, C, HW), jnp.float32),
        grid=(N,),
        in_specs=[pl.BlockSpec((1, C, HW), lambda n: (n, 0, 0))]
                 + [resident(a) for a in weights],
        out_specs=pl.BlockSpec((1, C, HW), lambda n: (n, 0, 0)),
        scratch_shapes=[pltpu.VMEM((C, LM), jnp.float32),        # buf_a
                        pltpu.VMEM((C, LM), jnp.float32),        # buf_b
                        pltpu.VMEM((9 * C, L), jnp.float32)],    # im2col staging
        compiler_params=pltpu.CompilerParams(
            dimension_semantics=("parallel",)),
        cost_estimate=pl.CostEstimate(flops=int(flops),
                                      transcendentals=int(transcend),
                                      bytes_accessed=int(bytes_acc)),
    )(x_flat, *weights)

    return out_flat.reshape(N, C, H, W)


# ------------------------ parameter construction ---------------------------

def init_params(C, key, eps=1e-3):
    ks = jax.random.split(key, 10)

    def nrm(k, shape, s=0.2):
        return s * jax.random.normal(k, shape, jnp.float32)

    def bn_params(k):
        k1, k2, k3, k4 = jax.random.split(k, 4)
        gamma = 1.0 + 0.1 * jax.random.normal(k1, (C,), jnp.float32)
        beta = 0.1 * jax.random.normal(k2, (C,), jnp.float32)
        mean = 0.1 * jax.random.normal(k3, (C,), jnp.float32)
        var = 1.0 + 0.1 * jnp.abs(jax.random.normal(k4, (C,), jnp.float32))
        return gamma, beta, mean, var

    def fold(w, bnp):
        gamma, beta, mean, var = bnp
        scale = gamma / jnp.sqrt(var + eps)
        return w * scale[:, None, None, None], beta - mean * scale

    w_cv1, b_cv1 = fold(nrm(ks[0], (C, C, 3, 3)), bn_params(ks[1]))
    w1, b1 = fold(nrm(ks[2], (C, C, 1, 1)), bn_params(ks[3]))
    wh, bh = nrm(ks[4], (C, 1, 1, 11)), nrm(ks[5], (C,))
    wv, bv = nrm(ks[6], (C, 1, 11, 1)), nrm(ks[7], (C,))
    w2, b2 = fold(nrm(ks[8], (C, C, 1, 1)), bn_params(ks[9]))

    return dict(w_cv1=w_cv1, b_cv1=b_cv1, w1=w1, b1=b1,
                wh=wh, bh=bh, wv=wv, bv=bv, w2=w2, b2=b2)


# ------------------------- pure-JAX reference ------------------------------

def caa_bottleneck_ref(x, p, shortcut=True):
    C = x.shape[1]

    def conv(v, w, b, pad, groups=1):
        out = jax.lax.conv_general_dilated(
            v, w, (1, 1), ((pad[0], pad[0]), (pad[1], pad[1])),
            dimension_numbers=("NCHW", "OIHW", "NCHW"),
            feature_group_count=groups)
        return out + b[None, :, None, None]

    def silu(v):
        return v * jax.nn.sigmoid(v)

    y = silu(conv(x, p["w_cv1"], p["b_cv1"], (1, 1)))
    yp = jnp.pad(y, ((0, 0), (0, 0), (3, 3), (3, 3)))
    pooled = jax.lax.reduce_window(
        yp, 0.0, jax.lax.add, (1, 1, 7, 7), (1, 1, 1, 1), "VALID") / 49.0
    t = silu(conv(pooled, p["w1"], p["b1"], (0, 0)))
    t = conv(t, p["wh"], p["bh"], (0, 5), groups=C)
    t = conv(t, p["wv"], p["bv"], (5, 0), groups=C)
    t = silu(conv(t, p["w2"], p["b2"], (0, 0)))
    attn = jax.nn.sigmoid(t)
    return x + attn if shortcut else attn


# -------------------------------- main --------------------------------------

if __name__ == "__main__":
    key = jax.random.PRNGKey(0)
    kx, kp = jax.random.split(key)

    N, C, H, W = 2, 4, 16, 16          # c1 == c2 (shortcut add requires it)
    x = jax.random.normal(kx, (N, C, H, W), jnp.float32)
    params = init_params(C, kp)

    # Tolerance relaxed vs the f32 reference: bf16 single-pass MXU matmuls and
    # the EUP approximate-reciprocal sigmoid are intentional (perf review).
    TOL = 3e-2

    # shortcut=True (residual add fused in-kernel)
    out = jax.block_until_ready(caa_bottleneck_pallas(x, params, shortcut=True))
    ref = caa_bottleneck_ref(x, params, shortcut=True)
    assert out.shape == x.shape
    err = float(jnp.max(jnp.abs(out - ref)))
    assert err < TOL, f"mismatch vs reference (shortcut=True): max abs err = {err}"

    # shortcut=False compiles a kernel variant without the residual read/add
    out_ns = jax.block_until_ready(
        caa_bottleneck_pallas(x, params, shortcut=False))
    ref_ns = caa_bottleneck_ref(x, params, shortcut=False)
    err_ns = float(jnp.max(jnp.abs(out_ns - ref_ns)))
    assert err_ns < TOL, f"mismatch vs reference (shortcut=False): max abs err = {err_ns}"

    print("KERNEL_OK")
</pallas_src>

<mosaic_0001>
module attributes {stable_mosaic.version = 11 : i64} {
  func.func @kernel(%arg0: i32, %arg1: memref<1x4x256xf32, #tpu.memory_space<vmem>>, %arg2: memref<1x676xf32, #tpu.memory_space<vmem>>, %arg3: memref<4x36xbf16, #tpu.memory_space<vmem>>, %arg4: memref<4x1xf32, #tpu.memory_space<vmem>>, %arg5: memref<4x4xbf16, #tpu.memory_space<vmem>>, %arg6: memref<4x1xf32, #tpu.memory_space<vmem>>, %arg7: memref<4x11xf32, #tpu.memory_space<vmem>>, %arg8: memref<4x1xf32, #tpu.memory_space<vmem>>, %arg9: memref<4x11xf32, #tpu.memory_space<vmem>>, %arg10: memref<4x1xf32, #tpu.memory_space<vmem>>, %arg11: memref<4x4xbf16, #tpu.memory_space<vmem>>, %arg12: memref<4x1xf32, #tpu.memory_space<vmem>>, %arg13: memref<1x4x256xf32, #tpu.memory_space<vmem>>, %arg14: memref<4x1152xf32, #tpu.memory_space<vmem>>, %arg15: memref<4x1152xf32, #tpu.memory_space<vmem>>, %arg16: memref<36x676xf32, #tpu.memory_space<vmem>>) attributes {dimension_semantics = [#tpu.dimension_semantics<parallel>], iteration_bounds = array<i64: 2>, scalar_prefetch = 0 : i64, scratch_operands = 3 : i64, tpu.core_type = #tpu.core_type<tc>, window_params = [{transform_indices = @transform_0, window_bounds = array<i64: 1, 4, 256>}, {pipeline_mode = #tpu.pipeline_mode<synchronous>, transform_indices = @transform_1, window_bounds = array<i64: 1, 676>}, {pipeline_mode = #tpu.pipeline_mode<synchronous>, transform_indices = @transform_2, window_bounds = array<i64: 4, 36>}, {pipeline_mode = #tpu.pipeline_mode<synchronous>, transform_indices = @transform_3, window_bounds = array<i64: 4, 1>}, {pipeline_mode = #tpu.pipeline_mode<synchronous>, transform_indices = @transform_4, window_bounds = array<i64: 4, 4>}, {pipeline_mode = #tpu.pipeline_mode<synchronous>, transform_indices = @transform_5, window_bounds = array<i64: 4, 1>}, {pipeline_mode = #tpu.pipeline_mode<synchronous>, transform_indices = @transform_6, window_bounds = array<i64: 4, 11>}, {pipeline_mode = #tpu.pipeline_mode<synchronous>, transform_indices = @transform_7, window_bounds = array<i64: 4, 1>}, {pipeline_mode = #tpu.pipeline_mode<synchronous>, transform_indices = @transform_8, window_bounds = array<i64: 4, 11>}, {pipeline_mode = #tpu.pipeline_mode<synchronous>, transform_indices = @transform_9, window_bounds = array<i64: 4, 1>}, {pipeline_mode = #tpu.pipeline_mode<synchronous>, transform_indices = @transform_10, window_bounds = array<i64: 4, 4>}, {pipeline_mode = #tpu.pipeline_mode<synchronous>, transform_indices = @transform_11, window_bounds = array<i64: 4, 1>}, {transform_indices = @transform_12, window_bounds = array<i64: 1, 4, 256>}]} {
    %c0 = arith.constant 0 : index
    %c0_0 = arith.constant 0 : index
    %0 = vector.load %arg2[%c0, %c0_0] : memref<1x676xf32, #tpu.memory_space<vmem>>, vector<1x676xf32>
    %cst = arith.constant 0.000000e+00 : f32
    %1 = vector.broadcast %cst : f32 to vector<4x1152xf32>
    %c0_1 = arith.constant 0 : index
    %c0_2 = arith.constant 0 : index
    %2 = vector.load %arg14[%c0_1, %c0_2] : memref<4x1152xf32, #tpu.memory_space<vmem>>, vector<4x1152xf32>
    tpu.vector_store %arg14[%c0_1, %c0_2], %1 {strides = array<i32>} : memref<4x1152xf32, #tpu.memory_space<vmem>>, vector<4x1152xf32>,
    %cst_3 = arith.constant 0.000000e+00 : f32
    %3 = vector.broadcast %cst_3 : f32 to vector<4x256xf32>
    %c0_4 = arith.constant 0 : index
    %c0_5 = arith.constant 0 : index
    %4 = vector.load %arg15[%c0_4, %c0_5] : memref<4x1152xf32, #tpu.memory_space<vmem>>, vector<4x256xf32>
    tpu.vector_store %arg15[%c0_4, %c0_5], %3 {strides = array<i32>} : memref<4x1152xf32, #tpu.memory_space<vmem>>, vector<4x256xf32>,
    %cst_6 = arith.constant 0.000000e+00 : f32
    %5 = vector.broadcast %cst_6 : f32 to vector<4x220xf32>
    %c0_7 = arith.constant 0 : index
    %c932 = arith.constant 932 : index
    %6 = vector.load %arg15[%c0_7, %c932] : memref<4x1152xf32, #tpu.memory_space<vmem>>, vector<4x220xf32>
    tpu.vector_store %arg15[%c0_7, %c932], %5 {strides = array<i32>} : memref<4x1152xf32, #tpu.memory_space<vmem>>, vector<4x220xf32>,
    %c0_8 = arith.constant 0 : index
    %c0_9 = arith.constant 0 : index
    %c0_10 = arith.constant 0 : index
    %7 = vector.load %arg1[%c0_8, %c0_9, %c0_10] : memref<1x4x256xf32, #tpu.memory_space<vmem>>, vector<1x4x16xf32>
    %8 = vector.shape_cast %7 : vector<1x4x16xf32> to vector<4x16xf32>
    %c0_11 = arith.constant 0 : index
    %c391 = arith.constant 391 : index
    %9 = vector.load %arg14[%c0_11, %c391] : memref<4x1152xf32, #tpu.memory_space<vmem>>, vector<4x16xf32>
    tpu.vector_store %arg14[%c0_11, %c391], %8 {strides = array<i32>} : memref<4x1152xf32, #tpu.memory_space<vmem>>, vector<4x16xf32>,
    %c0_12 = arith.constant 0 : index
    %c0_13 = arith.constant 0 : index
    %c16 = arith.constant 16 : index
    %10 = vector.load %arg1[%c0_12, %c0_13, %c16] : memref<1x4x256xf32, #tpu.memory_space<vmem>>, vector<1x4x16xf32>
    %11 = vector.shape_cast %10 : vector<1x4x16xf32> to vector<4x16xf32>
    %c0_14 = arith.constant 0 : index
    %c417 = arith.constant 417 : index
    %12 = vector.load %arg14[%c0_14, %c417] : memref<4x1152xf32, #tpu.memory_space<vmem>>, vector<4x16xf32>
    tpu.vector_store %arg14[%c0_14, %c417], %11 {strides = array<i32>} : memref<4x1152xf32, #tpu.memory_space<vmem>>, vector<4x16xf32>,
    %c0_15 = arith.constant 0 : index
    %c0_16 = arith.constant 0 : index
    %c32 = arith.constant 32 : index
    %13 = vector.load %arg1[%c0_15, %c0_16, %c32] : memref<1x4x256xf32, #tpu.memory_space<vmem>>, vector<1x4x16xf32>
    %14 = vector.shape_cast %13 : vector<1x4x16xf32> to vector<4x16xf32>
    %c0_17 = arith.constant 0 : index
    %c443 = arith.constant 443 : index
    %15 = vector.load %arg14[%c0_17, %c443] : memref<4x1152xf32, #tpu.memory_space<vmem>>, vector<4x16xf32>
    tpu.vector_store %arg14[%c0_17, %c443], %14 {strides = array<i32>} : memref<4x1152xf32, #tpu.memory_space<vmem>>, vector<4x16xf32>,
    %c0_18 = arith.constant 0 : index
    %c0_19 = arith.constant 0 : index
    %c48 = arith.constant 48 : index
    %16 = vector.load %arg1[%c0_18, %c0_19, %c48] : memref<1x4x256xf32, #tpu.memory_space<vmem>>, vector<1x4x16xf32>
    %17 = vector.shape_cast %16 : vector<1x4x16xf32> to vector<4x16xf32>
    %c0_20 = arith.constant 0 : index
    %c469 = arith.constant 469 : index
    %18 = vector.load %arg14[%c0_20, %c469] : memref<4x1152xf32, #tpu.memory_space<vmem>>, vector<4x16xf32>
    tpu.vector_store %arg14[%c0_20, %c469], %17 {strides = array<i32>} : memref<4x1152xf32, #tpu.memory_space<vmem>>, vector<4x16xf32>,
    %c0_21 = arith.constant 0 : index
    %c0_22 = arith.constant 0 : index
    %c64 = arith.constant 64 : index
    %19 = vector.load %arg1[%c0_21, %c0_22, %c64] : memref<1x4x256xf32, #tpu.memory_space<vmem>>, vector<1x4x16xf32>
    %20 = vector.shape_cast %19 : vector<1x4x16xf32> to vector<4x16xf32>
    %c0_23 = arith.constant 0 : index
    %c495 = arith.constant 495 : index
    %21 = vector.load %arg14[%c0_23, %c495] : memref<4x1152xf32, #tpu.memory_space<vmem>>, vector<4x16xf32>
    tpu.vector_store %arg14[%c0_23, %c495], %20 {strides = array<i32>} : memref<4x1152xf32, #tpu.memory_space<vmem>>, vector<4x16xf32>,
    %c0_24 = arith.constant 0 : index
    %c0_25 = arith.constant 0 : index
    %c80 = arith.constant 80 : index
    %22 = vector.load %arg1[%c0_24, %c0_25, %c80] : memref<1x4x256xf32, #tpu.memory_space<vmem>>, vector<1x4x16xf32>
    %23 = vector.shape_cast %22 : vector<1x4x16xf32> to vector<4x16xf32>
    %c0_26 = arith.constant 0 : index
    %c521 = arith.constant 521 : index
    %24 = vector.load %arg14[%c0_26, %c521] : memref<4x1152xf32, #tpu.memory_space<vmem>>, vector<4x16xf32>
    tpu.vector_store %arg14[%c0_26, %c521], %23 {strides = array<i32>} : memref<4x1152xf32, #tpu.memory_space<vmem>>, vector<4x16xf32>,
    %c0_27 = arith.constant 0 : index
    %c0_28 = arith.constant 0 : index
    %c96 = arith.constant 96 : index
    %25 = vector.load %arg1[%c0_27, %c0_28, %c96] : memref<1x4x256xf32, #tpu.memory_space<vmem>>, vector<1x4x16xf32>
    %26 = vector.shape_cast %25 : vector<1x4x16xf32> to vector<4x16xf32>
    %c0_29 = arith.constant 0 : index
    %c547 = arith.constant 547 : index
    %27 = vector.load %arg14[%c0_29, %c547] : memref<4x1152xf32, #tpu.memory_space<vmem>>, vector<4x16xf32>
    tpu.vector_store %arg14[%c0_29, %c547], %26 {strides = array<i32>} : memref<4x1152xf32, #tpu.memory_space<vmem>>, vector<4x16xf32>,
    %c0_30 = arith.constant 0 : index
    %c0_31 = arith.constant 0 : index
    %c112 = arith.constant 112 : index
    %28 = vector.load %arg1[%c0_30, %c0_31, %c112] : memref<1x4x256xf32, #tpu.memory_space<vmem>>, vector<1x4x16xf32>
    %29 = vector.shape_cast %28 : vector<1x4x16xf32> to vector<4x16xf32>
    %c0_32 = arith.constant 0 : index
    %c573 = arith.constant 573 : index
    %30 = vector.load %arg14[%c0_32, %c573] : memref<4x1152xf32, #tpu.memory_space<vmem>>, vector<4x16xf32>
    tpu.vector_store %arg14[%c0_32, %c573], %29 {strides = array<i32>} : memref<4x1152xf32, #tpu.memory_space<vmem>>, vector<4x16xf32>,
    %c0_33 = arith.constant 0 : index
    %c0_34 = arith.constant 0 : index
    %c128 = arith.constant 128 : index
    %31 = vector.load %arg1[%c0_33, %c0_34, %c128] : memref<1x4x256xf32, #tpu.memory_space<vmem>>, vector<1x4x16xf32>
    %32 = vector.shape_cast %31 : vector<1x4x16xf32> to vector<4x16xf32>
    %c0_35 = arith.constant 0 : index
    %c599 = arith.constant 599 : index
    %33 = vector.load %arg14[%c0_35, %c599] : memref<4x1152xf32, #tpu.memory_space<vmem>>, vector<4x16xf32>
    tpu.vector_store %arg14[%c0_35, %c599], %32 {strides = array<i32>} : memref<4x1152xf32, #tpu.memory_space<vmem>>, vector<4x16xf32>,
    %c0_36 = arith.constant 0 : index
    %c0_37 = arith.constant 0 : index
    %c144 = arith.constant 144 : index
    %34 = vector.load %arg1[%c0_36, %c0_37, %c144] : memref<1x4x256xf32, #tpu.memory_space<vmem>>, vector<1x4x16xf32>
    %35 = vector.shape_cast %34 : vector<1x4x16xf32> to vector<4x16xf32>
    %c0_38 = arith.constant 0 : index
    %c625 = arith.constant 625 : index
    %36 = vector.load %arg14[%c0_38, %c625] : memref<4x1152xf32, #tpu.memory_space<vmem>>, vector<4x16xf32>
    tpu.vector_store %arg14[%c0_38, %c625], %35 {strides = array<i32>} : memref<4x1152xf32, #tpu.memory_space<vmem>>, vector<4x16xf32>,
    %c0_39 = arith.constant 0 : index
    %c0_40 = arith.constant 0 : index
    %c160 = arith.constant 160 : index
    %37 = vector.load %arg1[%c0_39, %c0_40, %c160] : memref<1x4x256xf32, #tpu.memory_space<vmem>>, vector<1x4x16xf32>
    %38 = vector.shape_cast %37 : vector<1x4x16xf32> to vector<4x16xf32>
    %c0_41 = arith.constant 0 : index
    %c651 = arith.constant 651 : index
    %39 = vector.load %arg14[%c0_41, %c651] : memref<4x1152xf32, #tpu.memory_space<vmem>>, vector<4x16xf32>
    tpu.vector_store %arg14[%c0_41, %c651], %38 {strides = array<i32>} : memref<4x1152xf32, #tpu.memory_space<vmem>>, vector<4x16xf32>,
    %c0_42 = arith.constant 0 : index
    %c0_43 = arith.constant 0 : index
    %c176 = arith.constant 176 : index
    %40 = vector.load %arg1[%c0_42, %c0_43, %c176] : memref<1x4x256xf32, #tpu.memory_space<vmem>>, vector<1x4x16xf32>
    %41 = vector.shape_cast %40 : vector<1x4x16xf32> to vector<4x16xf32>
    %c0_44 = arith.constant 0 : index
    %c677 = arith.constant 677 : index
    %42 = vector.load %arg14[%c0_44, %c677] : memref<4x1152xf32, #tpu.memory_space<vmem>>, vector<4x16xf32>
    tpu.vector_store %arg14[%c0_44, %c677], %41 {strides = array<i32>} : memref<4x1152xf32, #tpu.memory_space<vmem>>, vector<4x16xf32>,
    %c0_45 = arith.constant 0 : index
    %c0_46 = arith.constant 0 : index
    %c192 = arith.constant 192 : index
    %43 = vector.load %arg1[%c0_45, %c0_46, %c192] : memref<1x4x256xf32, #tpu.memory_space<vmem>>, vector<1x4x16xf32>
    %44 = vector.shape_cast %43 : vector<1x4x16xf32> to vector<4x16xf32>
    %c0_47 = arith.constant 0 : index
    %c703 = arith.constant 703 : index
    %45 = vector.load %arg14[%c0_47, %c703] : memref<4x1152xf32, #tpu.memory_space<vmem>>, vector<4x16xf32>
    tpu.vector_store %arg14[%c0_47, %c703], %44 {strides = array<i32>} : memref<4x1152xf32, #tpu.memory_space<vmem>>, vector<4x16xf32>,
    %c0_48 = arith.constant 0 : index
    %c0_49 = arith.constant 0 : index
    %c208 = arith.constant 208 : index
    %46 = vector.load %arg1[%c0_48, %c0_49, %c208] : memref<1x4x256xf32, #tpu.memory_space<vmem>>, vector<1x4x16xf32>
    %47 = vector.shape_cast %46 : vector<1x4x16xf32> to vector<4x16xf32>
    %c0_50 = arith.constant 0 : index
    %c729 = arith.constant 729 : index
    %48 = vector.load %arg14[%c0_50, %c729] : memref<4x1152xf32, #tpu.memory_space<vmem>>, vector<4x16xf32>
    tpu.vector_store %arg14[%c0_50, %c729], %47 {strides = array<i32>} : memref<4x1152xf32, #tpu.memory_space<vmem>>, vector<4x16xf32>,
    %c0_51 = arith.constant 0 : index
    %c0_52 = arith.constant 0 : index
    %c224 = arith.constant 224 : index
    %49 = vector.load %arg1[%c0_51, %c0_52, %c224] : memref<1x4x256xf32, #tpu.memory_space<vmem>>, vector<1x4x16xf32>
    %50 = vector.shape_cast %49 : vector<1x4x16xf32> to vector<4x16xf32>
    %c0_53 = arith.constant 0 : index
    %c755 = arith.constant 755 : index
    %51 = vector.load %arg14[%c0_53, %c755] : memref<4x1152xf32, #tpu.memory_space<vmem>>, vector<4x16xf32>
    tpu.vector_store %arg14[%c0_53, %c755], %50 {strides = array<i32>} : memref<4x1152xf32, #tpu.memory_space<vmem>>, vector<4x16xf32>,
    %c0_54 = arith.constant 0 : index
    %c0_55 = arith.constant 0 : index
    %c240 = arith.constant 240 : index
    %52 = vector.load %arg1[%c0_54, %c0_55, %c240] : memref<1x4x256xf32, #tpu.memory_space<vmem>>, vector<1x4x16xf32>
    %53 = vector.shape_cast %52 : vector<1x4x16xf32> to vector<4x16xf32>
    %c0_56 = arith.constant 0 : index
    %c781 = arith.constant 781 : index
    %54 = vector.load %arg14[%c0_56, %c781] : memref<4x1152xf32, #tpu.memory_space<vmem>>, vector<4x16xf32>
    tpu.vector_store %arg14[%c0_56, %c781], %53 {strides = array<i32>} : memref<4x1152xf32, #tpu.memory_space<vmem>>, vector<4x16xf32>,
    %c0_57 = arith.constant 0 : index
    %c229 = arith.constant 229 : index
    %55 = vector.load %arg14[%c0_57, %c229] : memref<4x1152xf32, #tpu.memory_space<vmem>>, vector<4x676xf32>
    %c0_58 = arith.constant 0 : index
    %c0_59 = arith.constant 0 : index
    %56 = vector.load %arg16[%c0_58, %c0_59] : memref<36x676xf32, #tpu.memory_space<vmem>>, vector<4x676xf32>
    tpu.vector_store %arg16[%c0_58, %c0_59], %55 {strides = array<i32>} : memref<36x676xf32, #tpu.memory_space<vmem>>, vector<4x676xf32>,
    %c0_60 = arith.constant 0 : index
    %c230 = arith.constant 230 : index
    %57 = vector.load %arg14[%c0_60, %c230] : memref<4x1152xf32, #tpu.memory_space<vmem>>, vector<4x676xf32>
    %c4 = arith.constant 4 : index
    %c0_61 = arith.constant 0 : index
    %58 = vector.load %arg16[%c4, %c0_61] : memref<36x676xf32, #tpu.memory_space<vmem>>, vector<4x676xf32>
    tpu.vector_store %arg16[%c4, %c0_61], %57 {strides = array<i32>} : memref<36x676xf32, #tpu.memory_space<vmem>>, vector<4x676xf32>,
    %c0_62 = arith.constant 0 : index
    %c231 = arith.constant 231 : index
    %59 = vector.load %arg14[%c0_62, %c231] : memref<4x1152xf32, #tpu.memory_space<vmem>>, vector<4x676xf32>
    %c8 = arith.constant 8 : index
    %c0_63 = arith.constant 0 : index
    %60 = vector.load %arg16[%c8, %c0_63] : memref<36x676xf32, #tpu.memory_space<vmem>>, vector<4x676xf32>
    tpu.vector_store %arg16[%c8, %c0_63], %59 {strides = array<i32>} : memref<36x676xf32, #tpu.memory_space<vmem>>, vector<4x676xf32>,
    %c0_64 = arith.constant 0 : index
    %c255 = arith.constant 255 : index
    %61 = vector.load %arg14[%c0_64, %c255] : memref<4x1152xf32, #tpu.memory_space<vmem>>, vector<4x676xf32>
    %c12 = arith.constant 12 : index
    %c0_65 = arith.constant 0 : index
    %62 = vector.load %arg16[%c12, %c0_65] : memref<36x676xf32, #tpu.memory_space<vmem>>, vector<4x676xf32>
    tpu.vector_store %arg16[%c12, %c0_65], %61 {strides = array<i32>} : memref<36x676xf32, #tpu.memory_space<vmem>>, vector<4x676xf32>,
    %c0_66 = arith.constant 0 : index
    %c256 = arith.constant 256 : index
    %63 = vector.load %arg14[%c0_66, %c256] : memref<4x1152xf32, #tpu.memory_space<vmem>>, vector<4x676xf32>
    %c16_67 = arith.constant 16 : index
    %c0_68 = arith.constant 0 : index
    %64 = vector.load %arg16[%c16_67, %c0_68] : memref<36x676xf32, #tpu.memory_space<vmem>>, vector<4x676xf32>
    tpu.vector_store %arg16[%c16_67, %c0_68], %63 {strides = array<i32>} : memref<36x676xf32, #tpu.memory_space<vmem>>, vector<4x676xf32>,
    %c0_69 = arith.constant 0 : index
    %c257 = arith.constant 257 : index
    %65 = vector.load %arg14[%c0_69, %c257] : memref<4x1152xf32, #tpu.memory_space<vmem>>, vector<4x676xf32>
    %c20 = arith.constant 20 : index
    %c0_70 = arith.constant 0 : index
    %66 = vector.load %arg16[%c20, %c0_70] : memref<36x676xf32, #tpu.memory_space<vmem>>, vector<4x676xf32>
    tpu.vector_store %arg16[%c20, %c0_70], %65 {strides = array<i32>} : memref<36x676xf32, #tpu.memory_space<vmem>>, vector<4x676xf32>,
    %c0_71 = arith.constant 0 : index
    %c281 = arith.constant 281 : index
    %67 = vector.load %arg14[%c0_71, %c281] : memref<4x1152xf32, #tpu.memory_space<vmem>>, vector<4x676xf32>
    %c24 = arith.constant 24 : index
    %c0_72 = arith.constant 0 : index
    %68 = vector.load %arg16[%c24, %c0_72] : memref<36x676xf32, #tpu.memory_space<vmem>>, vector<4x676xf32>
    tpu.vector_store %arg16[%c24, %c0_72], %67 {strides = array<i32>} : memref<36x676xf32, #tpu.memory_space<vmem>>, vector<4x676xf32>,
    %c0_73 = arith.constant 0 : index
    %c282 = arith.constant 282 : index
    %69 = vector.load %arg14[%c0_73, %c282] : memref<4x1152xf32, #tpu.memory_space<vmem>>, vector<4x676xf32>
    %c28 = arith.constant 28 : index
    %c0_74 = arith.constant 0 : index
    %70 = vector.load %arg16[%c28, %c0_74] : memref<36x676xf32, #tpu.memory_space<vmem>>, vector<4x676xf32>
    tpu.vector_store %arg16[%c28, %c0_74], %69 {strides = array<i32>} : memref<36x676xf32, #tpu.memory_space<vmem>>, vector<4x676xf32>,
    %c0_75 = arith.constant 0 : index
    %c283 = arith.constant 283 : index
    %71 = vector.load %arg14[%c0_75, %c283] : memref<4x1152xf32, #tpu.memory_space<vmem>>, vector<4x676xf32>
    %c32_76 = arith.constant 32 : index
    %c0_77 = arith.constant 0 : index
    %72 = vector.load %arg16[%c32_76, %c0_77] : memref<36x676xf32, #tpu.memory_space<vmem>>, vector<4x676xf32>
    tpu.vector_store %arg16[%c32_76, %c0_77], %71 {strides = array<i32>} : memref<36x676xf32, #tpu.memory_space<vmem>>, vector<4x676xf32>,
    %c0_78 = arith.constant 0 : index
    %c0_79 = arith.constant 0 : index
    %73 = vector.load %arg3[%c0_78, %c0_79] : memref<4x36xbf16, #tpu.memory_space<vmem>>, vector<4x36xbf16>
    %c0_80 = arith.constant 0 : index
    %c0_81 = arith.constant 0 : index
    %74 = vector.load %arg16[%c0_80, %c0_81] : memref<36x676xf32, #tpu.memory_space<vmem>>, vector<36x676xf32>
    %75 = arith.truncf %74 : vector<36x676xf32> to vector<36x676xbf16>
    %cst_82 = arith.constant dense<0.000000e+00> : vector<4x676xf32>
    %76 = tpu.matmul %73, %75, %cst_82 {dimension_numbers = #tpu.dot_dimension_numbers<[1], [0], [0], [1], [0, 0, 1, 1], [], []>} : vector<4x36xbf16>, vector<36x676xbf16>, vector<4x676xf32> -> vector<4x676xf32>
    %c0_83 = arith.constant 0 : index
    %c0_84 = arith.constant 0 : index
    %77 = vector.load %arg4[%c0_83, %c0_84] : memref<4x1xf32, #tpu.memory_space<vmem>>, vector<4x1xf32>
    %78 = vector.broadcast %77 : vector<4x1xf32> to vector<4x676xf32>
    %79 = arith.addf %76, %78 : vector<4x676xf32>
    %cst_85 = arith.constant 0.000000e+00 : f32
    %80 = vector.broadcast %cst_85 : f32 to vector<4x676xf32>
    %81 = arith.subf %80, %79 : vector<4x676xf32>
    %82 = math.exp %81 : vector<4x676xf32>
    %cst_86 = arith.constant 1.000000e+00 : f32
    %83 = vector.broadcast %cst_86 : f32 to vector<4x676xf32>
    %84 = arith.addf %83, %82 : vector<4x676xf32>
    %85 = tpu.reciprocal %84 {approx = true} : vector<4x676xf32> -> vector<4x676xf32>
    %86 = arith.mulf %79, %85 : vector<4x676xf32>
    %87 = vector.broadcast %0 : vector<1x676xf32> to vector<4x676xf32>
    %88 = arith.mulf %86, %87 : vector<4x676xf32>
    %c0_87 = arith.constant 0 : index
    %c256_88 = arith.constant 256 : index
    %89 = vector.load %arg15[%c0_87, %c256_88] : memref<4x1152xf32, #tpu.memory_space<vmem>>, vector<4x676xf32>
    tpu.vector_store %arg15[%c0_87, %c256_88], %88 {strides = array<i32>} : memref<4x1152xf32, #tpu.memory_space<vmem>>, vector<4x676xf32>,
    %c0_89 = arith.constant 0 : index
    %c253 = arith.constant 253 : index
    %90 = vector.load %arg15[%c0_89, %c253] : memref<4x1152xf32, #tpu.memory_space<vmem>>, vector<4x676xf32>
    %c0_90 = arith.constant 0 : index
    %c254 = arith.constant 254 : index
    %91 = vector.load %arg15[%c0_90, %c254] : memref<4x1152xf32, #tpu.memory_space<vmem>>, vector<4x676xf32>
    %92 = arith.addf %90, %91 : vector<4x676xf32>
    %c0_91 = arith.constant 0 : index
    %c255_92 = arith.constant 255 : index
    %93 = vector.load %arg15[%c0_91, %c255_92] : memref<4x1152xf32, #tpu.memory_space<vmem>>, vector<4x676xf32>
    %94 = arith.addf %92, %93 : vector<4x676xf32>
    %c0_93 = arith.constant 0 : index
    %c256_94 = arith.constant 256 : index
    %95 = vector.load %arg15[%c0_93, %c256_94] : memref<4x1152xf32, #tpu.memory_space<vmem>>, vector<4x676xf32>
    %96 = arith.addf %94, %95 : vector<4x676xf32>
    %c0_95 = arith.constant 0 : index
    %c257_96 = arith.constant 257 : index
    %97 = vector.load %arg15[%c0_95, %c257_96] : memref<4x1152xf32, #tpu.memory_space<vmem>>, vector<4x676xf32>
    %98 = arith.addf %96, %97 : vector<4x676xf32>
    %c0_97 = arith.constant 0 : index
    %c258 = arith.constant 258 : index
    %99 = vector.load %arg15[%c0_97, %c258] : memref<4x1152xf32, #tpu.memory_space<vmem>>, vector<4x676xf32>
    %100 = arith.addf %98, %99 : vector<4x676xf32>
    %c0_98 = arith.constant 0 : index
    %c259 = arith.constant 259 : index
    %101 = vector.load %arg15[%c0_98, %c259] : memref<4x1152xf32, #tpu.memory_space<vmem>>, vector<4x676xf32>
    %102 = arith.addf %100, %101 : vector<4x676xf32>
    %c0_99 = arith.constant 0 : index
    %c256_100 = arith.constant 256 : index
    %103 = vector.load %arg14[%c0_99, %c256_100] : memref<4x1152xf32, #tpu.memory_space<vmem>>, vector<4x676xf32>
    tpu.vector_store %arg14[%c0_99, %c256_100], %102 {strides = array<i32>} : memref<4x1152xf32, #tpu.memory_space<vmem>>, vector<4x676xf32>,
    %c0_101 = arith.constant 0 : index
    %c178 = arith.constant 178 : index
    %104 = vector.load %arg14[%c0_101, %c178] : memref<4x1152xf32, #tpu.memory_space<vmem>>, vector<4x676xf32>
    %c0_102 = arith.constant 0 : index
    %c204 = arith.constant 204 : index
    %105 = vector.load %arg14[%c0_102, %c204] : memref<4x1152xf32, #tpu.memory_space<vmem>>, vector<4x676xf32>
    %106 = arith.addf %104, %105 : vector<4x676xf32>
    %c0_103 = arith.constant 0 : index
    %c230_104 = arith.constant 230 : index
    %107 = vector.load %arg14[%c0_103, %c230_104] : memref<4x1152xf32, #tpu.memory_space<vmem>>, vector<4x676xf32>
    %108 = arith.addf %106, %107 : vector<4x676xf32>
    %c0_105 = arith.constant 0 : index
    %c256_106 = arith.constant 256 : index
    %109 = vector.load %arg14[%c0_105, %c256_106] : memref<4x1152xf32, #tpu.memory_space<vmem>>, vector<4x676xf32>
    %110 = arith.addf %108, %109 : vector<4x676xf32>
    %c0_107 = arith.constant 0 : index
    %c282_108 = arith.constant 282 : index
    %111 = vector.load %arg14[%c0_107, %c282_108] : memref<4x1152xf32, #tpu.memory_space<vmem>>, vector<4x676xf32>
    %112 = arith.addf %110, %111 : vector<4x676xf32>
    %c0_109 = arith.constant 0 : index
    %c308 = arith.constant 308 : index
    %113 = vector.load %arg14[%c0_109, %c308] : memref<4x1152xf32, #tpu.memory_space<vmem>>, vector<4x676xf32>
    %114 = arith.addf %112, %113 : vector<4x676xf32>
    %c0_110 = arith.constant 0 : index
    %c334 = arith.constant 334 : index
    %115 = vector.load %arg14[%c0_110, %c334] : memref<4x1152xf32, #tpu.memory_space<vmem>>, vector<4x676xf32>
    %116 = arith.addf %114, %115 : vector<4x676xf32>
    %cst_111 = arith.constant 0.0204081628 : f32
    %117 = vector.broadcast %cst_111 : f32 to vector<4x676xf32>
    %118 = arith.mulf %116, %117 : vector<4x676xf32>
    %c0_112 = arith.constant 0 : index
    %c0_113 = arith.constant 0 : index
    %119 = vector.load %arg5[%c0_112, %c0_113] : memref<4x4xbf16, #tpu.memory_space<vmem>>, vector<4x4xbf16>
    %120 = arith.truncf %118 : vector<4x676xf32> to vector<4x676xbf16>
    %cst_114 = arith.constant dense<0.000000e+00> : vector<4x676xf32>
    %121 = tpu.matmul %119, %120, %cst_114 {dimension_numbers = #tpu.dot_dimension_numbers<[1], [0], [0], [1], [0, 0, 1, 1], [], []>} : vector<4x4xbf16>, vector<4x676xbf16>, vector<4x676xf32> -> vector<4x676xf32>
    %c0_115 = arith.constant 0 : index
    %c0_116 = arith.constant 0 : index
    %122 = vector.load %arg6[%c0_115, %c0_116] : memref<4x1xf32, #tpu.memory_space<vmem>>, vector<4x1xf32>
    %123 = vector.broadcast %122 : vector<4x1xf32> to vector<4x676xf32>
    %124 = arith.addf %121, %123 : vector<4x676xf32>
    %cst_117 = arith.constant 0.000000e+00 : f32
    %125 = vector.broadcast %cst_117 : f32 to vector<4x676xf32>
    %126 = arith.subf %125, %124 : vector<4x676xf32>
    %127 = math.exp %126 : vector<4x676xf32>
    %cst_118 = arith.constant 1.000000e+00 : f32
    %128 = vector.broadcast %cst_118 : f32 to vector<4x676xf32>
    %129 = arith.addf %128, %127 : vector<4x676xf32>
    %130 = tpu.reciprocal %129 {approx = true} : vector<4x676xf32> -> vector<4x676xf32>
    %131 = arith.mulf %124, %130 : vector<4x676xf32>
    %132 = vector.broadcast %0 : vector<1x676xf32> to vector<4x676xf32>
    %133 = arith.mulf %131, %132 : vector<4x676xf32>
    %c0_119 = arith.constant 0 : index
    %c256_120 = arith.constant 256 : index
    %134 = vector.load %arg15[%c0_119, %c256_120] : memref<4x1152xf32, #tpu.memory_space<vmem>>, vector<4x676xf32>
    tpu.vector_store %arg15[%c0_119, %c256_120], %133 {strides = array<i32>} : memref<4x1152xf32, #tpu.memory_space<vmem>>, vector<4x676xf32>,
    %c0_121 = arith.constant 0 : index
    %c0_122 = arith.constant 0 : index
    %135 = vector.load %arg7[%c0_121, %c0_122] : memref<4x11xf32, #tpu.memory_space<vmem>>, vector<4x11xf32>
    %136 = vector.extract_strided_slice %135 {offsets = [0, 0], sizes = [4, 1], strides = [1, 1]} : vector<4x11xf32> to vector<4x1xf32>
    %c0_123 = arith.constant 0 : index
    %c251 = arith.constant 251 : index
    %137 = vector.load %arg15[%c0_123, %c251] : memref<4x1152xf32, #tpu.memory_space<vmem>>, vector<4x676xf32>
    %138 = vector.broadcast %136 : vector<4x1xf32> to vector<4x676xf32>
    %139 = arith.mulf %138, %137 : vector<4x676xf32>
    %140 = vector.extract_strided_slice %135 {offsets = [0, 1], sizes = [4, 1], strides = [1, 1]} : vector<4x11xf32> to vector<4x1xf32>
    %c0_124 = arith.constant 0 : index
    %c252 = arith.constant 252 : index
    %141 = vector.load %arg15[%c0_124, %c252] : memref<4x1152xf32, #tpu.memory_space<vmem>>, vector<4x676xf32>
    %142 = vector.broadcast %140 : vector<4x1xf32> to vector<4x676xf32>
    %143 = arith.mulf %142, %141 : vector<4x676xf32>
    %144 = arith.addf %139, %143 : vector<4x676xf32>
    %145 = vector.extract_strided_slice %135 {offsets = [0, 2], sizes = [4, 1], strides = [1, 1]} : vector<4x11xf32> to vector<4x1xf32>
    %c0_125 = arith.constant 0 : index
    %c253_126 = arith.constant 253 : index
    %146 = vector.load %arg15[%c0_125, %c253_126] : memref<4x1152xf32, #tpu.memory_space<vmem>>, vector<4x676xf32>
    %147 = vector.broadcast %145 : vector<4x1xf32> to vector<4x676xf32>
    %148 = arith.mulf %147, %146 : vector<4x676xf32>
    %149 = arith.addf %144, %148 : vector<4x676xf32>
    %150 = vector.extract_strided_slice %135 {offsets = [0, 3], sizes = [4, 1], strides = [1, 1]} : vector<4x11xf32> to vector<4x1xf32>
    %c0_127 = arith.constant 0 : index
    %c254_128 = arith.constant 254 : index
    %151 = vector.load %arg15[%c0_127, %c254_128] : memref<4x1152xf32, #tpu.memory_space<vmem>>, vector<4x676xf32>
    %152 = vector.broadcast %150 : vector<4x1xf32> to vector<4x676xf32>
    %153 = arith.mulf %152, %151 : vector<4x676xf32>
    %154 = arith.addf %149, %153 : vector<4x676xf32>
    %155 = vector.extract_strided_slice %135 {offsets = [0, 4], sizes = [4, 1], strides = [1, 1]} : vector<4x11xf32> to vector<4x1xf32>
    %c0_129 = arith.constant 0 : index
    %c255_130 = arith.constant 255 : index
    %156 = vector.load %arg15[%c0_129, %c255_130] : memref<4x1152xf32, #tpu.memory_space<vmem>>, vector<4x676xf32>
    %157 = vector.broadcast %155 : vector<4x1xf32> to vector<4x676xf32>
    %158 = arith.mulf %157, %156 : vector<4x676xf32>
    %159 = arith.addf %154, %158 : vector<4x676xf32>
    %160 = vector.extract_strided_slice %135 {offsets = [0, 5], sizes = [4, 1], strides = [1, 1]} : vector<4x11xf32> to vector<4x1xf32>
    %c0_131 = arith.constant 0 : index
    %c256_132 = arith.constant 256 : index
    %161 = vector.load %arg15[%c0_131, %c256_132] : memref<4x1152xf32, #tpu.memory_space<vmem>>, vector<4x676xf32>
    %162 = vector.broadcast %160 : vector<4x1xf32> to vector<4x676xf32>
    %163 = arith.mulf %162, %161 : vector<4x676xf32>
    %164 = arith.addf %159, %163 : vector<4x676xf32>
    %165 = vector.extract_strided_slice %135 {offsets = [0, 6], sizes = [4, 1], strides = [1, 1]} : vector<4x11xf32> to vector<4x1xf32>
    %c0_133 = arith.constant 0 : index
    %c257_134 = arith.constant 257 : index
    %166 = vector.load %arg15[%c0_133, %c257_134] : memref<4x1152xf32, #tpu.memory_space<vmem>>, vector<4x676xf32>
    %167 = vector.broadcast %165 : vector<4x1xf32> to vector<4x676xf32>
    %168 = arith.mulf %167, %166 : vector<4x676xf32>
    %169 = arith.addf %164, %168 : vector<4x676xf32>
    %170 = vector.extract_strided_slice %135 {offsets = [0, 7], sizes = [4, 1], strides = [1, 1]} : vector<4x11xf32> to vector<4x1xf32>
    %c0_135 = arith.constant 0 : index
    %c258_136 = arith.constant 258 : index
    %171 = vector.load %arg15[%c0_135, %c258_136] : memref<4x1152xf32, #tpu.memory_space<vmem>>, vector<4x676xf32>
    %172 = vector.broadcast %170 : vector<4x1xf32> to vector<4x676xf32>
    %173 = arith.mulf %172, %171 : vector<4x676xf32>
    %174 = arith.addf %169, %173 : vector<4x676xf32>
    %175 = vector.extract_strided_slice %135 {offsets = [0, 8], sizes = [4, 1], strides = [1, 1]} : vector<4x11xf32> to vector<4x1xf32>
    %c0_137 = arith.constant 0 : index
    %c259_138 = arith.constant 259 : index
    %176 = vector.load %arg15[%c0_137, %c259_138] : memref<4x1152xf32, #tpu.memory_space<vmem>>, vector<4x676xf32>
    %177 = vector.broadcast %175 : vector<4x1xf32> to vector<4x676xf32>
    %178 = arith.mulf %177, %176 : vector<4x676xf32>
    %179 = arith.addf %174, %178 : vector<4x676xf32>
    %180 = vector.extract_strided_slice %135 {offsets = [0, 9], sizes = [4, 1], strides = [1, 1]} : vector<4x11xf32> to vector<4x1xf32>
    %c0_139 = arith.constant 0 : index
    %c260 = arith.constant 260 : index
    %181 = vector.load %arg15[%c0_139, %c260] : memref<4x1152xf32, #tpu.memory_space<vmem>>, vector<4x676xf32>
    %182 = vector.broadcast %180 : vector<4x1xf32> to vector<4x676xf32>
    %183 = arith.mulf %182, %181 : vector<4x676xf32>
    %184 = arith.addf %179, %183 : vector<4x676xf32>
    %185 = vector.extract_strided_slice %135 {offsets = [0, 10], sizes = [4, 1], strides = [1, 1]} : vector<4x11xf32> to vector<4x1xf32>
    %c0_140 = arith.constant 0 : index
    %c261 = arith.constant 261 : index
    %186 = vector.load %arg15[%c0_140, %c261] : memref<4x1152xf32, #tpu.memory_space<vmem>>, vector<4x676xf32>
    %187 = vector.broadcast %185 : vector<4x1xf32> to vector<4x676xf32>
    %188 = arith.mulf %187, %186 : vector<4x676xf32>
    %189 = arith.addf %184, %188 : vector<4x676xf32>
    %c0_141 = arith.constant 0 : index
    %c0_142 = arith.constant 0 : index
    %190 = vector.load %arg8[%c0_141, %c0_142] : memref<4x1xf32, #tpu.memory_space<vmem>>, vector<4x1xf32>
    %191 = vector.broadcast %190 : vector<4x1xf32> to vector<4x676xf32>
    %192 = arith.addf %189, %191 : vector<4x676xf32>
    %193 = vector.broadcast %0 : vector<1x676xf32> to vector<4x676xf32>
    %194 = arith.mulf %192, %193 : vector<4x676xf32>
    %c0_143 = arith.constant 0 : index
    %c256_144 = arith.constant 256 : index
    %195 = vector.load %arg14[%c0_143, %c256_144] : memref<4x1152xf32, #tpu.memory_space<vmem>>, vector<4x676xf32>
    tpu.vector_store %arg14[%c0_143, %c256_144], %194 {strides = array<i32>} : memref<4x1152xf32, #tpu.memory_space<vmem>>, vector<4x676xf32>,
    %c0_145 = arith.constant 0 : index
    %c0_146 = arith.constant 0 : index
    %196 = vector.load %arg9[%c0_145, %c0_146] : memref<4x11xf32, #tpu.memory_space<vmem>>, vector<4x11xf32>
    %197 = vector.extract_strided_slice %196 {offsets = [0, 0], sizes = [4, 1], strides = [1, 1]} : vector<4x11xf32> to vector<4x1xf32>
    %c0_147 = arith.constant 0 : index
    %c126 = arith.constant 126 : index
    %198 = vector.load %arg14[%c0_147, %c126] : memref<4x1152xf32, #tpu.memory_space<vmem>>, vector<4x676xf32>
    %199 = vector.broadcast %197 : vector<4x1xf32> to vector<4x676xf32>
    %200 = arith.mulf %199, %198 : vector<4x676xf32>
    %201 = vector.extract_strided_slice %196 {offsets = [0, 1], sizes = [4, 1], strides = [1, 1]} : vector<4x11xf32> to vector<4x1xf32>
    %c0_148 = arith.constant 0 : index
    %c152 = arith.constant 152 : index
    %202 = vector.load %arg14[%c0_148, %c152] : memref<4x1152xf32, #tpu.memory_space<vmem>>, vector<4x676xf32>
    %203 = vector.broadcast %201 : vector<4x1xf32> to vector<4x676xf32>
    %204 = arith.mulf %203, %202 : vector<4x676xf32>
    %205 = arith.addf %200, %204 : vector<4x676xf32>
    %206 = vector.extract_strided_slice %196 {offsets = [0, 2], sizes = [4, 1], strides = [1, 1]} : vector<4x11xf32> to vector<4x1xf32>
    %c0_149 = arith.constant 0 : index
    %c178_150 = arith.constant 178 : index
    %207 = vector.load %arg14[%c0_149, %c178_150] : memref<4x1152xf32, #tpu.memory_space<vmem>>, vector<4x676xf32>
    %208 = vector.broadcast %206 : vector<4x1xf32> to vector<4x676xf32>
    %209 = arith.mulf %208, %207 : vector<4x676xf32>
    %210 = arith.addf %205, %209 : vector<4x676xf32>
    %211 = vector.extract_strided_slice %196 {offsets = [0, 3], sizes = [4, 1], strides = [1, 1]} : vector<4x11xf32> to vector<4x1xf32>
    %c0_151 = arith.constant 0 : index
    %c204_152 = arith.constant 204 : index
    %212 = vector.load %arg14[%c0_151, %c204_152] : memref<4x1152xf32, #tpu.memory_space<vmem>>, vector<4x676xf32>
    %213 = vector.broadcast %211 : vector<4x1xf32> to vector<4x676xf32>
    %214 = arith.mulf %213, %212 : vector<4x676xf32>
    %215 = arith.addf %210, %214 : vector<4x676xf32>
    %216 = vector.extract_strided_slice %196 {offsets = [0, 4], sizes = [4, 1], strides = [1, 1]} : vector<4x11xf32> to vector<4x1xf32>
    %c0_153 = arith.constant 0 : index
    %c230_154 = arith.constant 230 : index
    %217 = vector.load %arg14[%c0_153, %c230_154] : memref<4x1152xf32, #tpu.memory_space<vmem>>, vector<4x676xf32>
    %218 = vector.broadcast %216 : vector<4x1xf32> to vector<4x676xf32>
    %219 = arith.mulf %218, %217 : vector<4x676xf32>
    %220 = arith.addf %215, %219 : vector<4x676xf32>
    %221 = vector.extract_strided_slice %196 {offsets = [0, 5], sizes = [4, 1], strides = [1, 1]} : vector<4x11xf32> to vector<4x1xf32>
    %c0_155 = arith.constant 0 : index
    %c256_156 = arith.constant 256 : index
    %222 = vector.load %arg14[%c0_155, %c256_156] : memref<4x1152xf32, #tpu.memory_space<vmem>>, vector<4x676xf32>
    %223 = vector.broadcast %221 : vector<4x1xf32> to vector<4x676xf32>
    %224 = arith.mulf %223, %222 : vector<4x676xf32>
    %225 = arith.addf %220, %224 : vector<4x676xf32>
    %226 = vector.extract_strided_slice %196 {offsets = [0, 6], sizes = [4, 1], strides = [1, 1]} : vector<4x11xf32> to vector<4x1xf32>
    %c0_157 = arith.constant 0 : index
    %c282_158 = arith.constant 282 : index
    %227 = vector.load %arg14[%c0_157, %c282_158] : memref<4x1152xf32, #tpu.memory_space<vmem>>, vector<4x676xf32>
    %228 = vector.broadcast %226 : vector<4x1xf32> to vector<4x676xf32>
    %229 = arith.mulf %228, %227 : vector<4x676xf32>
    %230 = arith.addf %225, %229 : vector<4x676xf32>
    %231 = vector.extract_strided_slice %196 {offsets = [0, 7], sizes = [4, 1], strides = [1, 1]} : vector<4x11xf32> to vector<4x1xf32>
    %c0_159 = arith.constant 0 : index
    %c308_160 = arith.constant 308 : index
    %232 = vector.load %arg14[%c0_159, %c308_160] : memref<4x1152xf32, #tpu.memory_space<vmem>>, vector<4x676xf32>
    %233 = vector.broadcast %231 : vector<4x1xf32> to vector<4x676xf32>
    %234 = arith.mulf %233, %232 : vector<4x676xf32>
    %235 = arith.addf %230, %234 : vector<4x676xf32>
    %236 = vector.extract_strided_slice %196 {offsets = [0, 8], sizes = [4, 1], strides = [1, 1]} : vector<4x11xf32> to vector<4x1xf32>
    %c0_161 = arith.constant 0 : index
    %c334_162 = arith.constant 334 : index
    %237 = vector.load %arg14[%c0_161, %c334_162] : memref<4x1152xf32, #tpu.memory_space<vmem>>, vector<4x676xf32>
    %238 = vector.broadcast %236 : vector<4x1xf32> to vector<4x676xf32>
    %239 = arith.mulf %238, %237 : vector<4x676xf32>
    %240 = arith.addf %235, %239 : vector<4x676xf32>
    %241 = vector.extract_strided_slice %196 {offsets = [0, 9], sizes = [4, 1], strides = [1, 1]} : vector<4x11xf32> to vector<4x1xf32>
    %c0_163 = arith.constant 0 : index
    %c360 = arith.constant 360 : index
    %242 = vector.load %arg14[%c0_163, %c360] : memref<4x1152xf32, #tpu.memory_space<vmem>>, vector<4x676xf32>
    %243 = vector.broadcast %241 : vector<4x1xf32> to vector<4x676xf32>
    %244 = arith.mulf %243, %242 : vector<4x676xf32>
    %245 = arith.addf %240, %244 : vector<4x676xf32>
    %246 = vector.extract_strided_slice %196 {offsets = [0, 10], sizes = [4, 1], strides = [1, 1]} : vector<4x11xf32> to vector<4x1xf32>
    %c0_164 = arith.constant 0 : index
    %c386 = arith.constant 386 : index
    %247 = vector.load %arg14[%c0_164, %c386] : memref<4x1152xf32, #tpu.memory_space<vmem>>, vector<4x676xf32>
    %248 = vector.broadcast %246 : vector<4x1xf32> to vector<4x676xf32>
    %249 = arith.mulf %248, %247 : vector<4x676xf32>
    %250 = arith.addf %245, %249 : vector<4x676xf32>
    %c0_165 = arith.constant 0 : index
    %c0_166 = arith.constant 0 : index
    %251 = vector.load %arg10[%c0_165, %c0_166] : memref<4x1xf32, #tpu.memory_space<vmem>>, vector<4x1xf32>
    %252 = vector.broadcast %251 : vector<4x1xf32> to vector<4x676xf32>
    %253 = arith.addf %250, %252 : vector<4x676xf32>
    %c0_167 = arith.constant 0 : index
    %c0_168 = arith.constant 0 : index
    %254 = vector.load %arg11[%c0_167, %c0_168] : memref<4x4xbf16, #tpu.memory_space<vmem>>, vector<4x4xbf16>
    %255 = arith.truncf %253 : vector<4x676xf32> to vector<4x676xbf16>
    %cst_169 = arith.constant dense<0.000000e+00> : vector<4x676xf32>
    %256 = tpu.matmul %254, %255, %cst_169 {dimension_numbers = #tpu.dot_dimension_numbers<[1], [0], [0], [1], [0, 0, 1, 1], [], []>} : vector<4x4xbf16>, vector<4x676xbf16>, vector<4x676xf32> -> vector<4x676xf32>
    %c0_170 = arith.constant 0 : index
    %c0_171 = arith.constant 0 : index
    %257 = vector.load %arg12[%c0_170, %c0_171] : memref<4x1xf32, #tpu.memory_space<vmem>>, vector<4x1xf32>
    %258 = vector.broadcast %257 : vector<4x1xf32> to vector<4x676xf32>
    %259 = arith.addf %256, %258 : vector<4x676xf32>
    %cst_172 = arith.constant 0.000000e+00 : f32
    %260 = vector.broadcast %cst_172 : f32 to vector<4x676xf32>
    %261 = arith.subf %260, %259 : vector<4x676xf32>
    %262 = math.exp %261 : vector<4x676xf32>
    %cst_173 = arith.constant 1.000000e+00 : f32
    %263 = vector.broadcast %cst_173 : f32 to vector<4x676xf32>
    %264 = arith.addf %263, %262 : vector<4x676xf32>
    %265 = tpu.reciprocal %264 {approx = true} : vector<4x676xf32> -> vector<4x676xf32>
    %266 = arith.mulf %259, %265 : vector<4x676xf32>
    %cst_174 = arith.constant 0.000000e+00 : f32
    %267 = vector.broadcast %cst_174 : f32 to vector<4x676xf32>
    %268 = arith.subf %267, %266 : vector<4x676xf32>
    %269 = math.exp %268 : vector<4x676xf32>
    %cst_175 = arith.constant 1.000000e+00 : f32
    %270 = vector.broadcast %cst_175 : f32 to vector<4x676xf32>
    %271 = arith.addf %270, %269 : vector<4x676xf32>
    %272 = tpu.reciprocal %271 {approx = true} : vector<4x676xf32> -> vector<4x676xf32>
    %c0_176 = arith.constant 0 : index
    %c256_177 = arith.constant 256 : index
    %273 = vector.load %arg15[%c0_176, %c256_177] : memref<4x1152xf32, #tpu.memory_space<vmem>>, vector<4x676xf32>
    tpu.vector_store %arg15[%c0_176, %c256_177], %272 {strides = array<i32>} : memref<4x1152xf32, #tpu.memory_space<vmem>>, vector<4x676xf32>,
    %c0_178 = arith.constant 0 : index
    %c391_179 = arith.constant 391 : index
    %274 = vector.load %arg15[%c0_178, %c391_179] : memref<4x1152xf32, #tpu.memory_space<vmem>>, vector<4x16xf32>
    %c0_180 = arith.constant 0 : index
    %c0_181 = arith.constant 0 : index
    %c0_182 = arith.constant 0 : index
    %275 = vector.load %arg1[%c0_180, %c0_181, %c0_182] : memref<1x4x256xf32, #tpu.memory_space<vmem>>, vector<1x4x16xf32>
    %276 = vector.shape_cast %275 : vector<1x4x16xf32> to vector<4x16xf32>
    %277 = arith.addf %274, %276 : vector<4x16xf32>
    %c0_183 = arith.constant 0 : index
    %c0_184 = arith.constant 0 : index
    %c0_185 = arith.constant 0 : index
    %278 = vector.load %arg13[%c0_183, %c0_184, %c0_185] : memref<1x4x256xf32, #tpu.memory_space<vmem>>, vector<1x4x16xf32>
    %279 = vector.shape_cast %278 : vector<1x4x16xf32> to vector<4x16xf32>
    %280 = vector.shape_cast %277 : vector<4x16xf32> to vector<1x4x16xf32>
    tpu.vector_store %arg13[%c0_183, %c0_184, %c0_185], %280 {strides = array<i32>} : memref<1x4x256xf32, #tpu.memory_space<vmem>>, vector<1x4x16xf32>,
    %c0_186 = arith.constant 0 : index
    %c417_187 = arith.constant 417 : index
    %281 = vector.load %arg15[%c0_186, %c417_187] : memref<4x1152xf32, #tpu.memory_space<vmem>>, vector<4x16xf32>
    %c0_188 = arith.constant 0 : index
    %c0_189 = arith.constant 0 : index
    %c16_190 = arith.constant 16 : index
    %282 = vector.load %arg1[%c0_188, %c0_189, %c16_190] : memref<1x4x256xf32, #tpu.memory_space<vmem>>, vector<1x4x16xf32>
    %283 = vector.shape_cast %282 : vector<1x4x16xf32> to vector<4x16xf32>
    %284 = arith.addf %281, %283 : vector<4x16xf32>
    %c0_191 = arith.constant 0 : index
    %c0_192 = arith.constant 0 : index
    %c16_193 = arith.constant 16 : index
    %285 = vector.load %arg13[%c0_191, %c0_192, %c16_193] : memref<1x4x256xf32, #tpu.memory_space<vmem>>, vector<1x4x16xf32>
    %286 = vector.shape_cast %285 : vector<1x4x16xf32> to vector<4x16xf32>
    %287 = vector.shape_cast %284 : vector<4x16xf32> to vector<1x4x16xf32>
    tpu.vector_store %arg13[%c0_191, %c0_192, %c16_193], %287 {strides = array<i32>} : memref<1x4x256xf32, #tpu.memory_space<vmem>>, vector<1x4x16xf32>,
    %c0_194 = arith.constant 0 : index
    %c443_195 = arith.constant 443 : index
    %288 = vector.load %arg15[%c0_194, %c443_195] : memref<4x1152xf32, #tpu.memory_space<vmem>>, vector<4x16xf32>
    %c0_196 = arith.constant 0 : index
    %c0_197 = arith.constant 0 : index
    %c32_198 = arith.constant 32 : index
    %289 = vector.load %arg1[%c0_196, %c0_197, %c32_198] : memref<1x4x256xf32, #tpu.memory_space<vmem>>, vector<1x4x16xf32>
    %290 = vector.shape_cast %289 : vector<1x4x16xf32> to vector<4x16xf32>
    %291 = arith.addf %288, %290 : vector<4x16xf32>
    %c0_199 = arith.constant 0 : index
    %c0_200 = arith.constant 0 : index
    %c32_201 = arith.constant 32 : index
    %292 = vector.load %arg13[%c0_199, %c0_200, %c32_201] : memref<1x4x256xf32, #tpu.memory_space<vmem>>, vector<1x4x16xf32>
    %293 = vector.shape_cast %292 : vector<1x4x16xf32> to vector<4x16xf32>
    %294 = vector.shape_cast %291 : vector<4x16xf32> to vector<1x4x16xf32>
    tpu.vector_store %arg13[%c0_199, %c0_200, %c32_201], %294 {strides = array<i32>} : memref<1x4x256xf32, #tpu.memory_space<vmem>>, vector<1x4x16xf32>,
    %c0_202 = arith.constant 0 : index
    %c469_203 = arith.constant 469 : index
    %295 = vector.load %arg15[%c0_202, %c469_203] : memref<4x1152xf32, #tpu.memory_space<vmem>>, vector<4x16xf32>
    %c0_204 = arith.constant 0 : index
    %c0_205 = arith.constant 0 : index
    %c48_206 = arith.constant 48 : index
    %296 = vector.load %arg1[%c0_204, %c0_205, %c48_206] : memref<1x4x256xf32, #tpu.memory_space<vmem>>, vector<1x4x16xf32>
    %297 = vector.shape_cast %296 : vector<1x4x16xf32> to vector<4x16xf32>
    %298 = arith.addf %295, %297 : vector<4x16xf32>
    %c0_207 = arith.constant 0 : index
    %c0_208 = arith.constant 0 : index
    %c48_209 = arith.constant 48 : index
    %299 = vector.load %arg13[%c0_207, %c0_208, %c48_209] : memref<1x4x256xf32, #tpu.memory_space<vmem>>, vector<1x4x16xf32>
    %300 = vector.shape_cast %299 : vector<1x4x16xf32> to vector<4x16xf32>
    %301 = vector.shape_cast %298 : vector<4x16xf32> to vector<1x4x16xf32>
    tpu.vector_store %arg13[%c0_207, %c0_208, %c48_209], %301 {strides = array<i32>} : memref<1x4x256xf32, #tpu.memory_space<vmem>>, vector<1x4x16xf32>,
    %c0_210 = arith.constant 0 : index
    %c495_211 = arith.constant 495 : index
    %302 = vector.load %arg15[%c0_210, %c495_211] : memref<4x1152xf32, #tpu.memory_space<vmem>>, vector<4x16xf32>
    %c0_212 = arith.constant 0 : index
    %c0_213 = arith.constant 0 : index
    %c64_214 = arith.constant 64 : index
    %303 = vector.load %arg1[%c0_212, %c0_213, %c64_214] : memref<1x4x256xf32, #tpu.memory_space<vmem>>, vector<1x4x16xf32>
    %304 = vector.shape_cast %303 : vector<1x4x16xf32> to vector<4x16xf32>
    %305 = arith.addf %302, %304 : vector<4x16xf32>
    %c0_215 = arith.constant 0 : index
    %c0_216 = arith.constant 0 : index
    %c64_217 = arith.constant 64 : index
    %306 = vector.load %arg13[%c0_215, %c0_216, %c64_217] : memref<1x4x256xf32, #tpu.memory_space<vmem>>, vector<1x4x16xf32>
    %307 = vector.shape_cast %306 : vector<1x4x16xf32> to vector<4x16xf32>
    %308 = vector.shape_cast %305 : vector<4x16xf32> to vector<1x4x16xf32>
    tpu.vector_store %arg13[%c0_215, %c0_216, %c64_217], %308 {strides = array<i32>} : memref<1x4x256xf32, #tpu.memory_space<vmem>>, vector<1x4x16xf32>,
    %c0_218 = arith.constant 0 : index
    %c521_219 = arith.constant 521 : index
    %309 = vector.load %arg15[%c0_218, %c521_219] : memref<4x1152xf32, #tpu.memory_space<vmem>>, vector<4x16xf32>
    %c0_220 = arith.constant 0 : index
    %c0_221 = arith.constant 0 : index
    %c80_222 = arith.constant 80 : index
    %310 = vector.load %arg1[%c0_220, %c0_221, %c80_222] : memref<1x4x256xf32, #tpu.memory_space<vmem>>, vector<1x4x16xf32>
    %311 = vector.shape_cast %310 : vector<1x4x16xf32> to vector<4x16xf32>
    %312 = arith.addf %309, %311 : vector<4x16xf32>
    %c0_223 = arith.constant 0 : index
    %c0_224 = arith.constant 0 : index
    %c80_225 = arith.constant 80 : index
    %313 = vector.load %arg13[%c0_223, %c0_224, %c80_225] : memref<1x4x256xf32, #tpu.memory_space<vmem>>, vector<1x4x16xf32>
    %314 = vector.shape_cast %313 : vector<1x4x16xf32> to vector<4x16xf32>
    %315 = vector.shape_cast %312 : vector<4x16xf32> to vector<1x4x16xf32>
    tpu.vector_store %arg13[%c0_223, %c0_224, %c80_225], %315 {strides = array<i32>} : memref<1x4x256xf32, #tpu.memory_space<vmem>>, vector<1x4x16xf32>,
    %c0_226 = arith.constant 0 : index
    %c547_227 = arith.constant 547 : index
    %316 = vector.load %arg15[%c0_226, %c547_227] : memref<4x1152xf32, #tpu.memory_space<vmem>>, vector<4x16xf32>
    %c0_228 = arith.constant 0 : index
    %c0_229 = arith.constant 0 : index
    %c96_230 = arith.constant 96 : index
    %317 = vector.load %arg1[%c0_228, %c0_229, %c96_230] : memref<1x4x256xf32, #tpu.memory_space<vmem>>, vector<1x4x16xf32>
    %318 = vector.shape_cast %317 : vector<1x4x16xf32> to vector<4x16xf32>
    %319 = arith.addf %316, %318 : vector<4x16xf32>
    %c0_231 = arith.constant 0 : index
    %c0_232 = arith.constant 0 : index
    %c96_233 = arith.constant 96 : index
    %320 = vector.load %arg13[%c0_231, %c0_232, %c96_233] : memref<1x4x256xf32, #tpu.memory_space<vmem>>, vector<1x4x16xf32>
    %321 = vector.shape_cast %320 : vector<1x4x16xf32> to vector<4x16xf32>
    %322 = vector.shape_cast %319 : vector<4x16xf32> to vector<1x4x16xf32>
    tpu.vector_store %arg13[%c0_231, %c0_232, %c96_233], %322 {strides = array<i32>} : memref<1x4x256xf32, #tpu.memory_space<vmem>>, vector<1x4x16xf32>,
    %c0_234 = arith.constant 0 : index
    %c573_235 = arith.constant 573 : index
    %323 = vector.load %arg15[%c0_234, %c573_235] : memref<4x1152xf32, #tpu.memory_space<vmem>>, vector<4x16xf32>
    %c0_236 = arith.constant 0 : index
    %c0_237 = arith.constant 0 : index
    %c112_238 = arith.constant 112 : index
    %324 = vector.load %arg1[%c0_236, %c0_237, %c112_238] : memref<1x4x256xf32, #tpu.memory_space<vmem>>, vector<1x4x16xf32>
    %325 = vector.shape_cast %324 : vector<1x4x16xf32> to vector<4x16xf32>
    %326 = arith.addf %323, %325 : vector<4x16xf32>
    %c0_239 = arith.constant 0 : index
    %c0_240 = arith.constant 0 : index
    %c112_241 = arith.constant 112 : index
    %327 = vector.load %arg13[%c0_239, %c0_240, %c112_241] : memref<1x4x256xf32, #tpu.memory_space<vmem>>, vector<1x4x16xf32>
    %328 = vector.shape_cast %327 : vector<1x4x16xf32> to vector<4x16xf32>
    %329 = vector.shape_cast %326 : vector<4x16xf32> to vector<1x4x16xf32>
    tpu.vector_store %arg13[%c0_239, %c0_240, %c112_241], %329 {strides = array<i32>} : memref<1x4x256xf32, #tpu.memory_space<vmem>>, vector<1x4x16xf32>,
    %c0_242 = arith.constant 0 : index
    %c599_243 = arith.constant 599 : index
    %330 = vector.load %arg15[%c0_242, %c599_243] : memref<4x1152xf32, #tpu.memory_space<vmem>>, vector<4x16xf32>
    %c0_244 = arith.constant 0 : index
    %c0_245 = arith.constant 0 : index
    %c128_246 = arith.constant 128 : index
    %331 = vector.load %arg1[%c0_244, %c0_245, %c128_246] : memref<1x4x256xf32, #tpu.memory_space<vmem>>, vector<1x4x16xf32>
    %332 = vector.shape_cast %331 : vector<1x4x16xf32> to vector<4x16xf32>
    %333 = arith.addf %330, %332 : vector<4x16xf32>
    %c0_247 = arith.constant 0 : index
    %c0_248 = arith.constant 0 : index
    %c128_249 = arith.constant 128 : index
    %334 = vector.load %arg13[%c0_247, %c0_248, %c128_249] : memref<1x4x256xf32, #tpu.memory_space<vmem>>, vector<1x4x16xf32>
    %335 = vector.shape_cast %334 : vector<1x4x16xf32> to vector<4x16xf32>
    %336 = vector.shape_cast %333 : vector<4x16xf32> to vector<1x4x16xf32>
    tpu.vector_store %arg13[%c0_247, %c0_248, %c128_249], %336 {strides = array<i32>} : memref<1x4x256xf32, #tpu.memory_space<vmem>>, vector<1x4x16xf32>,
    %c0_250 = arith.constant 0 : index
    %c625_251 = arith.constant 625 : index
    %337 = vector.load %arg15[%c0_250, %c625_251] : memref<4x1152xf32, #tpu.memory_space<vmem>>, vector<4x16xf32>
    %c0_252 = arith.constant 0 : index
    %c0_253 = arith.constant 0 : index
    %c144_254 = arith.constant 144 : index
    %338 = vector.load %arg1[%c0_252, %c0_253, %c144_254] : memref<1x4x256xf32, #tpu.memory_space<vmem>>, vector<1x4x16xf32>
    %339 = vector.shape_cast %338 : vector<1x4x16xf32> to vector<4x16xf32>
    %340 = arith.addf %337, %339 : vector<4x16xf32>
    %c0_255 = arith.constant 0 : index
    %c0_256 = arith.constant 0 : index
    %c144_257 = arith.constant 144 : index
    %341 = vector.load %arg13[%c0_255, %c0_256, %c144_257] : memref<1x4x256xf32, #tpu.memory_space<vmem>>, vector<1x4x16xf32>
    %342 = vector.shape_cast %341 : vector<1x4x16xf32> to vector<4x16xf32>
    %343 = vector.shape_cast %340 : vector<4x16xf32> to vector<1x4x16xf32>
    tpu.vector_store %arg13[%c0_255, %c0_256, %c144_257], %343 {strides = array<i32>} : memref<1x4x256xf32, #tpu.memory_space<vmem>>, vector<1x4x16xf32>,
    %c0_258 = arith.constant 0 : index
    %c651_259 = arith.constant 651 : index
    %344 = vector.load %arg15[%c0_258, %c651_259] : memref<4x1152xf32, #tpu.memory_space<vmem>>, vector<4x16xf32>
    %c0_260 = arith.constant 0 : index
    %c0_261 = arith.constant 0 : index
    %c160_262 = arith.constant 160 : index
    %345 = vector.load %arg1[%c0_260, %c0_261, %c160_262] : memref<1x4x256xf32, #tpu.memory_space<vmem>>, vector<1x4x16xf32>
    %346 = vector.shape_cast %345 : vector<1x4x16xf32> to vector<4x16xf32>
    %347 = arith.addf %344, %346 : vector<4x16xf32>
    %c0_263 = arith.constant 0 : index
    %c0_264 = arith.constant 0 : index
    %c160_265 = arith.constant 160 : index
    %348 = vector.load %arg13[%c0_263, %c0_264, %c160_265] : memref<1x4x256xf32, #tpu.memory_space<vmem>>, vector<1x4x16xf32>
    %349 = vector.shape_cast %348 : vector<1x4x16xf32> to vector<4x16xf32>
    %350 = vector.shape_cast %347 : vector<4x16xf32> to vector<1x4x16xf32>
    tpu.vector_store %arg13[%c0_263, %c0_264, %c160_265], %350 {strides = array<i32>} : memref<1x4x256xf32, #tpu.memory_space<vmem>>, vector<1x4x16xf32>,
    %c0_266 = arith.constant 0 : index
    %c677_267 = arith.constant 677 : index
    %351 = vector.load %arg15[%c0_266, %c677_267] : memref<4x1152xf32, #tpu.memory_space<vmem>>, vector<4x16xf32>
    %c0_268 = arith.constant 0 : index
    %c0_269 = arith.constant 0 : index
    %c176_270 = arith.constant 176 : index
    %352 = vector.load %arg1[%c0_268, %c0_269, %c176_270] : memref<1x4x256xf32, #tpu.memory_space<vmem>>, vector<1x4x16xf32>
    %353 = vector.shape_cast %352 : vector<1x4x16xf32> to vector<4x16xf32>
    %354 = arith.addf %351, %353 : vector<4x16xf32>
    %c0_271 = arith.constant 0 : index
    %c0_272 = arith.constant 0 : index
    %c176_273 = arith.constant 176 : index
    %355 = vector.load %arg13[%c0_271, %c0_272, %c176_273] : memref<1x4x256xf32, #tpu.memory_space<vmem>>, vector<1x4x16xf32>
    %356 = vector.shape_cast %355 : vector<1x4x16xf32> to vector<4x16xf32>
    %357 = vector.shape_cast %354 : vector<4x16xf32> to vector<1x4x16xf32>
    tpu.vector_store %arg13[%c0_271, %c0_272, %c176_273], %357 {strides = array<i32>} : memref<1x4x256xf32, #tpu.memory_space<vmem>>, vector<1x4x16xf32>,
    %c0_274 = arith.constant 0 : index
    %c703_275 = arith.constant 703 : index
    %358 = vector.load %arg15[%c0_274, %c703_275] : memref<4x1152xf32, #tpu.memory_space<vmem>>, vector<4x16xf32>
    %c0_276 = arith.constant 0 : index
    %c0_277 = arith.constant 0 : index
    %c192_278 = arith.constant 192 : index
    %359 = vector.load %arg1[%c0_276, %c0_277, %c192_278] : memref<1x4x256xf32, #tpu.memory_space<vmem>>, vector<1x4x16xf32>
    %360 = vector.shape_cast %359 : vector<1x4x16xf32> to vector<4x16xf32>
    %361 = arith.addf %358, %360 : vector<4x16xf32>
    %c0_279 = arith.constant 0 : index
    %c0_280 = arith.constant 0 : index
    %c192_281 = arith.constant 192 : index
    %362 = vector.load %arg13[%c0_279, %c0_280, %c192_281] : memref<1x4x256xf32, #tpu.memory_space<vmem>>, vector<1x4x16xf32>
    %363 = vector.shape_cast %362 : vector<1x4x16xf32> to vector<4x16xf32>
    %364 = vector.shape_cast %361 : vector<4x16xf32> to vector<1x4x16xf32>
    tpu.vector_store %arg13[%c0_279, %c0_280, %c192_281], %364 {strides = array<i32>} : memref<1x4x256xf32, #tpu.memory_space<vmem>>, vector<1x4x16xf32>,
    %c0_282 = arith.constant 0 : index
    %c729_283 = arith.constant 729 : index
    %365 = vector.load %arg15[%c0_282, %c729_283] : memref<4x1152xf32, #tpu.memory_space<vmem>>, vector<4x16xf32>
    %c0_284 = arith.constant 0 : index
    %c0_285 = arith.constant 0 : index
    %c208_286 = arith.constant 208 : index
    %366 = vector.load %arg1[%c0_284, %c0_285, %c208_286] : memref<1x4x256xf32, #tpu.memory_space<vmem>>, vector<1x4x16xf32>
    %367 = vector.shape_cast %366 : vector<1x4x16xf32> to vector<4x16xf32>
    %368 = arith.addf %365, %367 : vector<4x16xf32>
    %c0_287 = arith.constant 0 : index
    %c0_288 = arith.constant 0 : index
    %c208_289 = arith.constant 208 : index
    %369 = vector.load %arg13[%c0_287, %c0_288, %c208_289] : memref<1x4x256xf32, #tpu.memory_space<vmem>>, vector<1x4x16xf32>
    %370 = vector.shape_cast %369 : vector<1x4x16xf32> to vector<4x16xf32>
    %371 = vector.shape_cast %368 : vector<4x16xf32> to vector<1x4x16xf32>
    tpu.vector_store %arg13[%c0_287, %c0_288, %c208_289], %371 {strides = array<i32>} : memref<1x4x256xf32, #tpu.memory_space<vmem>>, vector<1x4x16xf32>,
    %c0_290 = arith.constant 0 : index
    %c755_291 = arith.constant 755 : index
    %372 = vector.load %arg15[%c0_290, %c755_291] : memref<4x1152xf32, #tpu.memory_space<vmem>>, vector<4x16xf32>
    %c0_292 = arith.constant 0 : index
    %c0_293 = arith.constant 0 : index
    %c224_294 = arith.constant 224 : index
    %373 = vector.load %arg1[%c0_292, %c0_293, %c224_294] : memref<1x4x256xf32, #tpu.memory_space<vmem>>, vector<1x4x16xf32>
    %374 = vector.shape_cast %373 : vector<1x4x16xf32> to vector<4x16xf32>
    %375 = arith.addf %372, %374 : vector<4x16xf32>
    %c0_295 = arith.constant 0 : index
    %c0_296 = arith.constant 0 : index
    %c224_297 = arith.constant 224 : index
    %376 = vector.load %arg13[%c0_295, %c0_296, %c224_297] : memref<1x4x256xf32, #tpu.memory_space<vmem>>, vector<1x4x16xf32>
    %377 = vector.shape_cast %376 : vector<1x4x16xf32> to vector<4x16xf32>
    %378 = vector.shape_cast %375 : vector<4x16xf32> to vector<1x4x16xf32>
    tpu.vector_store %arg13[%c0_295, %c0_296, %c224_297], %378 {strides = array<i32>} : memref<1x4x256xf32, #tpu.memory_space<vmem>>, vector<1x4x16xf32>,
    %c0_298 = arith.constant 0 : index
    %c781_299 = arith.constant 781 : index
    %379 = vector.load %arg15[%c0_298, %c781_299] : memref<4x1152xf32, #tpu.memory_space<vmem>>, vector<4x16xf32>
    %c0_300 = arith.constant 0 : index
    %c0_301 = arith.constant 0 : index
    %c240_302 = arith.constant 240 : index
    %380 = vector.load %arg1[%c0_300, %c0_301, %c240_302] : memref<1x4x256xf32, #tpu.memory_space<vmem>>, vector<1x4x16xf32>
    %381 = vector.shape_cast %380 : vector<1x4x16xf32> to vector<4x16xf32>
    %382 = arith.addf %379, %381 : vector<4x16xf32>
    %c0_303 = arith.constant 0 : index
    %c0_304 = arith.constant 0 : index
    %c240_305 = arith.constant 240 : index
    %383 = vector.load %arg13[%c0_303, %c0_304, %c240_305] : memref<1x4x256xf32, #tpu.memory_space<vmem>>, vector<1x4x16xf32>
    %384 = vector.shape_cast %383 : vector<1x4x16xf32> to vector<4x16xf32>
    %385 = vector.shape_cast %382 : vector<4x16xf32> to vector<1x4x16xf32>
    tpu.vector_store %arg13[%c0_303, %c0_304, %c240_305], %385 {strides = array<i32>} : memref<1x4x256xf32, #tpu.memory_space<vmem>>, vector<1x4x16xf32>,
    return
  }
  func.func @transform_0(%arg0: i32) -> (i32, i32, i32) {
    %c0_i32 = arith.constant 0 : i32
    %c0_i32_0 = arith.constant 0 : i32
    %c0_i32_1 = arith.constant 0 : i32
    return %arg0, %c0_i32, %c0_i32_0 : i32, i32, i32
  }
  func.func @transform_1(%arg0: i32) -> (i32, i32) {
    %c0_i32 = arith.constant 0 : i32
    %c0_i32_0 = arith.constant 0 : i32
    %c0_i32_1 = arith.constant 0 : i32
    return %c0_i32, %c0_i32_0 : i32, i32
  }
  func.func @transform_2(%arg0: i32) -> (i32, i32) {
    %c0_i32 = arith.constant 0 : i32
    %c0_i32_0 = arith.constant 0 : i32
    %c0_i32_1 = arith.constant 0 : i32
    return %c0_i32, %c0_i32_0 : i32, i32
  }
  func.func @transform_3(%arg0: i32) -> (i32, i32) {
    %c0_i32 = arith.constant 0 : i32
    %c0_i32_0 = arith.constant 0 : i32
    %c0_i32_1 = arith.constant 0 : i32
    return %c0_i32, %c0_i32_0 : i32, i32
  }
  func.func @transform_4(%arg0: i32) -> (i32, i32) {
    %c0_i32 = arith.constant 0 : i32
    %c0_i32_0 = arith.constant 0 : i32
    %c0_i32_1 = arith.constant 0 : i32
    return %c0_i32, %c0_i32_0 : i32, i32
  }
  func.func @transform_5(%arg0: i32) -> (i32, i32) {
    %c0_i32 = arith.constant 0 : i32
    %c0_i32_0 = arith.constant 0 : i32
    %c0_i32_1 = arith.constant 0 : i32
    return %c0_i32, %c0_i32_0 : i32, i32
  }
  func.func @transform_6(%arg0: i32) -> (i32, i32) {
    %c0_i32 = arith.constant 0 : i32
    %c0_i32_0 = arith.constant 0 : i32
    %c0_i32_1 = arith.constant 0 : i32
    return %c0_i32, %c0_i32_0 : i32, i32
  }
  func.func @transform_7(%arg0: i32) -> (i32, i32) {
    %c0_i32 = arith.constant 0 : i32
    %c0_i32_0 = arith.constant 0 : i32
    %c0_i32_1 = arith.constant 0 : i32
    return %c0_i32, %c0_i32_0 : i32, i32
  }
  func.func @transform_8(%arg0: i32) -> (i32, i32) {
    %c0_i32 = arith.constant 0 : i32
    %c0_i32_0 = arith.constant 0 : i32
    %c0_i32_1 = arith.constant 0 : i32
    return %c0_i32, %c0_i32_0 : i32, i32
  }
  func.func @transform_9(%arg0: i32) -> (i32, i32) {
    %c0_i32 = arith.constant 0 : i32
    %c0_i32_0 = arith.constant 0 : i32
    %c0_i32_1 = arith.constant 0 : i32
    return %c0_i32, %c0_i32_0 : i32, i32
  }
  func.func @transform_10(%arg0: i32) -> (i32, i32) {
    %c0_i32 = arith.constant 0 : i32
    %c0_i32_0 = arith.constant 0 : i32
    %c0_i32_1 = arith.constant 0 : i32
    return %c0_i32, %c0_i32_0 : i32, i32
  }
  func.func @transform_11(%arg0: i32) -> (i32, i32) {
    %c0_i32 = arith.constant 0 : i32
    %c0_i32_0 = arith.constant 0 : i32
    %c0_i32_1 = arith.constant 0 : i32
    return %c0_i32, %c0_i32_0 : i32, i32
  }
  func.func @transform_12(%arg0: i32) -> (i32, i32, i32) {
    %c0_i32 = arith.constant 0 : i32
    %c0_i32_0 = arith.constant 0 : i32
    %c0_i32_1 = arith.constant 0 : i32
    return %arg0, %c0_i32, %c0_i32_0 : i32, i32, i32
  }
}

</mosaic_0001>

<llo_original>
// kernel: tpu_custom_call.1
$region0: #{tpu_custom_call.1}
  #allocation0 [shape = 'u32[]', space=smem, size = 0x4, offset = 0x4, fixed_abs, tag = 'smem constant byte address 0x4 - core index']
  #allocation1 [shape = 'u32[144,128]{1,0:T(1,128)}', space=vmem, size = 0x12000, scoped, tag = 'internal scratch']
  #allocation2 [shape = 'f32[4,1152]{1,0:T(4,128)}', space=vmem, size = 0x4800, scoped, tag = 'scratch operand']
  #allocation3 [shape = 'f32[4,1152]{1,0:T(4,128)}', space=vmem, size = 0x4800, scoped, tag = 'scratch operand']
  #allocation4 [shape = 'f32[36,676]{1,0:T(8,128)}', space=vmem, size = 0x1e000, scoped, tag = 'scratch operand']
  %s0 = inlined_call_operand.hbm [shape: f32[2,4,256], index: 0, kind: input, shape index: {}]
  %s1 = inlined_call_operand.vmem [shape: f32[1,676], index: 1, kind: input, shape index: {}]
  %s2 = inlined_call_operand.vmem [shape: bf16[4,36], index: 2, kind: input, shape index: {}]
  %s3 = inlined_call_operand.vmem [shape: f32[4,1], index: 3, kind: input, shape index: {}]
  %s4 = inlined_call_operand.vmem [shape: bf16[4,4], index: 4, kind: input, shape index: {}]
  %s5 = inlined_call_operand.vmem [shape: f32[4,1], index: 5, kind: input, shape index: {}]
  %s6 = inlined_call_operand.vmem [shape: f32[4,11], index: 6, kind: input, shape index: {}]
  %s7 = inlined_call_operand.vmem [shape: f32[4,1], index: 7, kind: input, shape index: {}]
  %s8 = inlined_call_operand.vmem [shape: f32[4,11], index: 8, kind: input, shape index: {}]
  %s9 = inlined_call_operand.vmem [shape: f32[4,1], index: 9, kind: input, shape index: {}]
  %s10 = inlined_call_operand.vmem [shape: bf16[4,4], index: 10, kind: input, shape index: {}]
  %s11 = inlined_call_operand.vmem [shape: f32[4,1], index: 11, kind: input, shape index: {}]
  %s12 = inlined_call_operand.hbm [shape: f32[2,4,256], index: 12, kind: output, shape index: {}]
  %s13 = sld [smem:[#allocation0]]
  $region85: #{tpu_custom_call.1} parent=0
    _
  %s15 = ssub.s32 1, %s13
  %s16 = scalar_select 0, %s15, %s13
  $region1: #{tpu_custom_call.1} parent=0
    #allocation5 [shape = 'u8[8192]{0}', space=vmem, size = 0x2000, scoped, tag = 'input window, operand 0']
    #allocation6 [shape = 's32[2]{0}', space=sflag, size = 0x8, scoped, tag = 'scoped memory for tpu_custom_call.1']
    #allocation7 [shape = 's32[2]{0}', space=sflag, size = 0x8, scoped, tag = 'scoped memory for tpu_custom_call.1']
    #allocation8 [shape = 'u8[8192]{0}', space=vmem, size = 0x2000, scoped, tag = 'output window, operand 0']
    %17 = vsyncpa [#allocation6], 0
    %s18 = scalar_lea.sflag [#allocation6], 1
    %19 = vsyncpa %s18, 0
    %20 = vsyncpa [#allocation7], 0
    %s21 = scalar_lea.sflag [#allocation7], 1
    %22 = vsyncpa %s21, 0
    loop: start=0, step=1, limit=4
    $region2: #{tpu_custom_call.1} parent=1 // loop_pre_header
      _
    $region3: #{tpu_custom_call.1} parent=1 // loop_header
      %s24 = sphi 0, %s28
      %p25 = scmp.ge.s32.totalorder %s24, 4
      %s34 = sphi 0, %s36
      %s37 = sphi 0, %s34
      %s38 = sphi 0, %s37
      %s54 = sphi 0, %s38
      %s58 = sphi 0, %s58
      %s60 = sphi 0, %s58
      %s61 = sphi 0, %s60
      %s75 = sphi 0, %s61
      %s79 = sphi 0, %s79
      %s81 = sphi 0, %s79
      %s82 = sphi 0, %s81
      %s96 = sphi 0, %s82
      %s100 = sphi 0, %s100
      %s102 = sphi 0, %s100
      %s103 = sphi 0, %s102
      %s117 = sphi 0, %s103
      %s121 = sphi 0, %s121
      %s123 = sphi 0, %s121
      %s124 = sphi 0, %s123
      %s138 = sphi 0, %s124
      %s142 = sphi 0, %s142
      %s144 = sphi 0, %s142
      %s145 = sphi 0, %s144
      %s159 = sphi 0, %s145
      %s163 = sphi 0, %s163
      %s165 = sphi 0, %s163
      %s166 = sphi 0, %s165
      %s180 = sphi 0, %s166
      %s184 = sphi 0, %s184
      %s186 = sphi 0, %s184
      %s187 = sphi 0, %s186
      %s201 = sphi 0, %s187
      %s205 = sphi 0, %s205
      %s207 = sphi 0, %s205
      %s208 = sphi 0, %s207
      %s222 = sphi 0, %s208
      %s226 = sphi 0, %s226
      %s228 = sphi 0, %s226
      %s229 = sphi 0, %s228
      %s243 = sphi 0, %s229
      %s247 = sphi 0, %s247
      %s249 = sphi 0, %s247
      %s250 = sphi 0, %s249
      %s264 = sphi 0, %s250
      %s268 = sphi 0, %s268
      %s270 = sphi 0, %s268
      %s271 = sphi 0, %s270
      %s285 = sphi 0, %s271
      %s291 = sphi 0, %s293
      %s294 = sphi 0, %s291
      %s295 = sphi 0, %s294
      %s311 = sphi 0, %s295
    $region4: #{tpu_custom_call.1} parent=1 // loop_header_branch
      %27 = sbr.rel (%p25) target = $region8
    $region5: #{tpu_custom_call.1} parent=1 // loop_body
      %s29 = ssub.s32 %s24, 1
      %s30 = ssub.s32 %s24, 2
      %s31 = sadd.s32 %s24, 1
      %s32 = ssub.s32 %s24, %s31
      %p33 = scmp.eq.s32.totalorder %s32, 0
      %s35 = sadd.s32 %s34, 1
      %s36 = scalar_select %p33, %s34, %s35
      %p39 = pneg %p33
      %p40 = scmp.eq.s32.totalorder %s24, 1
      %p41 = por %p39, %p40
      %p42 = scmp.ne.s32.totalorder %s34, %s37
      %p43 = scmp.eq.s32.totalorder %s24, 0
      %p44 = por %p42, %p43
      %p45 = scmp.ne.s32.totalorder %s34, %s37
      %p46 = scmp.eq.s32.totalorder %s29, 1
      %p47 = por %p45, %p46
      %p48 = scmp.ne.s32.totalorder %s37, %s38
      %p49 = scmp.eq.s32.totalorder %s29, 0
      %p50 = por %p48, %p49
      %p51 = scmp.ne.s32.totalorder %s37, %s38
      %p52 = scmp.eq.s32.totalorder %s30, 1
      %p53 = por %p51, %p52
      %p55 = scmp.ne.s32.totalorder %s38, %s54
      %p56 = scmp.eq.s32.totalorder %s30, 0
      %p57 = por %p55, %p56
      %s59 = sadd.s32 %s58, 1
      %p62 = scmp.eq.s32.totalorder %s24, 1
      %p63 = scmp.ne.s32.totalorder %s58, %s60
      %p64 = scmp.eq.s32.totalorder %s24, 0
      %p65 = por %p63, %p64
      %p66 = scmp.ne.s32.totalorder %s58, %s60
      %p67 = scmp.eq.s32.totalorder %s29, 1
      %p68 = por %p66, %p67
      %p69 = scmp.ne.s32.totalorder %s60, %s61
      %p70 = scmp.eq.s32.totalorder %s29, 0
      %p71 = por %p69, %p70
      %p72 = scmp.ne.s32.totalorder %s60, %s61
      %p73 = scmp.eq.s32.totalorder %s30, 1
      %p74 = por %p72, %p73
      %p76 = scmp.ne.s32.totalorder %s61, %s75
      %p77 = scmp.eq.s32.totalorder %s30, 0
      %p78 = por %p76, %p77
      %s80 = sadd.s32 %s79, 1
      %p83 = scmp.eq.s32.totalorder %s24, 1
      %p84 = scmp.ne.s32.totalorder %s79, %s81
      %p85 = scmp.eq.s32.totalorder %s24, 0
      %p86 = por %p84, %p85
      %p87 = scmp.ne.s32.totalorder %s79, %s81
      %p88 = scmp.eq.s32.totalorder %s29, 1
      %p89 = por %p87, %p88
      %p90 = scmp.ne.s32.totalorder %s81, %s82
      %p91 = scmp.eq.s32.totalorder %s29, 0
      %p92 = por %p90, %p91
      %p93 = scmp.ne.s32.totalorder %s81, %s82
      %p94 = scmp.eq.s32.totalorder %s30, 1
      %p95 = por %p93, %p94
      %p97 = scmp.ne.s32.totalorder %s82, %s96
      %p98 = scmp.eq.s32.totalorder %s30, 0
      %p99 = por %p97, %p98
      %s101 = sadd.s32 %s100, 1
      %p104 = scmp.eq.s32.totalorder %s24, 1
      %p105 = scmp.ne.s32.totalorder %s100, %s102
      %p106 = scmp.eq.s32.totalorder %s24, 0
      %p107 = por %p105, %p106
      %p108 = scmp.ne.s32.totalorder %s100, %s102
      %p109 = scmp.eq.s32.totalorder %s29, 1
      %p110 = por %p108, %p109
      %p111 = scmp.ne.s32.totalorder %s102, %s103
      %p112 = scmp.eq.s32.totalorder %s29, 0
      %p113 = por %p111, %p112
      %p114 = scmp.ne.s32.totalorder %s102, %s103
      %p115 = scmp.eq.s32.totalorder %s30, 1
      %p116 = por %p114, %p115
      %p118 = scmp.ne.s32.totalorder %s103, %s117
      %p119 = scmp.eq.s32.totalorder %s30, 0
      %p120 = por %p118, %p119
      %s122 = sadd.s32 %s121, 1
      %p125 = scmp.eq.s32.totalorder %s24, 1
      %p126 = scmp.ne.s32.totalorder %s121, %s123
      %p127 = scmp.eq.s32.totalorder %s24, 0
      %p128 = por %p126, %p127
      %p129 = scmp.ne.s32.totalorder %s121, %s123
      %p130 = scmp.eq.s32.totalorder %s29, 1
      %p131 = por %p129, %p130
      %p132 = scmp.ne.s32.totalorder %s123, %s124
      %p133 = scmp.eq.s32.totalorder %s29, 0
      %p134 = por %p132, %p133
      %p135 = scmp.ne.s32.totalorder %s123, %s124
      %p136 = scmp.eq.s32.totalorder %s30, 1
      %p137 = por %p135, %p136
      %p139 = scmp.ne.s32.totalorder %s124, %s138
      %p140 = scmp.eq.s32.totalorder %s30, 0
      %p141 = por %p139, %p140
      %s143 = sadd.s32 %s142, 1
      %p146 = scmp.eq.s32.totalorder %s24, 1
      %p147 = scmp.ne.s32.totalorder %s142, %s144
      %p148 = scmp.eq.s32.totalorder %s24, 0
      %p149 = por %p147, %p148
      %p150 = scmp.ne.s32.totalorder %s142, %s144
      %p151 = scmp.eq.s32.totalorder %s29, 1
      %p152 = por %p150, %p151
      %p153 = scmp.ne.s32.totalorder %s144, %s145
      %p154 = scmp.eq.s32.totalorder %s29, 0
      %p155 = por %p153, %p154
      %p156 = scmp.ne.s32.totalorder %s144, %s145
      %p157 = scmp.eq.s32.totalorder %s30, 1
      %p158 = por %p156, %p157
      %p160 = scmp.ne.s32.totalorder %s145, %s159
      %p161 = scmp.eq.s32.totalorder %s30, 0
      %p162 = por %p160, %p161
      %s164 = sadd.s32 %s163, 1
      %p167 = scmp.eq.s32.totalorder %s24, 1
      %p168 = scmp.ne.s32.totalorder %s163, %s165
      %p169 = scmp.eq.s32.totalorder %s24, 0
      %p170 = por %p168, %p169
      %p171 = scmp.ne.s32.totalorder %s163, %s165
      %p172 = scmp.eq.s32.totalorder %s29, 1
      %p173 = por %p171, %p172
      %p174 = scmp.ne.s32.totalorder %s165, %s166
      %p175 = scmp.eq.s32.totalorder %s29, 0
      %p176 = por %p174, %p175
      %p177 = scmp.ne.s32.totalorder %s165, %s166
      %p178 = scmp.eq.s32.totalorder %s30, 1
      %p179 = por %p177, %p178
      %p181 = scmp.ne.s32.totalorder %s166, %s180
      %p182 = scmp.eq.s32.totalorder %s30, 0
      %p183 = por %p181, %p182
      %s185 = sadd.s32 %s184, 1
      %p188 = scmp.eq.s32.totalorder %s24, 1
      %p189 = scmp.ne.s32.totalorder %s184, %s186
      %p190 = scmp.eq.s32.totalorder %s24, 0
      %p191 = por %p189, %p190
      %p192 = scmp.ne.s32.totalorder %s184, %s186
      %p193 = scmp.eq.s32.totalorder %s29, 1
      %p194 = por %p192, %p193
      %p195 = scmp.ne.s32.totalorder %s186, %s187
      %p196 = scmp.eq.s32.totalorder %s29, 0
      %p197 = por %p195, %p196
      %p198 = scmp.ne.s32.totalorder %s186, %s187
      %p199 = scmp.eq.s32.totalorder %s30, 1
      %p200 = por %p198, %p199
      %p202 = scmp.ne.s32.totalorder %s187, %s201
      %p203 = scmp.eq.s32.totalorder %s30, 0
      %p204 = por %p202, %p203
      %s206 = sadd.s32 %s205, 1
      %p209 = scmp.eq.s32.totalorder %s24, 1
      %p210 = scmp.ne.s32.totalorder %s205, %s207
      %p211 = scmp.eq.s32.totalorder %s24, 0
      %p212 = por %p210, %p211
      %p213 = scmp.ne.s32.totalorder %s205, %s207
      %p214 = scmp.eq.s32.totalorder %s29, 1
      %p215 = por %p213, %p214
      %p216 = scmp.ne.s32.totalorder %s207, %s208
      %p217 = scmp.eq.s32.totalorder %s29, 0
      %p218 = por %p216, %p217
      %p219 = scmp.ne.s32.totalorder %s207, %s208
      %p220 = scmp.eq.s32.totalorder %s30, 1
      %p221 = por %p219, %p220
      %p223 = scmp.ne.s32.totalorder %s208, %s222
      %p224 = scmp.eq.s32.totalorder %s30, 0
      %p225 = por %p223, %p224
      %s227 = sadd.s32 %s226, 1
      %p230 = scmp.eq.s32.totalorder %s24, 1
      %p231 = scmp.ne.s32.totalorder %s226, %s228
      %p232 = scmp.eq.s32.totalorder %s24, 0
      %p233 = por %p231, %p232
      %p234 = scmp.ne.s32.totalorder %s226, %s228
      %p235 = scmp.eq.s32.totalorder %s29, 1
      %p236 = por %p234, %p235
      %p237 = scmp.ne.s32.totalorder %s228, %s229
      %p238 = scmp.eq.s32.totalorder %s29, 0
      %p239 = por %p237, %p238
      %p240 = scmp.ne.s32.totalorder %s228, %s229
      %p241 = scmp.eq.s32.totalorder %s30, 1
      %p242 = por %p240, %p241
      %p244 = scmp.ne.s32.totalorder %s229, %s243
      %p245 = scmp.eq.s32.totalorder %s30, 0
      %p246 = por %p244, %p245
      %s248 = sadd.s32 %s247, 1
      %p251 = scmp.eq.s32.totalorder %s24, 1
      %p252 = scmp.ne.s32.totalorder %s247, %s249
      %p253 = scmp.eq.s32.totalorder %s24, 0
      %p254 = por %p252, %p253
      %p255 = scmp.ne.s32.totalorder %s247, %s249
      %p256 = scmp.eq.s32.totalorder %s29, 1
      %p257 = por %p255, %p256
      %p258 = scmp.ne.s32.totalorder %s249, %s250
      %p259 = scmp.eq.s32.totalorder %s29, 0
      %p260 = por %p258, %p259
      %p261 = scmp.ne.s32.totalorder %s249, %s250
      %p262 = scmp.eq.s32.totalorder %s30, 1
      %p263 = por %p261, %p262
      %p265 = scmp.ne.s32.totalorder %s250, %s264
      %p266 = scmp.eq.s32.totalorder %s30, 0
      %p267 = por %p265, %p266
      %s269 = sadd.s32 %s268, 1
      %p272 = scmp.eq.s32.totalorder %s24, 1
      %p273 = scmp.ne.s32.totalorder %s268, %s270
      %p274 = scmp.eq.s32.totalorder %s24, 0
      %p275 = por %p273, %p274
      %p276 = scmp.ne.s32.totalorder %s268, %s270
      %p277 = scmp.eq.s32.totalorder %s29, 1
      %p278 = por %p276, %p277
      %p279 = scmp.ne.s32.totalorder %s270, %s271
      %p280 = scmp.eq.s32.totalorder %s29, 0
      %p281 = por %p279, %p280
      %p282 = scmp.ne.s32.totalorder %s270, %s271
      %p283 = scmp.eq.s32.totalorder %s30, 1
      %p284 = por %p282, %p283
      %p286 = scmp.ne.s32.totalorder %s271, %s285
      %p287 = scmp.eq.s32.totalorder %s30, 0
      %p288 = por %p286, %p287
      %s289 = ssub.s32 %s24, %s31
      %p290 = scmp.eq.s32.totalorder %s289, 0
      %s292 = sadd.s32 %s291, 1
      %s293 = scalar_select %p290, %s291, %s292
      %p296 = pneg %p290
      %p297 = scmp.eq.s32.totalorder %s24, 1
      %p298 = por %p296, %p297
      %p299 = scmp.ne.s32.totalorder %s291, %s294
      %p300 = scmp.eq.s32.totalorder %s24, 0
      %p301 = por %p299, %p300
      %p302 = scmp.ne.s32.totalorder %s291, %s294
      %p303 = scmp.eq.s32.totalorder %s29, 1
      %p304 = por %p302, %p303
      %p305 = scmp.ne.s32.totalorder %s294, %s295
      %p306 = scmp.eq.s32.totalorder %s29, 0
      %p307 = por %p305, %p306
      %p308 = scmp.ne.s32.totalorder %s294, %s295
      %p309 = scmp.eq.s32.totalorder %s30, 1
      %p310 = por %p308, %p309
      %p312 = scmp.ne.s32.totalorder %s295, %s311
      %p313 = scmp.eq.s32.totalorder %s30, 0
      %p314 = por %p312, %p313
      %p315 = scmp.le.s32.totalorder 1, %s24
      %p316 = scmp.lt.s32.totalorder %s24, 3
      %p317 = pnand %p315, %p316
      %p318 = pneg %p317
      // Predicated region
      $region9: #{tpu_custom_call.1} parent=5 // pred_check
        _
      $region10: #{tpu_custom_call.1} parent=5 // pred_check_branch
        %320 = sbr.rel (%p317) target = $region12
      $region11: #{tpu_custom_call.1} parent=5 // pred_region
        %s321 = ssub.s32 %s24, 1
        // Predicated region
        $region13: #{tpu_custom_call.1} parent=11 // pred_check
          %p322 = pneg %p71
        $region14: #{tpu_custom_call.1} parent=11 // pred_check_branch
          %324 = sbr.rel (%p322) target = $region16
        $region15: #{tpu_custom_call.1} parent=11 // pred_region
          _
        $region16: #{tpu_custom_call.1} parent=11 // pred_fallthru
          _
        // Predicated region
        $region17: #{tpu_custom_call.1} parent=11 // pred_check
          %p325 = pneg %p92
        $region18: #{tpu_custom_call.1} parent=11 // pred_check_branch
          %327 = sbr.rel (%p325) target = $region20
        $region19: #{tpu_custom_call.1} parent=11 // pred_region
          _
        $region20: #{tpu_custom_call.1} parent=11 // pred_fallthru
          _
        // Predicated region
        $region21: #{tpu_custom_call.1} parent=11 // pred_check
          %p328 = pneg %p113
        $region22: #{tpu_custom_call.1} parent=11 // pred_check_branch
          %330 = sbr.rel (%p328) target = $region24
        $region23: #{tpu_custom_call.1} parent=11 // pred_region
          _
        $region24: #{tpu_custom_call.1} parent=11 // pred_fallthru
          _
        // Predicated region
        $region25: #{tpu_custom_call.1} parent=11 // pred_check
          %p331 = pneg %p134
        $region26: #{tpu_custom_call.1} parent=11 // pred_check_branch
          %333 = sbr.rel (%p331) target = $region28
        $region27: #{tpu_custom_call.1} parent=11 // pred_region
          _
        $region28: #{tpu_custom_call.1} parent=11 // pred_fallthru
          _
        // Predicated region
        $region29: #{tpu_custom_call.1} parent=11 // pred_check
          %p334 = pneg %p155
        $region30: #{tpu_custom_call.1} parent=11 // pred_check_branch
          %336 = sbr.rel (%p334) target = $region32
        $region31: #{tpu_custom_call.1} parent=11 // pred_region
          _
        $region32: #{tpu_custom_call.1} parent=11 // pred_fallthru
          _
        // Predicated region
        $region33: #{tpu_custom_call.1} parent=11 // pred_check
          %p337 = pneg %p176
        $region34: #{tpu_custom_call.1} parent=11 // pred_check_branch
          %339 = sbr.rel (%p337) target = $region36
        $region35: #{tpu_custom_call.1} parent=11 // pred_region
          _
        $region36: #{tpu_custom_call.1} parent=11 // pred_fallthru
          _
        // Predicated region
        $region37: #{tpu_custom_call.1} parent=11 // pred_check
          %p340 = pneg %p197
        $region38: #{tpu_custom_call.1} parent=11 // pred_check_branch
          %342 = sbr.rel (%p340) target = $region40
        $region39: #{tpu_custom_call.1} parent=11 // pred_region
          _
        $region40: #{tpu_custom_call.1} parent=11 // pred_fallthru
          _
        // Predicated region
        $region41: #{tpu_custom_call.1} parent=11 // pred_check
          %p343 = pneg %p218
        $region42: #{tpu_custom_call.1} parent=11 // pred_check_branch
          %345 = sbr.rel (%p343) target = $region44
        $region43: #{tpu_custom_call.1} parent=11 // pred_region
          _
        $region44: #{tpu_custom_call.1} parent=11 // pred_fallthru
          _
        // Predicated region
        $region45: #{tpu_custom_call.1} parent=11 // pred_check
          %p346 = pneg %p239
        $region46: #{tpu_custom_call.1} parent=11 // pred_check_branch
          %348 = sbr.rel (%p346) target = $region48
        $region47: #{tpu_custom_call.1} parent=11 // pred_region
          _
        $region48: #{tpu_custom_call.1} parent=11 // pred_fallthru
          _
        // Predicated region
        $region49: #{tpu_custom_call.1} parent=11 // pred_check
          %p349 = pneg %p260
        $region50: #{tpu_custom_call.1} parent=11 // pred_check_branch
          %351 = sbr.rel (%p349) target = $region52
        $region51: #{tpu_custom_call.1} parent=11 // pred_region
          _
        $region52: #{tpu_custom_call.1} parent=11 // pred_fallthru
          _
        // Predicated region
        $region53: #{tpu_custom_call.1} parent=11 // pred_check
          %p352 = pneg %p281
        $region54: #{tpu_custom_call.1} parent=11 // pred_check_branch
          %354 = sbr.rel (%p352) target = $region56
        $region55: #{tpu_custom_call.1} parent=11 // pred_region
          _
        $region56: #{tpu_custom_call.1} parent=11 // pred_fallthru
          _
      $region12: #{tpu_custom_call.1} parent=5 // pred_fallthru
        _
      %p355 = scmp.lt.s32.totalorder %s24, 2
      // Predicated region
      $region57: #{tpu_custom_call.1} parent=5 // pred_check
        %p356 = pneg %p355
      $region58: #{tpu_custom_call.1} parent=5 // pred_check_branch
        %358 = sbr.rel (%p356) target = $region60
      $region59: #{tpu_custom_call.1} parent=5 // pred_region
        // Predicated region
        $region61: #{tpu_custom_call.1} parent=59 // pred_check
          %p359 = pneg %p44
        $region62: #{tpu_custom_call.1} parent=59 // pred_check_branch
          %361 = sbr.rel (%p359) target = $region64
        $region63: #{tpu_custom_call.1} parent=59 // pred_region
          %s362 = sand.u32 %s34, 1
          %s363 = scalar_lea.sflag [#allocation6], %s362
          %s364 = sand.u32 %s34, 1
          %s365 = smul.addr %s364, 8
          %s366 = scalar_lea.vmem [#allocation5], %s365
          %s368 = ssub.s32 128, 128
          %369 = vsyncadd %s363, %s368
          %s370 = smul.addr %s24, 2
          %s371 = smul.addr %s370, 64
          %s372 = scalar_lea.hbm %s0, %s371
          %s374 = sshll.u32 %s366, 4
          %s375 = int_to_ptr.vmem [resolvable:$true] %s374
          %377 = dma.hbm_to_vmem [thread:$0]  %s372, 128, %s375, %s363
        $region64: #{tpu_custom_call.1} parent=59 // pred_fallthru
          _
      $region60: #{tpu_custom_call.1} parent=5 // pred_fallthru
        _
      %p378 = scmp.le.s32.totalorder 1, %s24
      %p379 = scmp.lt.s32.totalorder %s24, 3
      %p380 = pnand %p378, %p379
      %p381 = pneg %p380
      // Predicated region
      $region65: #{tpu_custom_call.1} parent=5 // pred_check
        _
      $region66: #{tpu_custom_call.1} parent=5 // pred_check_branch
        %383 = sbr.rel (%p380) target = $region68
      $region67: #{tpu_custom_call.1} parent=5 // pred_region
        %s384 = ssub.s32 %s24, 1
        %s385 = sand.u32 %s37, 1
        %s386 = scalar_lea.sflag [#allocation6], %s385
        %s387 = sand.u32 %s37, 1
        %s388 = smul.addr %s387, 8
        %s389 = scalar_lea.vmem [#allocation5], %s388
        // Predicated region
        $region69: #{tpu_custom_call.1} parent=67 // pred_check
          %p390 = pneg %p50
        $region70: #{tpu_custom_call.1} parent=67 // pred_check_branch
          %392 = sbr.rel (%p390) target = $region72
        $region71: #{tpu_custom_call.1} parent=67 // pred_region
          %393 = dma.done %s386, 128
        $region72: #{tpu_custom_call.1} parent=67 // pred_fallthru
          _
        %s394 = sand.u32 %s37, 1
        %s395 = scalar_lea.sflag [#allocation6], %s394
        %s396 = sand.u32 %s37, 1
        %s397 = smul.addr %s396, 8
        %s398 = scalar_lea.vmem [#allocation5], %s397
        %p399 = pneg %p50
        %p400 = pneg %p47
        %p401 = pneg %p71
        %p402 = pneg %p68
        %p403 = pneg %p92
        %p404 = pneg %p89
        %p405 = pneg %p113
        %p406 = pneg %p110
        %p407 = pneg %p134
        %p408 = pneg %p131
        %p409 = pneg %p155
        %p410 = pneg %p152
        %p411 = pneg %p176
        %p412 = pneg %p173
        %p413 = pneg %p197
        %p414 = pneg %p194
        %p415 = pneg %p218
        %p416 = pneg %p215
        %p417 = pneg %p239
        %p418 = pneg %p236
        %p419 = pneg %p260
        %p420 = pneg %p257
        %p421 = pneg %p281
        %p422 = pneg %p278
        %p423 = pneg %p307
        %p424 = pneg %p304
        %s425 = sand.u32 %s294, 1
        %s426 = scalar_lea.sflag [#allocation7], %s425
        %s427 = sand.u32 %s294, 1
        %s428 = smul.addr %s427, 8
        %s429 = scalar_lea.vmem [#allocation8], %s428
        %v431 = vld [vmem:[%s1] sm:$0x3f]
        %432 = vst [vmem:[#allocation2] sm:$0xff] 0.0
        %433 = vst [vmem:[#allocation2 + $0x8] sm:$0xff] 0.0
        %434 = vst [vmem:[#allocation2 + $0x10] sm:$0xff] 0.0
        %435 = vst [vmem:[#allocation2 + $0x18] sm:$0xff] 0.0
        %436 = vst [vmem:[#allocation2 + $0x20] sm:$0xf] 0.0
        %437 = vst [vmem:[#allocation3] sm:$0xff] 0.0
        %vm438 = vcmask 1043744
        %vm439 = vcmask 1047556
        %vm440 = vmor %vm439, %vm438
        %441 = vst.msk [vmem:[#allocation3 + $0x1c] sm:$0xff] %vm440, 0.0
        %v442 = vld [vmem:[%s389] sm:$0xf]
        %444 = vrot.lane.b32.xlu0 %v442, 7
        %v445 = vpop.permute.xlu0 %444
        %vm447 = vcmask 183352
        %448 = vst.msk [vmem:[#allocation2 + $0xc] sm:$0xf] %vm447, %v445
        %v449 = vld [vmem:[%s389] sm:$0xf]
        %451 = vrot.lane.b32.xlu0 %v449, 17
        %v452 = vpop.permute.xlu0 %451
        %vm454 = vcmask 396552
        %455 = vst.msk [vmem:[#allocation2 + $0xc] sm:$0xf] %vm454, %v452
        %v456 = vld [vmem:[%s389] sm:$0xf]
        %458 = vrot.lane.b32.xlu0 %v456, 27
        %v459 = vpop.permute.xlu0 %458
        %vm461 = vcmask 609752
        %462 = vst.msk [vmem:[#allocation2 + $0xc] sm:$0xf] %vm461, %v459
        %v463 = vld [vmem:[%s389] sm:$0xf]
        %465 = vrot.lane.b32.xlu0 %v463, 37
        %v466 = vpop.permute.xlu0 %465
        %vm468 = vcmask 822952
        %469 = vst.msk [vmem:[#allocation2 + $0xc] sm:$0xf] %vm468, %v466
        %v470 = vld [vmem:[%s389] sm:$0xf]
        %472 = vrot.lane.b32.xlu0 %v470, 47
        %v473 = vpop.permute.xlu0 %472
        %vm475 = vcmask 1036152
        %476 = vst.msk [vmem:[#allocation2 + $0xc] sm:$0xf] %vm475, %v473
        %v477 = vld [vmem:[%s389] sm:$0xf]
        %479 = vrot.lane.b32.xlu0 %v477, 57
        %v480 = vpop.permute.xlu0 %479
        %vm482 = vcmask 199752
        %483 = vst.msk [vmem:[#allocation2 + $0x10] sm:$0xf] %vm482, %v480
        %v484 = vld [vmem:[%s389] sm:$0xf]
        %486 = vrot.lane.b32.xlu0 %v484, 67
        %v487 = vpop.permute.xlu0 %486
        %vm489 = vcmask 412952
        %490 = vst.msk [vmem:[#allocation2 + $0x10] sm:$0xf] %vm489, %v487
        %v491 = vld [vmem:[%s389] sm:$0xf]
        %493 = vrot.lane.b32.xlu0 %v491, 77
        %v494 = vpop.permute.xlu0 %493
        %vm496 = vcmask 626152
        %497 = vst.msk [vmem:[#allocation2 + $0x10] sm:$0xf] %vm496, %v494
        %v498 = vld [vmem:[%s389 + $0x4] sm:$0xf]
        %500 = vrot.lane.b32.xlu0 %v498, 87
        %v501 = vpop.permute.xlu0 %500
        %vm503 = vcmask 839352
        %504 = vst.msk [vmem:[#allocation2 + $0x10] sm:$0xf] %vm503, %v501
        %v505 = vld [vmem:[%s389 + $0x4] sm:$0xf]
        %507 = vrot.lane.b32.xlu0 %v505, 97
        %v508 = vpop.permute.xlu0 %507
        %v509 = vrot.slane %v508, 4
        %vm510 = vcmask 793600
        %v511 = vsel %vm510, %v509, %v508
        %vm513 = vcmask 1044360
        %vm514 = vcmask 7172
        %vm515 = vmor %vm514, %vm513
        %516 = vst.msk [vmem:[#allocation2 + $0x10] sm:$0xff] %vm515, %v511
        %v517 = vld [vmem:[%s389 + $0x4] sm:$0xf]
        %519 = vrot.lane.b32.xlu0 %v517, 107
        %v520 = vpop.permute.xlu0 %519
        %vm522 = vcmask 216152
        %523 = vst.msk [vmem:[#allocation2 + $0x14] sm:$0xf] %vm522, %v520
        %v524 = vld [vmem:[%s389 + $0x4] sm:$0xf]
        %526 = vrot.lane.b32.xlu0 %v524, 117
        %v527 = vpop.permute.xlu0 %526
        %vm529 = vcmask 429352
        %530 = vst.msk [vmem:[#allocation2 + $0x14] sm:$0xf] %vm529, %v527
        %v531 = vld [vmem:[%s389 + $0x4] sm:$0xf]
        %533 = vrot.lane.b32.xlu0 %v531, 127
        %v534 = vpop.permute.xlu0 %533
        %vm536 = vcmask 642552
        %537 = vst.msk [vmem:[#allocation2 + $0x14] sm:$0xf] %vm536, %v534
        %v538 = vld [vmem:[%s389 + $0x4] sm:$0xf]
        %540 = vrot.lane.b32.xlu0 %v538, 9
        %v541 = vpop.permute.xlu0 %540
        %vm543 = vcmask 855752
        %544 = vst.msk [vmem:[#allocation2 + $0x14] sm:$0xf] %vm543, %v541
        %v545 = vld [vmem:[%s389 + $0x4] sm:$0xf]
        %547 = vrot.lane.b32.xlu0 %v545, 19
        %v548 = vpop.permute.xlu0 %547
        %v549 = vrot.slane %v548, 4
        %vm550 = vcmask 154624
        %v551 = vsel %vm550, %v549, %v548
        %vm553 = vcmask 1044376
        %vm554 = vcmask 23556
        %vm555 = vmor %vm554, %vm553
        %556 = vst.msk [vmem:[#allocation2 + $0x14] sm:$0xff] %vm555, %v551
        %v557 = vld [vmem:[%s389 + $0x4] sm:$0xf]
        %559 = vrot.lane.b32.xlu0 %v557, 29
        %v560 = vpop.permute.xlu0 %559
        %vm562 = vcmask 232552
        %563 = vst.msk [vmem:[#allocation2 + $0x18] sm:$0xf] %vm562, %v560
        %v564 = vld [vmem:[#allocation2 + $0x4] sm:$0xff]
        %v565 = vld [vmem:[#allocation2 + $0xc] sm:$0xff]
        %v566 = vld [vmem:[#allocation2 + $0x14] sm:$0xff]
        %v567 = vld [vmem:[#allocation2 + $0x1c] sm:$0xf]
        %v572 = vcombine.high %v564, %v564
        %v573 = vcombine.high %v565, %v565
        %v574 = vcombine.high %v566, %v566
        %575 = vrot.lane.b32.xlu0 %v564, 27
        %v576 = vpop.permute.xlu0 %575
        %577 = vrot.lane.b32.xlu0 %v572, 27
        %v578 = vpop.permute.xlu0 %577
        %579 = vrot.lane.b32.xlu0 %v565, 27
        %v580 = vpop.permute.xlu0 %579
        %581 = vrot.lane.b32.xlu0 %v573, 27
        %v582 = vpop.permute.xlu0 %581
        %583 = vrot.lane.b32.xlu0 %v566, 27
        %v584 = vpop.permute.xlu0 %583
        %585 = vrot.lane.b32.xlu0 %v574, 27
        %v586 = vpop.permute.xlu0 %585
        %587 = vrot.lane.b32.xlu0 %v567, 27
        %v588 = vpop.permute.xlu0 %587
        %vm589 = vcmask 220160
        %v590 = vsel %vm589, %v576, %v578
        %v591 = vsel %vm589, %v578, %v580
        %v592 = vsel %vm589, %v580, %v582
        %v593 = vsel %vm589, %v582, %v584
        %v594 = vsel %vm589, %v584, %v586
        %v595 = vsel %vm589, %v586, %v588
        %602 = vst [vmem:[#allocation4] sm:$0xf] %v590
        %603 = vst [vmem:[#allocation4 + $0x8] sm:$0xf] %v591
        %604 = vst [vmem:[#allocation4 + $0x10] sm:$0xf] %v592
        %605 = vst [vmem:[#allocation4 + $0x18] sm:$0xf] %v593
        %606 = vst [vmem:[#allocation4 + $0x20] sm:$0xf] %v594
        %vm607 = vcmask 289792
        %608 = vst.msk [vmem:[#allocation4 + $0x28] sm:$0xf] %vm607, %v595
        %v609 = vld [vmem:[#allocation2 + $0x4] sm:$0xff]
        %v610 = vld [vmem:[#allocation2 + $0xc] sm:$0xff]
        %v611 = vld [vmem:[#allocation2 + $0x14] sm:$0xff]
        %v612 = vld [vmem:[#allocation2 + $0x1c] sm:$0xf]
        %v617 = vcombine.low %v609, %v609
        %v618 = vcombine.low %v610, %v610
        %v619 = vcombine.low %v611, %v611
        %v620 = vcombine.low %v612, %v612
        %621 = vrot.lane.b32.xlu0 %v617, 26
        %v622 = vpop.permute.xlu0 %621
        %623 = vrot.lane.b32.xlu0 %v609, 26
        %v624 = vpop.permute.xlu0 %623
        %625 = vrot.lane.b32.xlu0 %v618, 26
        %v626 = vpop.permute.xlu0 %625
        %627 = vrot.lane.b32.xlu0 %v610, 26
        %v628 = vpop.permute.xlu0 %627
        %629 = vrot.lane.b32.xlu0 %v619, 26
        %v630 = vpop.permute.xlu0 %629
        %631 = vrot.lane.b32.xlu0 %v611, 26
        %v632 = vpop.permute.xlu0 %631
        %633 = vrot.lane.b32.xlu0 %v620, 26
        %v634 = vpop.permute.xlu0 %633
        %vm635 = vcmask 211968
        %v636 = vsel %vm635, %v622, %v624
        %v637 = vsel %vm635, %v624, %v626
        %v638 = vsel %vm635, %v626, %v628
        %v639 = vsel %vm635, %v628, %v630
        %v640 = vsel %vm635, %v630, %v632
        %v641 = vsel %vm635, %v632, %v634
        %648 = vst [vmem:[#allocation4] sm:$0xf0] %v636
        %649 = vst [vmem:[#allocation4 + $0x8] sm:$0xf0] %v637
        %650 = vst [vmem:[#allocation4 + $0x10] sm:$0xf0] %v638
        %651 = vst [vmem:[#allocation4 + $0x18] sm:$0xf0] %v639
        %652 = vst [vmem:[#allocation4 + $0x20] sm:$0xf0] %v640
        %vm653 = vcmask 293892
        %654 = vst.msk [vmem:[#allocation4 + $0x28] sm:$0xf0] %vm653, %v641
        %v655 = vld [vmem:[#allocation2 + $0x4] sm:$0xff]
        %v656 = vld [vmem:[#allocation2 + $0xc] sm:$0xff]
        %v657 = vld [vmem:[#allocation2 + $0x14] sm:$0xff]
        %v658 = vld [vmem:[#allocation2 + $0x1c] sm:$0xf]
        %v663 = vcombine.high %v655, %v655
        %v664 = vcombine.high %v656, %v656
        %v665 = vcombine.high %v657, %v657
        %666 = vrot.lane.b32.xlu0 %v655, 25
        %v667 = vpop.permute.xlu0 %666
        %668 = vrot.lane.b32.xlu0 %v663, 25
        %v669 = vpop.permute.xlu0 %668
        %670 = vrot.lane.b32.xlu0 %v656, 25
        %v671 = vpop.permute.xlu0 %670
        %672 = vrot.lane.b32.xlu0 %v664, 25
        %v673 = vpop.permute.xlu0 %672
        %674 = vrot.lane.b32.xlu0 %v657, 25
        %v675 = vpop.permute.xlu0 %674
        %676 = vrot.lane.b32.xlu0 %v665, 25
        %v677 = vpop.permute.xlu0 %676
        %678 = vrot.lane.b32.xlu0 %v658, 25
        %v679 = vpop.permute.xlu0 %678
        %vm680 = vcmask 203776
        %v681 = vsel %vm680, %v667, %v669
        %v682 = vsel %vm680, %v669, %v671
        %v683 = vsel %vm680, %v671, %v673
        %v684 = vsel %vm680, %v673, %v675
        %v685 = vsel %vm680, %v675, %v677
        %v686 = vsel %vm680, %v677, %v679
        %693 = vst [vmem:[#allocation4 + $0x30] sm:$0xf] %v681
        %694 = vst [vmem:[#allocation4 + $0x38] sm:$0xf] %v682
        %695 = vst [vmem:[#allocation4 + $0x40] sm:$0xf] %v683
        %696 = vst [vmem:[#allocation4 + $0x48] sm:$0xf] %v684
        %697 = vst [vmem:[#allocation4 + $0x50] sm:$0xf] %v685
        %698 = vst.msk [vmem:[#allocation4 + $0x58] sm:$0xf] %vm607, %v686
        %v699 = vld [vmem:[#allocation2 + $0x4] sm:$0xff]
        %v700 = vld [vmem:[#allocation2 + $0xc] sm:$0xff]
        %v701 = vld [vmem:[#allocation2 + $0x14] sm:$0xff]
        %v702 = vld [vmem:[#allocation2 + $0x1c] sm:$0xf]
        %v707 = vcombine.low %v699, %v699
        %v708 = vcombine.low %v700, %v700
        %v709 = vcombine.low %v701, %v701
        %v710 = vcombine.low %v702, %v702
        %711 = vrot.lane.b32.xlu0 %v707, 1
        %v712 = vpop.permute.xlu0 %711
        %713 = vrot.lane.b32.xlu0 %v699, 1
        %v714 = vpop.permute.xlu0 %713
        %715 = vrot.lane.b32.xlu0 %v708, 1
        %v716 = vpop.permute.xlu0 %715
        %717 = vrot.lane.b32.xlu0 %v700, 1
        %v718 = vpop.permute.xlu0 %717
        %719 = vrot.lane.b32.xlu0 %v709, 1
        %v720 = vpop.permute.xlu0 %719
        %721 = vrot.lane.b32.xlu0 %v701, 1
        %v722 = vpop.permute.xlu0 %721
        %723 = vrot.lane.b32.xlu0 %v710, 1
        %v724 = vpop.permute.xlu0 %723
        %vm725 = vcmask 7168
        %v726 = vsel %vm725, %v712, %v714
        %v727 = vsel %vm725, %v714, %v716
        %v728 = vsel %vm725, %v716, %v718
        %v729 = vsel %vm725, %v718, %v720
        %v730 = vsel %vm725, %v720, %v722
        %v731 = vsel %vm725, %v722, %v724
        %738 = vst [vmem:[#allocation4 + $0x30] sm:$0xf0] %v726
        %739 = vst [vmem:[#allocation4 + $0x38] sm:$0xf0] %v727
        %740 = vst [vmem:[#allocation4 + $0x40] sm:$0xf0] %v728
        %741 = vst [vmem:[#allocation4 + $0x48] sm:$0xf0] %v729
        %742 = vst [vmem:[#allocation4 + $0x50] sm:$0xf0] %v730
        %743 = vst.msk [vmem:[#allocation4 + $0x58] sm:$0xf0] %vm653, %v731
        %v744 = vld [vmem:[#allocation2 + $0x8] sm:$0xff]
        %v745 = vld [vmem:[#allocation2 + $0x10] sm:$0xff]
        %v746 = vld [vmem:[#allocation2 + $0x18] sm:$0xff]
        %v750 = vcombine.high %v744, %v744
        %v751 = vcombine.high %v745, %v745
        %v752 = vcombine.high %v746, %v746
        %756 = vst [vmem:[#allocation4 + $0x60] sm:$0xf] %v744
        %757 = vst [vmem:[#allocation4 + $0x68] sm:$0xf] %v750
        %758 = vst [vmem:[#allocation4 + $0x70] sm:$0xf] %v745
        %759 = vst [vmem:[#allocation4 + $0x78] sm:$0xf] %v751
        %760 = vst [vmem:[#allocation4 + $0x80] sm:$0xf] %v746
        %761 = vst.msk [vmem:[#allocation4 + $0x88] sm:$0xf] %vm607, %v752
        %v762 = vld [vmem:[#allocation2 + $0x8] sm:$0xff]
        %v763 = vld [vmem:[#allocation2 + $0x10] sm:$0xff]
        %v764 = vld [vmem:[#allocation2 + $0x18] sm:$0xff]
        %v768 = vcombine.low %v762, %v762
        %v769 = vcombine.low %v763, %v763
        %v770 = vcombine.low %v764, %v764
        %771 = vrot.lane.b32.xlu0 %v768, 127
        %v772 = vpop.permute.xlu0 %771
        %773 = vrot.lane.b32.xlu0 %v762, 127
        %v774 = vpop.permute.xlu0 %773
        %775 = vrot.lane.b32.xlu0 %v769, 127
        %v776 = vpop.permute.xlu0 %775
        %777 = vrot.lane.b32.xlu0 %v763, 127
        %v778 = vpop.permute.xlu0 %777
        %779 = vrot.lane.b32.xlu0 %v770, 127
        %v780 = vpop.permute.xlu0 %779
        %781 = vrot.lane.b32.xlu0 %v764, 127
        %v782 = vpop.permute.xlu0 %781
        %vm783 = vcmask 1039360
        %v784 = vsel %vm783, %v772, %v774
        %v785 = vsel %vm783, %v774, %v776
        %v786 = vsel %vm783, %v776, %v778
        %v787 = vsel %vm783, %v778, %v780
        %v788 = vsel %vm783, %v780, %v782
        %795 = vst [vmem:[#allocation4 + $0x60] sm:$0xf0] %v784
        %796 = vst [vmem:[#allocation4 + $0x68] sm:$0xf0] %v785
        %797 = vst [vmem:[#allocation4 + $0x70] sm:$0xf0] %v786
        %798 = vst [vmem:[#allocation4 + $0x78] sm:$0xf0] %v787
        %799 = vst [vmem:[#allocation4 + $0x80] sm:$0xf0] %v788
        %800 = vst.msk [vmem:[#allocation4 + $0x88] sm:$0xf0] %vm653, %v782
        %v801 = vld [vmem:[#allocation2 + $0x8] sm:$0xff]
        %v802 = vld [vmem:[#allocation2 + $0x10] sm:$0xff]
        %v803 = vld [vmem:[#allocation2 + $0x18] sm:$0xff]
        %v807 = vcombine.high %v801, %v801
        %v808 = vcombine.high %v802, %v802
        %v809 = vcombine.high %v803, %v803
        %810 = vrot.lane.b32.xlu0 %v801, 103
        %v811 = vpop.permute.xlu0 %810
        %812 = vrot.lane.b32.xlu0 %v807, 103
        %v813 = vpop.permute.xlu0 %812
        %814 = vrot.lane.b32.xlu0 %v802, 103
        %v815 = vpop.permute.xlu0 %814
        %816 = vrot.lane.b32.xlu0 %v808, 103
        %v817 = vpop.permute.xlu0 %816
        %818 = vrot.lane.b32.xlu0 %v803, 103
        %v819 = vpop.permute.xlu0 %818
        %820 = vrot.lane.b32.xlu0 %v809, 103
        %v821 = vpop.permute.xlu0 %820
        %vm822 = vcmask 842752
        %v823 = vsel %vm822, %v811, %v813
        %v824 = vsel %vm822, %v813, %v815
        %v825 = vsel %vm822, %v815, %v817
        %v826 = vsel %vm822, %v817, %v819
        %v827 = vsel %vm822, %v819, %v821
        %834 = vst [vmem:[#allocation4 + $0x90] sm:$0xf] %v823
        %835 = vst [vmem:[#allocation4 + $0x98] sm:$0xf] %v824
        %836 = vst [vmem:[#allocation4 + $0xa0] sm:$0xf] %v825
        %837 = vst [vmem:[#allocation4 + $0xa8] sm:$0xf] %v826
        %838 = vst [vmem:[#allocation4 + $0xb0] sm:$0xf] %v827
        %839 = vst.msk [vmem:[#allocation4 + $0xb8] sm:$0xf] %vm607, %v821
        %v840 = vld [vmem:[#allocation2 + $0x8] sm:$0xff]
        %v841 = vld [vmem:[#allocation2 + $0x10] sm:$0xff]
        %v842 = vld [vmem:[#allocation2 + $0x18] sm:$0xff]
        %v846 = vcombine.low %v840, %v840
        %v847 = vcombine.low %v841, %v841
        %v848 = vcombine.low %v842, %v842
        %849 = vrot.lane.b32.xlu0 %v846, 102
        %v850 = vpop.permute.xlu0 %849
        %851 = vrot.lane.b32.xlu0 %v840, 102
        %v852 = vpop.permute.xlu0 %851
        %853 = vrot.lane.b32.xlu0 %v847, 102
        %v854 = vpop.permute.xlu0 %853
        %855 = vrot.lane.b32.xlu0 %v841, 102
        %v856 = vpop.permute.xlu0 %855
        %857 = vrot.lane.b32.xlu0 %v848, 102
        %v858 = vpop.permute.xlu0 %857
        %859 = vrot.lane.b32.xlu0 %v842, 102
        %v860 = vpop.permute.xlu0 %859
        %vm861 = vcmask 834560
        %v862 = vsel %vm861, %v850, %v852
        %v863 = vsel %vm861, %v852, %v854
        %v864 = vsel %vm861, %v854, %v856
        %v865 = vsel %vm861, %v856, %v858
        %v866 = vsel %vm861, %v858, %v860
        %873 = vst [vmem:[#allocation4 + $0x90] sm:$0xf0] %v862
        %874 = vst [vmem:[#allocation4 + $0x98] sm:$0xf0] %v863
        %875 = vst [vmem:[#allocation4 + $0xa0] sm:$0xf0] %v864
        %876 = vst [vmem:[#allocation4 + $0xa8] sm:$0xf0] %v865
        %877 = vst [vmem:[#allocation4 + $0xb0] sm:$0xf0] %v866
        %878 = vst.msk [vmem:[#allocation4 + $0xb8] sm:$0xf0] %vm653, %v860
        %v879 = vld [vmem:[#allocation2 + $0x8] sm:$0xff]
        %v880 = vld [vmem:[#allocation2 + $0x10] sm:$0xff]
        %v881 = vld [vmem:[#allocation2 + $0x18] sm:$0xff]
        %v885 = vcombine.high %v879, %v879
        %v886 = vcombine.high %v880, %v880
        %v887 = vcombine.high %v881, %v881
        %888 = vrot.lane.b32.xlu0 %v879, 101
        %v889 = vpop.permute.xlu0 %888
        %890 = vrot.lane.b32.xlu0 %v885, 101
        %v891 = vpop.permute.xlu0 %890
        %892 = vrot.lane.b32.xlu0 %v880, 101
        %v893 = vpop.permute.xlu0 %892
        %894 = vrot.lane.b32.xlu0 %v886, 101
        %v895 = vpop.permute.xlu0 %894
        %896 = vrot.lane.b32.xlu0 %v881, 101
        %v897 = vpop.permute.xlu0 %896
        %898 = vrot.lane.b32.xlu0 %v887, 101
        %v899 = vpop.permute.xlu0 %898
        %vm900 = vcmask 826368
        %v901 = vsel %vm900, %v889, %v891
        %v902 = vsel %vm900, %v891, %v893
        %v903 = vsel %vm900, %v893, %v895
        %v904 = vsel %vm900, %v895, %v897
        %v905 = vsel %vm900, %v897, %v899
        %912 = vst [vmem:[#allocation4 + $0xc0] sm:$0xf] %v901
        %913 = vst [vmem:[#allocation4 + $0xc8] sm:$0xf] %v902
        %914 = vst [vmem:[#allocation4 + $0xd0] sm:$0xf] %v903
        %915 = vst [vmem:[#allocation4 + $0xd8] sm:$0xf] %v904
        %916 = vst [vmem:[#allocation4 + $0xe0] sm:$0xf] %v905
        %917 = vst.msk [vmem:[#allocation4 + $0xe8] sm:$0xf] %vm607, %v899
        %v918 = vld [vmem:[%s2] sm:$0x3]
        %v919 = vld [vmem:[#allocation4] sm:$0xff]
        %v920 = vld [vmem:[#allocation4 + $0x8] sm:$0xff]
        %v921 = vld [vmem:[#allocation4 + $0x10] sm:$0xff]
        %v922 = vld [vmem:[#allocation4 + $0x18] sm:$0xff]
        %v923 = vld [vmem:[#allocation4 + $0x20] sm:$0xff]
        %v924 = vld [vmem:[#allocation4 + $0x28] sm:$0xff]
        %v925 = vld [vmem:[#allocation4 + $0x30] sm:$0xff]
        %v926 = vld [vmem:[#allocation4 + $0x38] sm:$0xff]
        %v927 = vld [vmem:[#allocation4 + $0x40] sm:$0xff]
        %v928 = vld [vmem:[#allocation4 + $0x48] sm:$0xff]
        %v929 = vld [vmem:[#allocation4 + $0x50] sm:$0xff]
        %v930 = vld [vmem:[#allocation4 + $0x58] sm:$0xff]
        %v931 = vld [vmem:[#allocation4 + $0x60] sm:$0xff]
        %v932 = vld [vmem:[#allocation4 + $0x68] sm:$0xff]
        %v933 = vld [vmem:[#allocation4 + $0x70] sm:$0xff]
        %v934 = vld [vmem:[#allocation4 + $0x78] sm:$0xff]
        %v935 = vld [vmem:[#allocation4 + $0x80] sm:$0xff]
        %v936 = vld [vmem:[#allocation4 + $0x88] sm:$0xff]
        %v937 = vld [vmem:[#allocation4 + $0x90] sm:$0xff]
        %v938 = vld [vmem:[#allocation4 + $0x98] sm:$0xff]
        %v939 = vld [vmem:[#allocation4 + $0xa0] sm:$0xff]
        %v940 = vld [vmem:[#allocation4 + $0xa8] sm:$0xff]
        %v941 = vld [vmem:[#allocation4 + $0xb0] sm:$0xff]
        %v942 = vld [vmem:[#allocation4 + $0xb8] sm:$0xff]
        %v943 = vld [vmem:[#allocation4 + $0xc0] sm:$0xf]
        %v944 = vld [vmem:[#allocation4 + $0xc8] sm:$0xf]
        %v945 = vld [vmem:[#allocation4 + $0xd0] sm:$0xf]
        %v946 = vld [vmem:[#allocation4 + $0xd8] sm:$0xf]
        %v947 = vld [vmem:[#allocation4 + $0xe0] sm:$0xf]
        %v948 = vld [vmem:[#allocation4 + $0xe8] sm:$0xf]
        %v949 = vpack.c.bf16 %v925, %v919
        %v950 = vpack.c.bf16 %v926, %v920
        %v951 = vpack.c.bf16 %v927, %v921
        %v952 = vpack.c.bf16 %v928, %v922
        %v953 = vpack.c.bf16 %v929, %v923
        %v954 = vpack.c.bf16 %v930, %v924
        %v955 = vpack.c.bf16 %v937, %v931
        %v956 = vpack.c.bf16 %v938, %v932
        %v957 = vpack.c.bf16 %v939, %v933
        %v958 = vpack.c.bf16 %v940, %v934
        %v959 = vpack.c.bf16 %v941, %v935
        %v960 = vpack.c.bf16 %v942, %v936
        %v961 = vpack.c.bf16 %v943, %v943
        %v962 = vpack.c.bf16 %v944, %v944
        %v963 = vpack.c.bf16 %v945, %v945
        %v964 = vpack.c.bf16 %v946, %v946
        %v965 = vpack.c.bf16 %v947, %v947
        %v966 = vpack.c.bf16 %v948, %v948
        %v967 = vld [vmem:[%s3] sm:$0xf]
        %969 = vset.pattern.permute.xlu0 0
        %970 = vperm.xlu0 %969, %v967
        %v971 = vpop.permute.xlu0 %970
        %vm973 = vcmask 293888
        %v975 = vsel %vm973, %v918, 0
        %vm977 = vcmask 1041408
        %v979 = vsel %vm977, %v961, 0
        %v982 = vsel %vm977, %v962, 0
        %v985 = vsel %vm977, %v963, 0
        %v988 = vsel %vm977, %v964, 0
        %v991 = vsel %vm977, %v965, 0
        %v994 = vsel %vm977, %v966, 0
        %996 = vmatprep.subr.bf16.mxu0 0
        %997 = vmatpush1.bf16.msra.mxu0 0
        %998 = vmatprep.subr.bf16.mxu0 0
        %999 = vmatpush1.bf16.msra.mxu0 0
        %1000 = vmatprep.subr.bf16.mxu0 0
        %1001 = vmatpush1.bf16.msra.mxu0 0
        %1002 = vmatprep.subr.bf16.mxu0 0
        %1003 = vmatpush1.bf16.msra.mxu0 0
        %1004 = vmatprep.subr.bf16.mxu0 0
        %1005 = vmatpush1.bf16.msra.mxu0 0
        %1006 = vmatprep.subr.bf16.mxu0 %v982
        %1007 = vmatpush1.bf16.msra.mxu0 %v979
        %1008 = vmatprep.subr.bf16.mxu0 %v956
        %1009 = vmatpush1.bf16.msra.mxu0 %v955
        %1010 = vmatprep.subr.bf16.mxu0 %v950
        %1011 = vmatpush1.bf16.msra.mxu0 %v949
        %1012 = vmatprep.subr.bf16.mxu0 0
        %1013 = vmatpush2.bf16.msra.mxu0 0
        %1014 = vmatprep.subr.bf16.mxu0 0
        %1015 = vmatpush2.bf16.msra.mxu0 0
        %1016 = vmatprep.subr.bf16.mxu0 0
        %1017 = vmatpush2.bf16.msra.mxu0 0
        %1018 = vmatprep.subr.bf16.mxu0 0
        %1019 = vmatpush2.bf16.msra.mxu0 0
        %1020 = vmatprep.subr.bf16.mxu0 0
        %1021 = vmatpush2.bf16.msra.mxu0 0
        %1022 = vmatprep.subr.bf16.mxu0 0
        %1023 = vmatpush2.bf16.msra.mxu0 0
        %1024 = vmatprep.subr.bf16.mxu0 0
        %1025 = vmatpush2.bf16.msra.mxu0 0
        %1026 = vmatprep.subr.bf16.mxu0 0
        %1027 = vmatpush2.bf16.msra.mxu0 0
        %1028 = vmatprep.mubr.bf16.mxu0 0
        %1029 = vmatmul.mubr.bf16.gmra.mxu0 %v975
        %v1030 = vpop.f32.mrf.mxu0
        %v1031 = vadd.f32 %v971, %v1030
        %v1032 = vpop.f32.mrf.mxu0
        %v1033 = vadd.f32 %v971, %v1032
        %v1034 = vpop.f32.mrf.mxu0
        %v1035 = vpop.f32.mrf.mxu0
        %1036 = vdwg.mxu0
        %1037 = vmatprep.subr.bf16.mxu0 0
        %1038 = vmatpush1.bf16.msra.mxu0 0
        %1039 = vmatprep.subr.bf16.mxu0 0
        %1040 = vmatpush1.bf16.msra.mxu0 0
        %1041 = vmatprep.subr.bf16.mxu0 0
        %1042 = vmatpush1.bf16.msra.mxu0 0
        %1043 = vmatprep.subr.bf16.mxu0 0
        %1044 = vmatpush1.bf16.msra.mxu0 0
        %1045 = vmatprep.subr.bf16.mxu0 0
        %1046 = vmatpush1.bf16.msra.mxu0 0
        %1047 = vmatprep.subr.bf16.mxu0 %v988
        %1048 = vmatpush1.bf16.msra.mxu0 %v985
        %1049 = vmatprep.subr.bf16.mxu0 %v958
        %1050 = vmatpush1.bf16.msra.mxu0 %v957
        %1051 = vmatprep.subr.bf16.mxu0 %v952
        %1052 = vmatpush1.bf16.msra.mxu0 %v951
        %1053 = vmatprep.subr.bf16.mxu0 0
        %1054 = vmatpush2.bf16.msra.mxu0 0
        %1055 = vmatprep.subr.bf16.mxu0 0
        %1056 = vmatpush2.bf16.msra.mxu0 0
        %1057 = vmatprep.subr.bf16.mxu0 0
        %1058 = vmatpush2.bf16.msra.mxu0 0
        %1059 = vmatprep.subr.bf16.mxu0 0
        %1060 = vmatpush2.bf16.msra.mxu0 0
        %1061 = vmatprep.subr.bf16.mxu0 0
        %1062 = vmatpush2.bf16.msra.mxu0 0
        %1063 = vmatprep.subr.bf16.mxu0 0
        %1064 = vmatpush2.bf16.msra.mxu0 0
        %1065 = vmatprep.subr.bf16.mxu0 0
        %1066 = vmatpush2.bf16.msra.mxu0 0
        %1067 = vmatprep.subr.bf16.mxu0 0
        %1068 = vmatpush2.bf16.msra.mxu0 0
        %1069 = vmatprep.mubr.bf16.mxu0 0
        %1070 = vmatmul.mubr.bf16.gmra.mxu0 %v975
        %v1071 = vpop.f32.mrf.mxu0
        %v1072 = vadd.f32 %v971, %v1071
        %v1073 = vpop.f32.mrf.mxu0
        %v1074 = vadd.f32 %v971, %v1073
        %v1075 = vpop.f32.mrf.mxu0
        %v1076 = vpop.f32.mrf.mxu0
        %1077 = vdwg.mxu0
        %1078 = vmatprep.subr.bf16.mxu0 0
        %1079 = vmatpush1.bf16.msra.mxu0 0
        %1080 = vmatprep.subr.bf16.mxu0 0
        %1081 = vmatpush1.bf16.msra.mxu0 0
        %1082 = vmatprep.subr.bf16.mxu0 0
        %1083 = vmatpush1.bf16.msra.mxu0 0
        %1084 = vmatprep.subr.bf16.mxu0 0
        %1085 = vmatpush1.bf16.msra.mxu0 0
        %1086 = vmatprep.subr.bf16.mxu0 0
        %1087 = vmatpush1.bf16.msra.mxu0 0
        %1088 = vmatprep.subr.bf16.mxu0 %v994
        %1089 = vmatpush1.bf16.msra.mxu0 %v991
        %1090 = vmatprep.subr.bf16.mxu0 %v960
        %1091 = vmatpush1.bf16.msra.mxu0 %v959
        %1092 = vmatprep.subr.bf16.mxu0 %v954
        %1093 = vmatpush1.bf16.msra.mxu0 %v953
        %1094 = vmatprep.subr.bf16.mxu0 0
        %1095 = vmatpush2.bf16.msra.mxu0 0
        %1096 = vmatprep.subr.bf16.mxu0 0
        %1097 = vmatpush2.bf16.msra.mxu0 0
        %1098 = vmatprep.subr.bf16.mxu0 0
        %1099 = vmatpush2.bf16.msra.mxu0 0
        %1100 = vmatprep.subr.bf16.mxu0 0
        %1101 = vmatpush2.bf16.msra.mxu0 0
        %1102 = vmatprep.subr.bf16.mxu0 0
        %1103 = vmatpush2.bf16.msra.mxu0 0
        %1104 = vmatprep.subr.bf16.mxu0 0
        %1105 = vmatpush2.bf16.msra.mxu0 0
        %1106 = vmatprep.subr.bf16.mxu0 0
        %1107 = vmatpush2.bf16.msra.mxu0 0
        %1108 = vmatprep.subr.bf16.mxu0 0
        %1109 = vmatpush2.bf16.msra.mxu0 0
        %1110 = vmatprep.mubr.bf16.mxu0 0
        %1111 = vmatmul.mubr.bf16.gmra.mxu0 %v975
        %v1112 = vpop.f32.mrf.mxu0
        %v1113 = vadd.f32 %v971, %v1112
        %v1114 = vpop.f32.mrf.mxu0
        %v1115 = vadd.f32 %v971, %v1114
        %v1116 = vpop.f32.mrf.mxu0
        %v1117 = vpop.f32.mrf.mxu0
        %1118 = vdwg.mxu0
        %v1119 = vsub.f32 0.0, %v1031
        %v1120 = vsub.f32 0.0, %v1033
        %v1121 = vsub.f32 0.0, %v1072
        %v1122 = vsub.f32 0.0, %v1074
        %v1123 = vsub.f32 0.0, %v1113
        %v1124 = vsub.f32 0.0, %v1115
        %v1125 = vmul.f32 %v1119, 1.442695
        %v1126 = vpow.pop %v1125
        %v1127 = vmul.f32 %v1120, 1.442695
        %v1128 = vpow.pop %v1127
        %v1129 = vmul.f32 %v1121, 1.442695
        %v1130 = vpow.pop %v1129
        %v1131 = vmul.f32 %v1122, 1.442695
        %v1132 = vpow.pop %v1131
        %v1133 = vmul.f32 %v1123, 1.442695
        %v1134 = vpow.pop %v1133
        %v1135 = vmul.f32 %v1124, 1.442695
        %v1136 = vpow.pop %v1135
        %v1137 = vadd.f32 %v1126, 1.0
        %v1138 = vadd.f32 %v1128, 1.0
        %v1139 = vadd.f32 %v1130, 1.0
        %v1140 = vadd.f32 %v1132, 1.0
        %v1141 = vadd.f32 %v1134, 1.0
        %v1142 = vadd.f32 %v1136, 1.0
        %v1143 = vrcp.pop %v1137
        %v1144 = vrcp.pop %v1138
        %v1145 = vrcp.pop %v1139
        %v1146 = vrcp.pop %v1140
        %v1147 = vrcp.pop %v1141
        %v1148 = vrcp.pop %v1142
        %v1149 = vmul.f32 %v1031, %v1143
        %v1150 = vmul.f32 %v1033, %v1144
        %v1151 = vmul.f32 %v1072, %v1145
        %v1152 = vmul.f32 %v1074, %v1146
        %v1153 = vmul.f32 %v1113, %v1147
        %v1154 = vmul.f32 %v1115, %v1148
        %v1156 = vlaneseq
        %v1157 = vshrl.u32 %v1156, 7
        %v1158 = vsub.s32 0, %v1157
        %v1159 = vrot.slane %v431, %v1158
        %v1160 = vlaneseq
        %v1161 = vshrl.u32 %v1160, 7
        %v1162 = vsub.s32 1, %v1161
        %v1163 = vrot.slane %v431, %v1162
        %v1164 = vlaneseq
        %v1165 = vshrl.u32 %v1164, 7
        %v1166 = vsub.s32 2, %v1165
        %v1167 = vrot.slane %v431, %v1166
        %v1168 = vlaneseq
        %v1169 = vshrl.u32 %v1168, 7
        %v1170 = vsub.s32 3, %v1169
        %v1171 = vrot.slane %v431, %v1170
        %v1172 = vlaneseq
        %v1173 = vshrl.u32 %v1172, 7
        %v1174 = vsub.s32 4, %v1173
        %v1175 = vrot.slane %v431, %v1174
        %v1176 = vlaneseq
        %v1177 = vshrl.u32 %v1176, 7
        %v1178 = vsub.s32 5, %v1177
        %v1179 = vrot.slane %v431, %v1178
        %v1186 = vmul.f32 %v1149, %v1159
        %v1187 = vmul.f32 %v1150, %v1163
        %v1188 = vmul.f32 %v1151, %v1167
        %v1189 = vmul.f32 %v1152, %v1171
        %v1190 = vmul.f32 %v1153, %v1175
        %v1191 = vmul.f32 %v1154, %v1179
        %v1198 = vcombine.low %v1186, %v1187
        %v1199 = vcombine.low %v1188, %v1189
        %v1200 = vcombine.low %v1190, %v1191
        %1204 = vst [vmem:[#allocation3 + $0x8] sm:$0xff] %v1198
        %1205 = vst [vmem:[#allocation3 + $0x10] sm:$0xff] %v1199
        %vm1206 = vcmask 1043456
        %vm1207 = vmor %vm653, %vm1206
        %1208 = vst.msk [vmem:[#allocation3 + $0x18] sm:$0xff] %vm1207, %v1200
        %v1209 = vld [vmem:[#allocation3 + $0x4] sm:$0xff]
        %v1210 = vld [vmem:[#allocation3 + $0xc] sm:$0xff]
        %v1211 = vld [vmem:[#allocation3 + $0x14] sm:$0xff]
        %v1212 = vld [vmem:[#allocation3 + $0x1c] sm:$0xf]
        %1217 = vrot.lane.b32.xlu0 %v1209, 127
        %v1218 = vpop.permute.xlu0 %1217
        %1219 = vrot.lane.b32.xlu0 %v1210, 127
        %v1220 = vpop.permute.xlu0 %1219
        %1221 = vrot.lane.b32.xlu0 %v1211, 127
        %v1222 = vpop.permute.xlu0 %1221
        %1223 = vrot.lane.b32.xlu0 %v1212, 127
        %v1224 = vpop.permute.xlu0 %1223
        %v1225 = vrot.slane %v1218, 4
        %v1226 = vrot.slane %v1220, 4
        %v1227 = vrot.slane %v1222, 4
        %v1228 = vrot.slane %v1224, 4
        %v1229 = vsel %vm1206, %v1225, %v1226
        %v1230 = vsel %vm783, %v1218, %v1229
        %v1231 = vsel %vm1206, %v1226, %v1227
        %v1232 = vsel %vm783, %v1220, %v1231
        %v1233 = vsel %vm1206, %v1227, %v1228
        %v1234 = vsel %vm783, %v1222, %v1233
        %v1239 = vadd.f32 %v1209, %v1230
        %v1240 = vadd.f32 %v1210, %v1232
        %v1241 = vadd.f32 %v1211, %v1234
        %v1242 = vadd.f32 %v1212, %v1224
        %1243 = vrot.lane.b32.xlu0 %v1209, 126
        %v1244 = vpop.permute.xlu0 %1243
        %1245 = vrot.lane.b32.xlu0 %v1210, 126
        %v1246 = vpop.permute.xlu0 %1245
        %1247 = vrot.lane.b32.xlu0 %v1211, 126
        %v1248 = vpop.permute.xlu0 %1247
        %1249 = vrot.lane.b32.xlu0 %v1212, 126
        %v1250 = vpop.permute.xlu0 %1249
        %v1251 = vrot.slane %v1244, 4
        %v1252 = vrot.slane %v1246, 4
        %v1253 = vrot.slane %v1248, 4
        %v1254 = vrot.slane %v1250, 4
        %v1255 = vsel %vm1206, %v1251, %v1252
        %vm1256 = vcmask 1031168
        %v1257 = vsel %vm1256, %v1244, %v1255
        %v1258 = vsel %vm1206, %v1252, %v1253
        %v1259 = vsel %vm1256, %v1246, %v1258
        %v1260 = vsel %vm1206, %v1253, %v1254
        %v1261 = vsel %vm1256, %v1248, %v1260
        %v1266 = vadd.f32 %v1239, %v1257
        %v1267 = vadd.f32 %v1240, %v1259
        %v1268 = vadd.f32 %v1241, %v1261
        %v1269 = vadd.f32 %v1242, %v1250
        %v1270 = vld [vmem:[#allocation3 + $0x8] sm:$0xff]
        %v1271 = vld [vmem:[#allocation3 + $0x10] sm:$0xff]
        %v1272 = vld [vmem:[#allocation3 + $0x18] sm:$0xff]
        %1276 = vrot.lane.b32.xlu0 %v1270, 125
        %v1277 = vpop.permute.xlu0 %1276
        %1278 = vrot.lane.b32.xlu0 %v1271, 125
        %v1279 = vpop.permute.xlu0 %1278
        %1280 = vrot.lane.b32.xlu0 %v1272, 125
        %v1281 = vpop.permute.xlu0 %1280
        %v1282 = vrot.slane %v1277, 4
        %v1283 = vrot.slane %v1279, 4
        %v1284 = vrot.slane %v1281, 4
        %vm1285 = vcmask 1022976
        %v1286 = vsel %vm1285, %v1282, %v1277
        %v1287 = vsel %vm1206, %v1282, %v1283
        %v1288 = vsel %vm1285, %v1287, %v1279
        %v1289 = vsel %vm1206, %v1283, %v1284
        %v1290 = vsel %vm1285, %v1289, %v1281
        %v1295 = vadd.f32 %v1266, %v1286
        %v1296 = vadd.f32 %v1267, %v1288
        %v1297 = vadd.f32 %v1268, %v1290
        %v1298 = vadd.f32 %v1269, %v1284
        %1299 = vrot.lane.b32.xlu0 %v1270, 124
        %v1300 = vpop.permute.xlu0 %1299
        %1301 = vrot.lane.b32.xlu0 %v1271, 124
        %v1302 = vpop.permute.xlu0 %1301
        %1303 = vrot.lane.b32.xlu0 %v1272, 124
        %v1304 = vpop.permute.xlu0 %1303
        %v1305 = vrot.slane %v1300, 4
        %v1306 = vrot.slane %v1302, 4
        %v1307 = vrot.slane %v1304, 4
        %vm1308 = vcmask 1014784
        %v1309 = vsel %vm1308, %v1305, %v1300
        %v1310 = vsel %vm1206, %v1305, %v1306
        %v1311 = vsel %vm1308, %v1310, %v1302
        %v1312 = vsel %vm1206, %v1306, %v1307
        %v1313 = vsel %vm1308, %v1312, %v1304
        %v1318 = vadd.f32 %v1295, %v1309
        %v1319 = vadd.f32 %v1296, %v1311
        %v1320 = vadd.f32 %v1297, %v1313
        %v1321 = vadd.f32 %v1298, %v1307
        %1322 = vrot.lane.b32.xlu0 %v1270, 123
        %v1323 = vpop.permute.xlu0 %1322
        %1324 = vrot.lane.b32.xlu0 %v1271, 123
        %v1325 = vpop.permute.xlu0 %1324
        %1326 = vrot.lane.b32.xlu0 %v1272, 123
        %v1327 = vpop.permute.xlu0 %1326
        %v1328 = vrot.slane %v1323, 4
        %v1329 = vrot.slane %v1325, 4
        %v1330 = vrot.slane %v1327, 4
        %vm1331 = vcmask 1006592
        %v1332 = vsel %vm1331, %v1328, %v1323
        %v1333 = vsel %vm1206, %v1328, %v1329
        %v1334 = vsel %vm1331, %v1333, %v1325
        %v1335 = vsel %vm1206, %v1329, %v1330
        %v1336 = vsel %vm1331, %v1335, %v1327
        %v1341 = vadd.f32 %v1318, %v1332
        %v1342 = vadd.f32 %v1319, %v1334
        %v1343 = vadd.f32 %v1320, %v1336
        %v1344 = vadd.f32 %v1321, %v1330
        %1345 = vrot.lane.b32.xlu0 %v1270, 122
        %v1346 = vpop.permute.xlu0 %1345
        %1347 = vrot.lane.b32.xlu0 %v1271, 122
        %v1348 = vpop.permute.xlu0 %1347
        %1349 = vrot.lane.b32.xlu0 %v1272, 122
        %v1350 = vpop.permute.xlu0 %1349
        %v1351 = vrot.slane %v1346, 4
        %v1352 = vrot.slane %v1348, 4
        %v1353 = vrot.slane %v1350, 4
        %vm1354 = vcmask 998400
        %v1355 = vsel %vm1354, %v1351, %v1346
        %v1356 = vsel %vm1206, %v1351, %v1352
        %v1357 = vsel %vm1354, %v1356, %v1348
        %v1358 = vsel %vm1206, %v1352, %v1353
        %v1359 = vsel %vm1354, %v1358, %v1350
        %v1364 = vadd.f32 %v1341, %v1355
        %v1365 = vadd.f32 %v1342, %v1357
        %v1366 = vadd.f32 %v1343, %v1359
        %v1367 = vadd.f32 %v1344, %v1353
        %1372 = vrot.lane.b32.xlu0 %v1364, 3
        %v1373 = vpop.permute.xlu0 %1372
        %1374 = vrot.lane.b32.xlu0 %v1365, 3
        %v1375 = vpop.permute.xlu0 %1374
        %1376 = vrot.lane.b32.xlu0 %v1366, 3
        %v1377 = vpop.permute.xlu0 %1376
        %1378 = vrot.lane.b32.xlu0 %v1367, 3
        %v1379 = vpop.permute.xlu0 %1378
        %v1380 = vrot.slane %v1373, 4
        %v1381 = vrot.slane %v1375, 4
        %v1382 = vrot.slane %v1377, 4
        %v1383 = vrot.slane %v1379, 4
        %v1384 = vsel %vm1206, %v1380, %v1381
        %vm1385 = vcmask 23552
        %v1386 = vsel %vm1385, %v1373, %v1384
        %v1387 = vsel %vm1206, %v1381, %v1382
        %v1388 = vsel %vm1385, %v1375, %v1387
        %v1389 = vsel %vm1206, %v1382, %v1383
        %v1390 = vsel %vm1385, %v1377, %v1389
        %1394 = vst [vmem:[#allocation2 + $0x8] sm:$0xff] %v1386
        %1395 = vst [vmem:[#allocation2 + $0x10] sm:$0xff] %v1388
        %1396 = vst.msk [vmem:[#allocation2 + $0x18] sm:$0xff] %vm1207, %v1390
        %v1397 = vld [vmem:[#allocation2 + $0x4] sm:$0xff]
        %v1398 = vld [vmem:[#allocation2 + $0xc] sm:$0xff]
        %v1399 = vld [vmem:[#allocation2 + $0x14] sm:$0xff]
        %1403 = vrot.lane.b32.xlu0 %v1397, 102
        %v1404 = vpop.permute.xlu0 %1403
        %1405 = vrot.lane.b32.xlu0 %v1398, 102
        %v1406 = vpop.permute.xlu0 %1405
        %1407 = vrot.lane.b32.xlu0 %v1399, 102
        %v1408 = vpop.permute.xlu0 %1407
        %v1409 = vrot.slane %v1404, 4
        %v1410 = vrot.slane %v1406, 4
        %v1411 = vrot.slane %v1408, 4
        %v1412 = vsel %vm1206, %v1409, %v1410
        %v1413 = vsel %vm861, %v1404, %v1412
        %v1414 = vsel %vm1206, %v1410, %v1411
        %v1415 = vsel %vm861, %v1406, %v1414
        %v1416 = vsel %vm861, %v1408, %v1411
        %v1420 = vadd.f32 %v1397, %v1413
        %v1421 = vadd.f32 %v1398, %v1415
        %v1422 = vadd.f32 %v1399, %v1416
        %v1423 = vld [vmem:[#allocation2 + $0x1c] sm:$0xf]
        %1425 = vrot.lane.b32.xlu0 %v1397, 76
        %v1426 = vpop.permute.xlu0 %1425
        %1427 = vrot.lane.b32.xlu0 %v1398, 76
        %v1428 = vpop.permute.xlu0 %1427
        %1429 = vrot.lane.b32.xlu0 %v1399, 76
        %v1430 = vpop.permute.xlu0 %1429
        %1431 = vrot.lane.b32.xlu0 %v1423, 76
        %v1432 = vpop.permute.xlu0 %1431
        %v1433 = vrot.slane %v1426, 4
        %v1434 = vrot.slane %v1428, 4
        %v1435 = vrot.slane %v1430, 4
        %v1436 = vrot.slane %v1432, 4
        %v1437 = vsel %vm1206, %v1433, %v1434
        %vm1438 = vcmask 621568
        %v1439 = vsel %vm1438, %v1426, %v1437
        %v1440 = vsel %vm1206, %v1434, %v1435
        %v1441 = vsel %vm1438, %v1428, %v1440
        %v1442 = vsel %vm1206, %v1435, %v1436
        %v1443 = vsel %vm1438, %v1430, %v1442
        %v1447 = vadd.f32 %v1420, %v1439
        %v1448 = vadd.f32 %v1421, %v1441
        %v1449 = vadd.f32 %v1422, %v1443
        %v1450 = vld [vmem:[#allocation2 + $0x8] sm:$0xff]
        %v1451 = vld [vmem:[#allocation2 + $0x10] sm:$0xff]
        %v1452 = vld [vmem:[#allocation2 + $0x18] sm:$0xff]
        %1456 = vrot.lane.b32.xlu0 %v1450, 50
        %v1457 = vpop.permute.xlu0 %1456
        %1458 = vrot.lane.b32.xlu0 %v1451, 50
        %v1459 = vpop.permute.xlu0 %1458
        %1460 = vrot.lane.b32.xlu0 %v1452, 50
        %v1461 = vpop.permute.xlu0 %1460
        %v1462 = vrot.slane %v1457, 4
        %v1463 = vrot.slane %v1459, 4
        %v1464 = vrot.slane %v1461, 4
        %vm1465 = vcmask 408576
        %v1466 = vsel %vm1465, %v1462, %v1457
        %v1467 = vsel %vm1206, %v1462, %v1463
        %v1468 = vsel %vm1465, %v1467, %v1459
        %v1469 = vsel %vm1206, %v1463, %v1464
        %v1470 = vsel %vm1465, %v1469, %v1461
        %v1474 = vadd.f32 %v1447, %v1466
        %v1475 = vadd.f32 %v1448, %v1468
        %v1476 = vadd.f32 %v1449, %v1470
        %1477 = vrot.lane.b32.xlu0 %v1450, 24
        %v1478 = vpop.permute.xlu0 %1477
        %1479 = vrot.lane.b32.xlu0 %v1451, 24
        %v1480 = vpop.permute.xlu0 %1479
        %1481 = vrot.lane.b32.xlu0 %v1452, 24
        %v1482 = vpop.permute.xlu0 %1481
        %v1483 = vrot.slane %v1478, 4
        %v1484 = vrot.slane %v1480, 4
        %v1485 = vrot.slane %v1482, 4
        %vm1486 = vcmask 195584
        %v1487 = vsel %vm1486, %v1483, %v1478
        %v1488 = vsel %vm1206, %v1483, %v1484
        %v1489 = vsel %vm1486, %v1488, %v1480
        %v1490 = vsel %vm1206, %v1484, %v1485
        %v1491 = vsel %vm1486, %v1490, %v1482
        %v1495 = vadd.f32 %v1474, %v1487
        %v1496 = vadd.f32 %v1475, %v1489
        %v1497 = vadd.f32 %v1476, %v1491
        %1498 = vrot.lane.b32.xlu0 %v1450, 126
        %v1499 = vpop.permute.xlu0 %1498
        %1500 = vrot.lane.b32.xlu0 %v1451, 126
        %v1501 = vpop.permute.xlu0 %1500
        %1502 = vrot.lane.b32.xlu0 %v1452, 126
        %v1503 = vpop.permute.xlu0 %1502
        %v1504 = vrot.slane %v1499, 4
        %v1505 = vrot.slane %v1501, 4
        %v1506 = vrot.slane %v1503, 4
        %v1507 = vsel %vm1206, %v1504, %v1505
        %v1508 = vsel %vm1256, %v1499, %v1507
        %v1509 = vsel %vm1206, %v1505, %v1506
        %v1510 = vsel %vm1256, %v1501, %v1509
        %v1511 = vsel %vm1256, %v1503, %v1506
        %v1515 = vadd.f32 %v1495, %v1508
        %v1516 = vadd.f32 %v1496, %v1510
        %v1517 = vadd.f32 %v1497, %v1511
        %1518 = vrot.lane.b32.xlu0 %v1450, 100
        %v1519 = vpop.permute.xlu0 %1518
        %1520 = vrot.lane.b32.xlu0 %v1451, 100
        %v1521 = vpop.permute.xlu0 %1520
        %1522 = vrot.lane.b32.xlu0 %v1452, 100
        %v1523 = vpop.permute.xlu0 %1522
        %v1524 = vrot.slane %v1519, 4
        %v1525 = vrot.slane %v1521, 4
        %v1526 = vrot.slane %v1523, 4
        %v1527 = vsel %vm1206, %v1524, %v1525
        %vm1528 = vcmask 818176
        %v1529 = vsel %vm1528, %v1519, %v1527
        %v1530 = vsel %vm1206, %v1525, %v1526
        %v1531 = vsel %vm1528, %v1521, %v1530
        %v1532 = vsel %vm1528, %v1523, %v1526
        %v1536 = vadd.f32 %v1515, %v1529
        %v1537 = vadd.f32 %v1516, %v1531
        %v1538 = vadd.f32 %v1517, %v1532
        %v1539 = vmul.f32 %v1536, 0.020408163
        %v1540 = vmul.f32 %v1537, 0.020408163
        %v1541 = vmul.f32 %v1538, 0.020408163
        %v1542 = vld [vmem:[%s4] sm:$0x3]
        %v1546 = vcombine.high %v1539, %v1539
        %v1547 = vcombine.high %v1540, %v1540
        %v1548 = vcombine.high %v1541, %v1541
        %v1552 = vpack.c.bf16 %v1539, %v1539
        %v1553 = vpack.c.bf16 %v1546, %v1546
        %v1554 = vpack.c.bf16 %v1540, %v1540
        %v1555 = vpack.c.bf16 %v1547, %v1547
        %v1556 = vpack.c.bf16 %v1541, %v1541
        %v1557 = vpack.c.bf16 %v1548, %v1548
        %v1558 = vld [vmem:[%s5] sm:$0xf]
        %1560 = vset.pattern.permute.xlu0 0
        %1561 = vperm.xlu0 %1560, %v1558
        %v1562 = vpop.permute.xlu0 %1561
        %1570 = vrot.lane.b32.xlu0 %v1552, 78
        %v1571 = vpop.permute.xlu0 %1570
        %1572 = vrot.lane.b32.xlu0 %v1553, 78
        %v1573 = vpop.permute.xlu0 %1572
        %1574 = vrot.lane.b32.xlu0 %v1554, 78
        %v1575 = vpop.permute.xlu0 %1574
        %1576 = vrot.lane.b32.xlu0 %v1555, 78
        %v1577 = vpop.permute.xlu0 %1576
        %1578 = vrot.lane.b32.xlu0 %v1556, 78
        %v1579 = vpop.permute.xlu0 %1578
        %1580 = vrot.lane.b32.xlu0 %v1557, 78
        %v1581 = vpop.permute.xlu0 %1580
        %vm1582 = vcmask 637952
        %v1583 = vsel %vm1582, %v1571, %v1573
        %v1584 = vsel %vm1582, %v1573, %v1575
        %v1585 = vsel %vm1582, %v1575, %v1577
        %v1586 = vsel %vm1582, %v1577, %v1579
        %v1587 = vsel %vm1582, %v1579, %v1581
        %vm1588 = vcmask 31744
        %v1590 = vsel %vm1588, %v1542, 0
        %v1593 = vsel %vm977, %v1583, 0
        %v1596 = vsel %vm977, %v1584, 0
        %v1599 = vsel %vm977, %v1585, 0
        %v1602 = vsel %vm977, %v1586, 0
        %v1605 = vsel %vm977, %v1587, 0
        %v1608 = vsel %vm977, %v1581, 0
        %1610 = vmatprep.subr.bf16.mxu0 0
        %1611 = vmatpush1.bf16.msra.mxu0 0
        %1612 = vmatprep.subr.bf16.mxu0 0
        %1613 = vmatpush1.bf16.msra.mxu0 0
        %1614 = vmatprep.subr.bf16.mxu0 0
        %1615 = vmatpush1.bf16.msra.mxu0 0
        %1616 = vmatprep.subr.bf16.mxu0 0
        %1617 = vmatpush1.bf16.msra.mxu0 0
        %1618 = vmatprep.subr.bf16.mxu0 0
        %1619 = vmatpush1.bf16.msra.mxu0 0
        %1620 = vmatprep.subr.bf16.mxu0 0
        %1621 = vmatpush1.bf16.msra.mxu0 0
        %1622 = vmatprep.subr.bf16.mxu0 0
        %1623 = vmatpush1.bf16.msra.mxu0 0
        %1624 = vmatprep.subr.bf16.mxu0 %v1596
        %1625 = vmatpush1.bf16.msra.mxu0 %v1593
        %1626 = vmatprep.subr.bf16.mxu0 0
        %1627 = vmatpush2.bf16.msra.mxu0 0
        %1628 = vmatprep.subr.bf16.mxu0 0
        %1629 = vmatpush2.bf16.msra.mxu0 0
        %1630 = vmatprep.subr.bf16.mxu0 0
        %1631 = vmatpush2.bf16.msra.mxu0 0
        %1632 = vmatprep.subr.bf16.mxu0 0
        %1633 = vmatpush2.bf16.msra.mxu0 0
        %1634 = vmatprep.subr.bf16.mxu0 0
        %1635 = vmatpush2.bf16.msra.mxu0 0
        %1636 = vmatprep.subr.bf16.mxu0 0
        %1637 = vmatpush2.bf16.msra.mxu0 0
        %1638 = vmatprep.subr.bf16.mxu0 0
        %1639 = vmatpush2.bf16.msra.mxu0 0
        %1640 = vmatprep.subr.bf16.mxu0 0
        %1641 = vmatpush2.bf16.msra.mxu0 0
        %1642 = vmatprep.mubr.bf16.mxu0 0
        %1643 = vmatmul.mubr.bf16.gmra.mxu0 %v1590
        %v1644 = vpop.f32.mrf.mxu0
        %v1645 = vadd.f32 %v1562, %v1644
        %v1646 = vpop.f32.mrf.mxu0
        %v1647 = vadd.f32 %v1562, %v1646
        %v1648 = vpop.f32.mrf.mxu0
        %v1649 = vpop.f32.mrf.mxu0
        %1650 = vdwg.mxu0
        %1651 = vmatprep.subr.bf16.mxu0 0
        %1652 = vmatpush1.bf16.msra.mxu0 0
        %1653 = vmatprep.subr.bf16.mxu0 0
        %1654 = vmatpush1.bf16.msra.mxu0 0
        %1655 = vmatprep.subr.bf16.mxu0 0
        %1656 = vmatpush1.bf16.msra.mxu0 0
        %1657 = vmatprep.subr.bf16.mxu0 0
        %1658 = vmatpush1.bf16.msra.mxu0 0
        %1659 = vmatprep.subr.bf16.mxu0 0
        %1660 = vmatpush1.bf16.msra.mxu0 0
        %1661 = vmatprep.subr.bf16.mxu0 0
        %1662 = vmatpush1.bf16.msra.mxu0 0
        %1663 = vmatprep.subr.bf16.mxu0 0
        %1664 = vmatpush1.bf16.msra.mxu0 0
        %1665 = vmatprep.subr.bf16.mxu0 %v1602
        %1666 = vmatpush1.bf16.msra.mxu0 %v1599
        %1667 = vmatprep.subr.bf16.mxu0 0
        %1668 = vmatpush2.bf16.msra.mxu0 0
        %1669 = vmatprep.subr.bf16.mxu0 0
        %1670 = vmatpush2.bf16.msra.mxu0 0
        %1671 = vmatprep.subr.bf16.mxu0 0
        %1672 = vmatpush2.bf16.msra.mxu0 0
        %1673 = vmatprep.subr.bf16.mxu0 0
        %1674 = vmatpush2.bf16.msra.mxu0 0
        %1675 = vmatprep.subr.bf16.mxu0 0
        %1676 = vmatpush2.bf16.msra.mxu0 0
        %1677 = vmatprep.subr.bf16.mxu0 0
        %1678 = vmatpush2.bf16.msra.mxu0 0
        %1679 = vmatprep.subr.bf16.mxu0 0
        %1680 = vmatpush2.bf16.msra.mxu0 0
        %1681 = vmatprep.subr.bf16.mxu0 0
        %1682 = vmatpush2.bf16.msra.mxu0 0
        %1683 = vmatprep.mubr.bf16.mxu0 0
        %1684 = vmatmul.mubr.bf16.gmra.mxu0 %v1590
        %v1685 = vpop.f32.mrf.mxu0
        %v1686 = vadd.f32 %v1562, %v1685
        %v1687 = vpop.f32.mrf.mxu0
        %v1688 = vadd.f32 %v1562, %v1687
        %v1689 = vpop.f32.mrf.mxu0
        %v1690 = vpop.f32.mrf.mxu0
        %1691 = vdwg.mxu0
        %1692 = vmatprep.subr.bf16.mxu0 0
        %1693 = vmatpush1.bf16.msra.mxu0 0
        %1694 = vmatprep.subr.bf16.mxu0 0
        %1695 = vmatpush1.bf16.msra.mxu0 0
        %1696 = vmatprep.subr.bf16.mxu0 0
        %1697 = vmatpush1.bf16.msra.mxu0 0
        %1698 = vmatprep.subr.bf16.mxu0 0
        %1699 = vmatpush1.bf16.msra.mxu0 0
        %1700 = vmatprep.subr.bf16.mxu0 0
        %1701 = vmatpush1.bf16.msra.mxu0 0
        %1702 = vmatprep.subr.bf16.mxu0 0
        %1703 = vmatpush1.bf16.msra.mxu0 0
        %1704 = vmatprep.subr.bf16.mxu0 0
        %1705 = vmatpush1.bf16.msra.mxu0 0
        %1706 = vmatprep.subr.bf16.mxu0 %v1608
        %1707 = vmatpush1.bf16.msra.mxu0 %v1605
        %1708 = vmatprep.subr.bf16.mxu0 0
        %1709 = vmatpush2.bf16.msra.mxu0 0
        %1710 = vmatprep.subr.bf16.mxu0 0
        %1711 = vmatpush2.bf16.msra.mxu0 0
        %1712 = vmatprep.subr.bf16.mxu0 0
        %1713 = vmatpush2.bf16.msra.mxu0 0
        %1714 = vmatprep.subr.bf16.mxu0 0
        %1715 = vmatpush2.bf16.msra.mxu0 0
        %1716 = vmatprep.subr.bf16.mxu0 0
        %1717 = vmatpush2.bf16.msra.mxu0 0
        %1718 = vmatprep.subr.bf16.mxu0 0
        %1719 = vmatpush2.bf16.msra.mxu0 0
        %1720 = vmatprep.subr.bf16.mxu0 0
        %1721 = vmatpush2.bf16.msra.mxu0 0
        %1722 = vmatprep.subr.bf16.mxu0 0
        %1723 = vmatpush2.bf16.msra.mxu0 0
        %1724 = vmatprep.mubr.bf16.mxu0 0
        %1725 = vmatmul.mubr.bf16.gmra.mxu0 %v1590
        %v1726 = vpop.f32.mrf.mxu0
        %v1727 = vadd.f32 %v1562, %v1726
        %v1728 = vpop.f32.mrf.mxu0
        %v1729 = vadd.f32 %v1562, %v1728
        %v1730 = vpop.f32.mrf.mxu0
        %v1731 = vpop.f32.mrf.mxu0
        %1732 = vdwg.mxu0
        %v1733 = vsub.f32 0.0, %v1645
        %v1734 = vsub.f32 0.0, %v1647
        %v1735 = vsub.f32 0.0, %v1686
        %v1736 = vsub.f32 0.0, %v1688
        %v1737 = vsub.f32 0.0, %v1727
        %v1738 = vsub.f32 0.0, %v1729
        %v1739 = vmul.f32 %v1733, 1.442695
        %v1740 = vpow.pop %v1739
        %v1741 = vmul.f32 %v1734, 1.442695
        %v1742 = vpow.pop %v1741
        %v1743 = vmul.f32 %v1735, 1.442695
        %v1744 = vpow.pop %v1743
        %v1745 = vmul.f32 %v1736, 1.442695
        %v1746 = vpow.pop %v1745
        %v1747 = vmul.f32 %v1737, 1.442695
        %v1748 = vpow.pop %v1747
        %v1749 = vmul.f32 %v1738, 1.442695
        %v1750 = vpow.pop %v1749
        %v1751 = vadd.f32 %v1740, 1.0
        %v1752 = vadd.f32 %v1742, 1.0
        %v1753 = vadd.f32 %v1744, 1.0
        %v1754 = vadd.f32 %v1746, 1.0
        %v1755 = vadd.f32 %v1748, 1.0
        %v1756 = vadd.f32 %v1750, 1.0
        %v1757 = vrcp.pop %v1751
        %v1758 = vrcp.pop %v1752
        %v1759 = vrcp.pop %v1753
        %v1760 = vrcp.pop %v1754
        %v1761 = vrcp.pop %v1755
        %v1762 = vrcp.pop %v1756
        %v1763 = vmul.f32 %v1645, %v1757
        %v1764 = vmul.f32 %v1647, %v1758
        %v1765 = vmul.f32 %v1686, %v1759
        %v1766 = vmul.f32 %v1688, %v1760
        %v1767 = vmul.f32 %v1727, %v1761
        %v1768 = vmul.f32 %v1729, %v1762
        %v1769 = vmul.f32 %v1763, %v1159
        %v1770 = vmul.f32 %v1764, %v1163
        %v1771 = vmul.f32 %v1765, %v1167
        %v1772 = vmul.f32 %v1766, %v1171
        %v1773 = vmul.f32 %v1767, %v1175
        %v1774 = vmul.f32 %v1768, %v1179
        %v1781 = vcombine.low %v1769, %v1770
        %v1782 = vcombine.low %v1771, %v1772
        %v1783 = vcombine.low %v1773, %v1774
        %1787 = vst [vmem:[#allocation3 + $0x8] sm:$0xff] %v1781
        %1788 = vst [vmem:[#allocation3 + $0x10] sm:$0xff] %v1782
        %1789 = vst.msk [vmem:[#allocation3 + $0x18] sm:$0xff] %vm1207, %v1783
        %v1790 = vld [vmem:[%s6] sm:$0xf]
        %v1791 = vld [vmem:[#allocation3 + $0x4] sm:$0xff]
        %v1792 = vld [vmem:[#allocation3 + $0xc] sm:$0xff]
        %v1793 = vld [vmem:[#allocation3 + $0x14] sm:$0xff]
        %v1794 = vld [vmem:[#allocation3 + $0x1c] sm:$0xf]
        %1796 = vset.pattern.permute.xlu0 0
        %1797 = vperm.xlu0 %1796, %v1790
        %v1798 = vpop.permute.xlu0 %1797
        %v1804 = vcombine.high %v1791, %v1791
        %v1805 = vcombine.high %v1792, %v1792
        %v1806 = vcombine.high %v1793, %v1793
        %1807 = vrot.lane.b32.xlu0 %v1791, 5
        %v1808 = vpop.permute.xlu0 %1807
        %1809 = vrot.lane.b32.xlu0 %v1804, 5
        %v1810 = vpop.permute.xlu0 %1809
        %1811 = vrot.lane.b32.xlu0 %v1792, 5
        %v1812 = vpop.permute.xlu0 %1811
        %1813 = vrot.lane.b32.xlu0 %v1805, 5
        %v1814 = vpop.permute.xlu0 %1813
        %1815 = vrot.lane.b32.xlu0 %v1793, 5
        %v1816 = vpop.permute.xlu0 %1815
        %1817 = vrot.lane.b32.xlu0 %v1806, 5
        %v1818 = vpop.permute.xlu0 %1817
        %1819 = vrot.lane.b32.xlu0 %v1794, 5
        %v1820 = vpop.permute.xlu0 %1819
        %vm1821 = vcmask 39936
        %v1822 = vsel %vm1821, %v1808, %v1810
        %v1823 = vsel %vm1821, %v1810, %v1812
        %v1824 = vsel %vm1821, %v1812, %v1814
        %v1825 = vsel %vm1821, %v1814, %v1816
        %v1826 = vsel %vm1821, %v1816, %v1818
        %v1827 = vsel %vm1821, %v1818, %v1820
        %v1834 = vmul.f32 %v1798, %v1822
        %v1835 = vmul.f32 %v1798, %v1823
        %v1836 = vmul.f32 %v1798, %v1824
        %v1837 = vmul.f32 %v1798, %v1825
        %v1838 = vmul.f32 %v1798, %v1826
        %v1839 = vmul.f32 %v1798, %v1827
        %v1840 = vld [vmem:[#allocation3 + $0x4] sm:$0xff]
        %v1841 = vld [vmem:[#allocation3 + $0xc] sm:$0xff]
        %v1842 = vld [vmem:[#allocation3 + $0x14] sm:$0xff]
        %v1843 = vld [vmem:[#allocation3 + $0x1c] sm:$0xf]
        %1844 = vset.pattern.permute.xlu0 1
        %1845 = vperm.xlu0 %1844, %v1790
        %v1846 = vpop.permute.xlu0 %1845
        %v1852 = vcombine.high %v1840, %v1840
        %v1853 = vcombine.high %v1841, %v1841
        %v1854 = vcombine.high %v1842, %v1842
        %1855 = vrot.lane.b32.xlu0 %v1840, 4
        %v1856 = vpop.permute.xlu0 %1855
        %1857 = vrot.lane.b32.xlu0 %v1852, 4
        %v1858 = vpop.permute.xlu0 %1857
        %1859 = vrot.lane.b32.xlu0 %v1841, 4
        %v1860 = vpop.permute.xlu0 %1859
        %1861 = vrot.lane.b32.xlu0 %v1853, 4
        %v1862 = vpop.permute.xlu0 %1861
        %1863 = vrot.lane.b32.xlu0 %v1842, 4
        %v1864 = vpop.permute.xlu0 %1863
        %1865 = vrot.lane.b32.xlu0 %v1854, 4
        %v1866 = vpop.permute.xlu0 %1865
        %1867 = vrot.lane.b32.xlu0 %v1843, 4
        %v1868 = vpop.permute.xlu0 %1867
        %v1869 = vsel %vm1588, %v1856, %v1858
        %v1870 = vsel %vm1588, %v1858, %v1860
        %v1871 = vsel %vm1588, %v1860, %v1862
        %v1872 = vsel %vm1588, %v1862, %v1864
        %v1873 = vsel %vm1588, %v1864, %v1866
        %v1874 = vsel %vm1588, %v1866, %v1868
        %v1881 = vmul.f32 %v1846, %v1869
        %v1882 = vmul.f32 %v1846, %v1870
        %v1883 = vmul.f32 %v1846, %v1871
        %v1884 = vmul.f32 %v1846, %v1872
        %v1885 = vmul.f32 %v1846, %v1873
        %v1886 = vmul.f32 %v1846, %v1874
        %v1887 = vadd.f32 %v1834, %v1881
        %v1888 = vadd.f32 %v1835, %v1882
        %v1889 = vadd.f32 %v1836, %v1883
        %v1890 = vadd.f32 %v1837, %v1884
        %v1891 = vadd.f32 %v1838, %v1885
        %v1892 = vadd.f32 %v1839, %v1886
        %v1893 = vld [vmem:[#allocation3 + $0x4] sm:$0xff]
        %v1894 = vld [vmem:[#allocation3 + $0xc] sm:$0xff]
        %v1895 = vld [vmem:[#allocation3 + $0x14] sm:$0xff]
        %v1896 = vld [vmem:[#allocation3 + $0x1c] sm:$0xf]
        %1897 = vset.pattern.permute.xlu0 2
        %1898 = vperm.xlu0 %1897, %v1790
        %v1899 = vpop.permute.xlu0 %1898
        %v1905 = vcombine.high %v1893, %v1893
        %v1906 = vcombine.high %v1894, %v1894
        %v1907 = vcombine.high %v1895, %v1895
        %1908 = vrot.lane.b32.xlu0 %v1893, 3
        %v1909 = vpop.permute.xlu0 %1908
        %1910 = vrot.lane.b32.xlu0 %v1905, 3
        %v1911 = vpop.permute.xlu0 %1910
        %1912 = vrot.lane.b32.xlu0 %v1894, 3
        %v1913 = vpop.permute.xlu0 %1912
        %1914 = vrot.lane.b32.xlu0 %v1906, 3
        %v1915 = vpop.permute.xlu0 %1914
        %1916 = vrot.lane.b32.xlu0 %v1895, 3
        %v1917 = vpop.permute.xlu0 %1916
        %1918 = vrot.lane.b32.xlu0 %v1907, 3
        %v1919 = vpop.permute.xlu0 %1918
        %1920 = vrot.lane.b32.xlu0 %v1896, 3
        %v1921 = vpop.permute.xlu0 %1920
        %v1922 = vsel %vm1385, %v1909, %v1911
        %v1923 = vsel %vm1385, %v1911, %v1913
        %v1924 = vsel %vm1385, %v1913, %v1915
        %v1925 = vsel %vm1385, %v1915, %v1917
        %v1926 = vsel %vm1385, %v1917, %v1919
        %v1927 = vsel %vm1385, %v1919, %v1921
        %v1934 = vmul.f32 %v1899, %v1922
        %v1935 = vmul.f32 %v1899, %v1923
        %v1936 = vmul.f32 %v1899, %v1924
        %v1937 = vmul.f32 %v1899, %v1925
        %v1938 = vmul.f32 %v1899, %v1926
        %v1939 = vmul.f32 %v1899, %v1927
        %v1940 = vadd.f32 %v1887, %v1934
        %v1941 = vadd.f32 %v1888, %v1935
        %v1942 = vadd.f32 %v1889, %v1936
        %v1943 = vadd.f32 %v1890, %v1937
        %v1944 = vadd.f32 %v1891, %v1938
        %v1945 = vadd.f32 %v1892, %v1939
        %v1946 = vld [vmem:[#allocation3 + $0x4] sm:$0xff]
        %v1947 = vld [vmem:[#allocation3 + $0xc] sm:$0xff]
        %v1948 = vld [vmem:[#allocation3 + $0x14] sm:$0xff]
        %v1949 = vld [vmem:[#allocation3 + $0x1c] sm:$0xf]
        %1950 = vset.pattern.permute.xlu0 3
        %1951 = vperm.xlu0 %1950, %v1790
        %v1952 = vpop.permute.xlu0 %1951
        %v1958 = vcombine.high %v1946, %v1946
        %v1959 = vcombine.high %v1947, %v1947
        %v1960 = vcombine.high %v1948, %v1948
        %1961 = vrot.lane.b32.xlu0 %v1946, 2
        %v1962 = vpop.permute.xlu0 %1961
        %1963 = vrot.lane.b32.xlu0 %v1958, 2
        %v1964 = vpop.permute.xlu0 %1963
        %1965 = vrot.lane.b32.xlu0 %v1947, 2
        %v1966 = vpop.permute.xlu0 %1965
        %1967 = vrot.lane.b32.xlu0 %v1959, 2
        %v1968 = vpop.permute.xlu0 %1967
        %1969 = vrot.lane.b32.xlu0 %v1948, 2
        %v1970 = vpop.permute.xlu0 %1969
        %1971 = vrot.lane.b32.xlu0 %v1960, 2
        %v1972 = vpop.permute.xlu0 %1971
        %1973 = vrot.lane.b32.xlu0 %v1949, 2
        %v1974 = vpop.permute.xlu0 %1973
        %vm1975 = vcmask 15360
        %v1976 = vsel %vm1975, %v1962, %v1964
        %v1977 = vsel %vm1975, %v1964, %v1966
        %v1978 = vsel %vm1975, %v1966, %v1968
        %v1979 = vsel %vm1975, %v1968, %v1970
        %v1980 = vsel %vm1975, %v1970, %v1972
        %v1981 = vsel %vm1975, %v1972, %v1974
        %v1988 = vmul.f32 %v1952, %v1976
        %v1989 = vmul.f32 %v1952, %v1977
        %v1990 = vmul.f32 %v1952, %v1978
        %v1991 = vmul.f32 %v1952, %v1979
        %v1992 = vmul.f32 %v1952, %v1980
        %v1993 = vmul.f32 %v1952, %v1981
        %v1994 = vadd.f32 %v1940, %v1988
        %v1995 = vadd.f32 %v1941, %v1989
        %v1996 = vadd.f32 %v1942, %v1990
        %v1997 = vadd.f32 %v1943, %v1991
        %v1998 = vadd.f32 %v1944, %v1992
        %v1999 = vadd.f32 %v1945, %v1993
        %v2000 = vld [vmem:[#allocation3 + $0x4] sm:$0xff]
        %v2001 = vld [vmem:[#allocation3 + $0xc] sm:$0xff]
        %v2002 = vld [vmem:[#allocation3 + $0x14] sm:$0xff]
        %v2003 = vld [vmem:[#allocation3 + $0x1c] sm:$0xf]
        %2004 = vset.pattern.permute.xlu0 4
        %2005 = vperm.xlu0 %2004, %v1790
        %v2006 = vpop.permute.xlu0 %2005
        %v2012 = vcombine.high %v2000, %v2000
        %v2013 = vcombine.high %v2001, %v2001
        %v2014 = vcombine.high %v2002, %v2002
        %2015 = vrot.lane.b32.xlu0 %v2000, 1
        %v2016 = vpop.permute.xlu0 %2015
        %2017 = vrot.lane.b32.xlu0 %v2012, 1
        %v2018 = vpop.permute.xlu0 %2017
        %2019 = vrot.lane.b32.xlu0 %v2001, 1
        %v2020 = vpop.permute.xlu0 %2019
        %2021 = vrot.lane.b32.xlu0 %v2013, 1
        %v2022 = vpop.permute.xlu0 %2021
        %2023 = vrot.lane.b32.xlu0 %v2002, 1
        %v2024 = vpop.permute.xlu0 %2023
        %2025 = vrot.lane.b32.xlu0 %v2014, 1
        %v2026 = vpop.permute.xlu0 %2025
        %2027 = vrot.lane.b32.xlu0 %v2003, 1
        %v2028 = vpop.permute.xlu0 %2027
        %v2029 = vsel %vm725, %v2016, %v2018
        %v2030 = vsel %vm725, %v2018, %v2020
        %v2031 = vsel %vm725, %v2020, %v2022
        %v2032 = vsel %vm725, %v2022, %v2024
        %v2033 = vsel %vm725, %v2024, %v2026
        %v2034 = vsel %vm725, %v2026, %v2028
        %v2041 = vmul.f32 %v2006, %v2029
        %v2042 = vmul.f32 %v2006, %v2030
        %v2043 = vmul.f32 %v2006, %v2031
        %v2044 = vmul.f32 %v2006, %v2032
        %v2045 = vmul.f32 %v2006, %v2033
        %v2046 = vmul.f32 %v2006, %v2034
        %v2047 = vadd.f32 %v1994, %v2041
        %v2048 = vadd.f32 %v1995, %v2042
        %v2049 = vadd.f32 %v1996, %v2043
        %v2050 = vadd.f32 %v1997, %v2044
        %v2051 = vadd.f32 %v1998, %v2045
        %v2052 = vadd.f32 %v1999, %v2046
        %v2053 = vld [vmem:[#allocation3 + $0x8] sm:$0xff]
        %v2054 = vld [vmem:[#allocation3 + $0x10] sm:$0xff]
        %v2055 = vld [vmem:[#allocation3 + $0x18] sm:$0xff]
        %2056 = vset.pattern.permute.xlu0 5
        %2057 = vperm.xlu0 %2056, %v1790
        %v2058 = vpop.permute.xlu0 %2057
        %v2063 = vcombine.high %v2053, %v2053
        %v2064 = vcombine.high %v2054, %v2054
        %v2065 = vcombine.high %v2055, %v2055
        %v2069 = vmul.f32 %v2058, %v2053
        %v2070 = vmul.f32 %v2058, %v2063
        %v2071 = vmul.f32 %v2058, %v2054
        %v2072 = vmul.f32 %v2058, %v2064
        %v2073 = vmul.f32 %v2058, %v2055
        %v2074 = vmul.f32 %v2058, %v2065
        %v2075 = vadd.f32 %v2047, %v2069
        %v2076 = vadd.f32 %v2048, %v2070
        %v2077 = vadd.f32 %v2049, %v2071
        %v2078 = vadd.f32 %v2050, %v2072
        %v2079 = vadd.f32 %v2051, %v2073
        %v2080 = vadd.f32 %v2052, %v2074
        %v2081 = vld [vmem:[#allocation3 + $0x8] sm:$0xff]
        %v2082 = vld [vmem:[#allocation3 + $0x10] sm:$0xff]
        %v2083 = vld [vmem:[#allocation3 + $0x18] sm:$0xff]
        %2084 = vset.pattern.permute.xlu0 6
        %2085 = vperm.xlu0 %2084, %v1790
        %v2086 = vpop.permute.xlu0 %2085
        %v2091 = vcombine.high %v2081, %v2081
        %v2092 = vcombine.high %v2082, %v2082
        %v2093 = vcombine.high %v2083, %v2083
        %2094 = vrot.lane.b32.xlu0 %v2081, 127
        %v2095 = vpop.permute.xlu0 %2094
        %2096 = vrot.lane.b32.xlu0 %v2091, 127
        %v2097 = vpop.permute.xlu0 %2096
        %2098 = vrot.lane.b32.xlu0 %v2082, 127
        %v2099 = vpop.permute.xlu0 %2098
        %2100 = vrot.lane.b32.xlu0 %v2092, 127
        %v2101 = vpop.permute.xlu0 %2100
        %2102 = vrot.lane.b32.xlu0 %v2083, 127
        %v2103 = vpop.permute.xlu0 %2102
        %2104 = vrot.lane.b32.xlu0 %v2093, 127
        %v2105 = vpop.permute.xlu0 %2104
        %v2106 = vsel %vm783, %v2095, %v2097
        %v2107 = vsel %vm783, %v2097, %v2099
        %v2108 = vsel %vm783, %v2099, %v2101
        %v2109 = vsel %vm783, %v2101, %v2103
        %v2110 = vsel %vm783, %v2103, %v2105
        %v2117 = vmul.f32 %v2086, %v2106
        %v2118 = vmul.f32 %v2086, %v2107
        %v2119 = vmul.f32 %v2086, %v2108
        %v2120 = vmul.f32 %v2086, %v2109
        %v2121 = vmul.f32 %v2086, %v2110
        %v2122 = vmul.f32 %v2086, %v2105
        %v2123 = vadd.f32 %v2075, %v2117
        %v2124 = vadd.f32 %v2076, %v2118
        %v2125 = vadd.f32 %v2077, %v2119
        %v2126 = vadd.f32 %v2078, %v2120
        %v2127 = vadd.f32 %v2079, %v2121
        %v2128 = vadd.f32 %v2080, %v2122
        %v2129 = vld [vmem:[#allocation3 + $0x8] sm:$0xff]
        %v2130 = vld [vmem:[#allocation3 + $0x10] sm:$0xff]
        %v2131 = vld [vmem:[#allocation3 + $0x18] sm:$0xff]
        %2132 = vset.pattern.permute.xlu0 7
        %2133 = vperm.xlu0 %2132, %v1790
        %v2134 = vpop.permute.xlu0 %2133
        %v2139 = vcombine.high %v2129, %v2129
        %v2140 = vcombine.high %v2130, %v2130
        %v2141 = vcombine.high %v2131, %v2131
        %2142 = vrot.lane.b32.xlu0 %v2129, 126
        %v2143 = vpop.permute.xlu0 %2142
        %2144 = vrot.lane.b32.xlu0 %v2139, 126
        %v2145 = vpop.permute.xlu0 %2144
        %2146 = vrot.lane.b32.xlu0 %v2130, 126
        %v2147 = vpop.permute.xlu0 %2146
        %2148 = vrot.lane.b32.xlu0 %v2140, 126
        %v2149 = vpop.permute.xlu0 %2148
        %2150 = vrot.lane.b32.xlu0 %v2131, 126
        %v2151 = vpop.permute.xlu0 %2150
        %2152 = vrot.lane.b32.xlu0 %v2141, 126
        %v2153 = vpop.permute.xlu0 %2152
        %v2154 = vsel %vm1256, %v2143, %v2145
        %v2155 = vsel %vm1256, %v2145, %v2147
        %v2156 = vsel %vm1256, %v2147, %v2149
        %v2157 = vsel %vm1256, %v2149, %v2151
        %v2158 = vsel %vm1256, %v2151, %v2153
        %v2165 = vmul.f32 %v2134, %v2154
        %v2166 = vmul.f32 %v2134, %v2155
        %v2167 = vmul.f32 %v2134, %v2156
        %v2168 = vmul.f32 %v2134, %v2157
        %v2169 = vmul.f32 %v2134, %v2158
        %v2170 = vmul.f32 %v2134, %v2153
        %v2171 = vadd.f32 %v2123, %v2165
        %v2172 = vadd.f32 %v2124, %v2166
        %v2173 = vadd.f32 %v2125, %v2167
        %v2174 = vadd.f32 %v2126, %v2168
        %v2175 = vadd.f32 %v2127, %v2169
        %v2176 = vadd.f32 %v2128, %v2170
        %v2177 = vld [vmem:[#allocation3 + $0x8] sm:$0xff]
        %v2178 = vld [vmem:[#allocation3 + $0x10] sm:$0xff]
        %v2179 = vld [vmem:[#allocation3 + $0x18] sm:$0xff]
        %2180 = vset.pattern.permute.xlu0 8
        %2181 = vperm.xlu0 %2180, %v1790
        %v2182 = vpop.permute.xlu0 %2181
        %v2187 = vcombine.high %v2177, %v2177
        %v2188 = vcombine.high %v2178, %v2178
        %v2189 = vcombine.high %v2179, %v2179
        %2190 = vrot.lane.b32.xlu0 %v2177, 125
        %v2191 = vpop.permute.xlu0 %2190
        %2192 = vrot.lane.b32.xlu0 %v2187, 125
        %v2193 = vpop.permute.xlu0 %2192
        %2194 = vrot.lane.b32.xlu0 %v2178, 125
        %v2195 = vpop.permute.xlu0 %2194
        %2196 = vrot.lane.b32.xlu0 %v2188, 125
        %v2197 = vpop.permute.xlu0 %2196
        %2198 = vrot.lane.b32.xlu0 %v2179, 125
        %v2199 = vpop.permute.xlu0 %2198
        %2200 = vrot.lane.b32.xlu0 %v2189, 125
        %v2201 = vpop.permute.xlu0 %2200
        %v2202 = vsel %vm1285, %v2191, %v2193
        %v2203 = vsel %vm1285, %v2193, %v2195
        %v2204 = vsel %vm1285, %v2195, %v2197
        %v2205 = vsel %vm1285, %v2197, %v2199
        %v2206 = vsel %vm1285, %v2199, %v2201
        %v2213 = vmul.f32 %v2182, %v2202
        %v2214 = vmul.f32 %v2182, %v2203
        %v2215 = vmul.f32 %v2182, %v2204
        %v2216 = vmul.f32 %v2182, %v2205
        %v2217 = vmul.f32 %v2182, %v2206
        %v2218 = vmul.f32 %v2182, %v2201
        %v2219 = vadd.f32 %v2171, %v2213
        %v2220 = vadd.f32 %v2172, %v2214
        %v2221 = vadd.f32 %v2173, %v2215
        %v2222 = vadd.f32 %v2174, %v2216
        %v2223 = vadd.f32 %v2175, %v2217
        %v2224 = vadd.f32 %v2176, %v2218
        %v2225 = vld [vmem:[#allocation3 + $0x8] sm:$0xff]
        %v2226 = vld [vmem:[#allocation3 + $0x10] sm:$0xff]
        %v2227 = vld [vmem:[#allocation3 + $0x18] sm:$0xff]
        %2228 = vset.pattern.permute.xlu0 9
        %2229 = vperm.xlu0 %2228, %v1790
        %v2230 = vpop.permute.xlu0 %2229
        %v2235 = vcombine.high %v2225, %v2225
        %v2236 = vcombine.high %v2226, %v2226
        %v2237 = vcombine.high %v2227, %v2227
        %2238 = vrot.lane.b32.xlu0 %v2225, 124
        %v2239 = vpop.permute.xlu0 %2238
        %2240 = vrot.lane.b32.xlu0 %v2235, 124
        %v2241 = vpop.permute.xlu0 %2240
        %2242 = vrot.lane.b32.xlu0 %v2226, 124
        %v2243 = vpop.permute.xlu0 %2242
        %2244 = vrot.lane.b32.xlu0 %v2236, 124
        %v2245 = vpop.permute.xlu0 %2244
        %2246 = vrot.lane.b32.xlu0 %v2227, 124
        %v2247 = vpop.permute.xlu0 %2246
        %2248 = vrot.lane.b32.xlu0 %v2237, 124
        %v2249 = vpop.permute.xlu0 %2248
        %v2250 = vsel %vm1308, %v2239, %v2241
        %v2251 = vsel %vm1308, %v2241, %v2243
        %v2252 = vsel %vm1308, %v2243, %v2245
        %v2253 = vsel %vm1308, %v2245, %v2247
        %v2254 = vsel %vm1308, %v2247, %v2249
        %v2261 = vmul.f32 %v2230, %v2250
        %v2262 = vmul.f32 %v2230, %v2251
        %v2263 = vmul.f32 %v2230, %v2252
        %v2264 = vmul.f32 %v2230, %v2253
        %v2265 = vmul.f32 %v2230, %v2254
        %v2266 = vmul.f32 %v2230, %v2249
        %v2267 = vadd.f32 %v2219, %v2261
        %v2268 = vadd.f32 %v2220, %v2262
        %v2269 = vadd.f32 %v2221, %v2263
        %v2270 = vadd.f32 %v2222, %v2264
        %v2271 = vadd.f32 %v2223, %v2265
        %v2272 = vadd.f32 %v2224, %v2266
        %v2273 = vld [vmem:[#allocation3 + $0x8] sm:$0xff]
        %v2274 = vld [vmem:[#allocation3 + $0x10] sm:$0xff]
        %v2275 = vld [vmem:[#allocation3 + $0x18] sm:$0xff]
        %2276 = vset.pattern.permute.xlu0 10
        %2277 = vperm.xlu0 %2276, %v1790
        %v2278 = vpop.permute.xlu0 %2277
        %v2283 = vcombine.high %v2273, %v2273
        %v2284 = vcombine.high %v2274, %v2274
        %v2285 = vcombine.high %v2275, %v2275
        %2286 = vrot.lane.b32.xlu0 %v2273, 123
        %v2287 = vpop.permute.xlu0 %2286
        %2288 = vrot.lane.b32.xlu0 %v2283, 123
        %v2289 = vpop.permute.xlu0 %2288
        %2290 = vrot.lane.b32.xlu0 %v2274, 123
        %v2291 = vpop.permute.xlu0 %2290
        %2292 = vrot.lane.b32.xlu0 %v2284, 123
        %v2293 = vpop.permute.xlu0 %2292
        %2294 = vrot.lane.b32.xlu0 %v2275, 123
        %v2295 = vpop.permute.xlu0 %2294
        %2296 = vrot.lane.b32.xlu0 %v2285, 123
        %v2297 = vpop.permute.xlu0 %2296
        %v2298 = vsel %vm1331, %v2287, %v2289
        %v2299 = vsel %vm1331, %v2289, %v2291
        %v2300 = vsel %vm1331, %v2291, %v2293
        %v2301 = vsel %vm1331, %v2293, %v2295
        %v2302 = vsel %vm1331, %v2295, %v2297
        %v2309 = vmul.f32 %v2278, %v2298
        %v2310 = vmul.f32 %v2278, %v2299
        %v2311 = vmul.f32 %v2278, %v2300
        %v2312 = vmul.f32 %v2278, %v2301
        %v2313 = vmul.f32 %v2278, %v2302
        %v2314 = vmul.f32 %v2278, %v2297
        %v2315 = vadd.f32 %v2267, %v2309
        %v2316 = vadd.f32 %v2268, %v2310
        %v2317 = vadd.f32 %v2269, %v2311
        %v2318 = vadd.f32 %v2270, %v2312
        %v2319 = vadd.f32 %v2271, %v2313
        %v2320 = vadd.f32 %v2272, %v2314
        %v2321 = vld [vmem:[%s7] sm:$0xf]
        %2323 = vset.pattern.permute.xlu0 0
        %2324 = vperm.xlu0 %2323, %v2321
        %v2325 = vpop.permute.xlu0 %2324
        %v2327 = vadd.f32 %v2315, %v2325
        %v2328 = vadd.f32 %v2316, %v2325
        %v2329 = vadd.f32 %v2317, %v2325
        %v2330 = vadd.f32 %v2318, %v2325
        %v2331 = vadd.f32 %v2319, %v2325
        %v2332 = vadd.f32 %v2320, %v2325
        %v2333 = vmul.f32 %v2327, %v1159
        %v2334 = vmul.f32 %v2328, %v1163
        %v2335 = vmul.f32 %v2329, %v1167
        %v2336 = vmul.f32 %v2330, %v1171
        %v2337 = vmul.f32 %v2331, %v1175
        %v2338 = vmul.f32 %v2332, %v1179
        %v2345 = vcombine.low %v2333, %v2334
        %v2346 = vcombine.low %v2335, %v2336
        %v2347 = vcombine.low %v2337, %v2338
        %2351 = vst [vmem:[#allocation2 + $0x8] sm:$0xff] %v2345
        %2352 = vst [vmem:[#allocation2 + $0x10] sm:$0xff] %v2346
        %2353 = vst.msk [vmem:[#allocation2 + $0x18] sm:$0xff] %vm1207, %v2347
        %v2354 = vld [vmem:[%s8] sm:$0xf]
        %v2355 = vld [vmem:[#allocation2] sm:$0xff]
        %v2356 = vld [vmem:[#allocation2 + $0x8] sm:$0xff]
        %v2357 = vld [vmem:[#allocation2 + $0x10] sm:$0xff]
        %v2358 = vld [vmem:[#allocation2 + $0x18] sm:$0xf]
        %2360 = vset.pattern.permute.xlu0 0
        %2361 = vperm.xlu0 %2360, %v2354
        %v2362 = vpop.permute.xlu0 %2361
        %v2368 = vcombine.high %v2355, %v2355
        %v2369 = vcombine.high %v2356, %v2356
        %v2370 = vcombine.high %v2357, %v2357
        %2371 = vrot.lane.b32.xlu0 %v2355, 2
        %v2372 = vpop.permute.xlu0 %2371
        %2373 = vrot.lane.b32.xlu0 %v2368, 2
        %v2374 = vpop.permute.xlu0 %2373
        %2375 = vrot.lane.b32.xlu0 %v2356, 2
        %v2376 = vpop.permute.xlu0 %2375
        %2377 = vrot.lane.b32.xlu0 %v2369, 2
        %v2378 = vpop.permute.xlu0 %2377
        %2379 = vrot.lane.b32.xlu0 %v2357, 2
        %v2380 = vpop.permute.xlu0 %2379
        %2381 = vrot.lane.b32.xlu0 %v2370, 2
        %v2382 = vpop.permute.xlu0 %2381
        %2383 = vrot.lane.b32.xlu0 %v2358, 2
        %v2384 = vpop.permute.xlu0 %2383
        %v2385 = vsel %vm1975, %v2372, %v2374
        %v2386 = vsel %vm1975, %v2374, %v2376
        %v2387 = vsel %vm1975, %v2376, %v2378
        %v2388 = vsel %vm1975, %v2378, %v2380
        %v2389 = vsel %vm1975, %v2380, %v2382
        %v2390 = vsel %vm1975, %v2382, %v2384
        %v2397 = vmul.f32 %v2362, %v2385
        %v2398 = vmul.f32 %v2362, %v2386
        %v2399 = vmul.f32 %v2362, %v2387
        %v2400 = vmul.f32 %v2362, %v2388
        %v2401 = vmul.f32 %v2362, %v2389
        %v2402 = vmul.f32 %v2362, %v2390
        %v2403 = vld [vmem:[#allocation2 + $0x4] sm:$0xff]
        %v2404 = vld [vmem:[#allocation2 + $0xc] sm:$0xff]
        %v2405 = vld [vmem:[#allocation2 + $0x14] sm:$0xff]
        %2406 = vset.pattern.permute.xlu0 1
        %2407 = vperm.xlu0 %2406, %v2354
        %v2408 = vpop.permute.xlu0 %2407
        %v2413 = vcombine.high %v2403, %v2403
        %v2414 = vcombine.high %v2404, %v2404
        %v2415 = vcombine.high %v2405, %v2405
        %2416 = vrot.lane.b32.xlu0 %v2403, 104
        %v2417 = vpop.permute.xlu0 %2416
        %2418 = vrot.lane.b32.xlu0 %v2413, 104
        %v2419 = vpop.permute.xlu0 %2418
        %2420 = vrot.lane.b32.xlu0 %v2404, 104
        %v2421 = vpop.permute.xlu0 %2420
        %2422 = vrot.lane.b32.xlu0 %v2414, 104
        %v2423 = vpop.permute.xlu0 %2422
        %2424 = vrot.lane.b32.xlu0 %v2405, 104
        %v2425 = vpop.permute.xlu0 %2424
        %2426 = vrot.lane.b32.xlu0 %v2415, 104
        %v2427 = vpop.permute.xlu0 %2426
        %vm2428 = vcmask 850944
        %v2429 = vsel %vm2428, %v2417, %v2419
        %v2430 = vsel %vm2428, %v2419, %v2421
        %v2431 = vsel %vm2428, %v2421, %v2423
        %v2432 = vsel %vm2428, %v2423, %v2425
        %v2433 = vsel %vm2428, %v2425, %v2427
        %v2440 = vmul.f32 %v2408, %v2429
        %v2441 = vmul.f32 %v2408, %v2430
        %v2442 = vmul.f32 %v2408, %v2431
        %v2443 = vmul.f32 %v2408, %v2432
        %v2444 = vmul.f32 %v2408, %v2433
        %v2445 = vmul.f32 %v2408, %v2427
        %v2446 = vadd.f32 %v2397, %v2440
        %v2447 = vadd.f32 %v2398, %v2441
        %v2448 = vadd.f32 %v2399, %v2442
        %v2449 = vadd.f32 %v2400, %v2443
        %v2450 = vadd.f32 %v2401, %v2444
        %v2451 = vadd.f32 %v2402, %v2445
        %v2452 = vld [vmem:[#allocation2 + $0x4] sm:$0xff]
        %v2453 = vld [vmem:[#allocation2 + $0xc] sm:$0xff]
        %v2454 = vld [vmem:[#allocation2 + $0x14] sm:$0xff]
        %2455 = vset.pattern.permute.xlu0 2
        %2456 = vperm.xlu0 %2455, %v2354
        %v2457 = vpop.permute.xlu0 %2456
        %v2462 = vcombine.high %v2452, %v2452
        %v2463 = vcombine.high %v2453, %v2453
        %v2464 = vcombine.high %v2454, %v2454
        %2465 = vrot.lane.b32.xlu0 %v2452, 78
        %v2466 = vpop.permute.xlu0 %2465
        %2467 = vrot.lane.b32.xlu0 %v2462, 78
        %v2468 = vpop.permute.xlu0 %2467
        %2469 = vrot.lane.b32.xlu0 %v2453, 78
        %v2470 = vpop.permute.xlu0 %2469
        %2471 = vrot.lane.b32.xlu0 %v2463, 78
        %v2472 = vpop.permute.xlu0 %2471
        %2473 = vrot.lane.b32.xlu0 %v2454, 78
        %v2474 = vpop.permute.xlu0 %2473
        %2475 = vrot.lane.b32.xlu0 %v2464, 78
        %v2476 = vpop.permute.xlu0 %2475
        %vm2477 = vcmask 637952
        %v2478 = vsel %vm2477, %v2466, %v2468
        %v2479 = vsel %vm2477, %v2468, %v2470
        %v2480 = vsel %vm2477, %v2470, %v2472
        %v2481 = vsel %vm2477, %v2472, %v2474
        %v2482 = vsel %vm2477, %v2474, %v2476
        %v2489 = vmul.f32 %v2457, %v2478
        %v2490 = vmul.f32 %v2457, %v2479
        %v2491 = vmul.f32 %v2457, %v2480
        %v2492 = vmul.f32 %v2457, %v2481
        %v2493 = vmul.f32 %v2457, %v2482
        %v2494 = vmul.f32 %v2457, %v2476
        %v2495 = vadd.f32 %v2446, %v2489
        %v2496 = vadd.f32 %v2447, %v2490
        %v2497 = vadd.f32 %v2448, %v2491
        %v2498 = vadd.f32 %v2449, %v2492
        %v2499 = vadd.f32 %v2450, %v2493
        %v2500 = vadd.f32 %v2451, %v2494
        %v2501 = vld [vmem:[#allocation2 + $0x4] sm:$0xff]
        %v2502 = vld [vmem:[#allocation2 + $0xc] sm:$0xff]
        %v2503 = vld [vmem:[#allocation2 + $0x14] sm:$0xff]
        %2504 = vset.pattern.permute.xlu0 3
        %2505 = vperm.xlu0 %2504, %v2354
        %v2506 = vpop.permute.xlu0 %2505
        %v2511 = vcombine.high %v2501, %v2501
        %v2512 = vcombine.high %v2502, %v2502
        %v2513 = vcombine.high %v2503, %v2503
        %2514 = vrot.lane.b32.xlu0 %v2501, 52
        %v2515 = vpop.permute.xlu0 %2514
        %2516 = vrot.lane.b32.xlu0 %v2511, 52
        %v2517 = vpop.permute.xlu0 %2516
        %2518 = vrot.lane.b32.xlu0 %v2502, 52
        %v2519 = vpop.permute.xlu0 %2518
        %2520 = vrot.lane.b32.xlu0 %v2512, 52
        %v2521 = vpop.permute.xlu0 %2520
        %2522 = vrot.lane.b32.xlu0 %v2503, 52
        %v2523 = vpop.permute.xlu0 %2522
        %2524 = vrot.lane.b32.xlu0 %v2513, 52
        %v2525 = vpop.permute.xlu0 %2524
        %vm2526 = vcmask 424960
        %v2527 = vsel %vm2526, %v2515, %v2517
        %v2528 = vsel %vm2526, %v2517, %v2519
        %v2529 = vsel %vm2526, %v2519, %v2521
        %v2530 = vsel %vm2526, %v2521, %v2523
        %v2531 = vsel %vm2526, %v2523, %v2525
        %v2538 = vmul.f32 %v2506, %v2527
        %v2539 = vmul.f32 %v2506, %v2528
        %v2540 = vmul.f32 %v2506, %v2529
        %v2541 = vmul.f32 %v2506, %v2530
        %v2542 = vmul.f32 %v2506, %v2531
        %v2543 = vmul.f32 %v2506, %v2525
        %v2544 = vadd.f32 %v2495, %v2538
        %v2545 = vadd.f32 %v2496, %v2539
        %v2546 = vadd.f32 %v2497, %v2540
        %v2547 = vadd.f32 %v2498, %v2541
        %v2548 = vadd.f32 %v2499, %v2542
        %v2549 = vadd.f32 %v2500, %v2543
        %v2550 = vld [vmem:[#allocation2 + $0x4] sm:$0xff]
        %v2551 = vld [vmem:[#allocation2 + $0xc] sm:$0xff]
        %v2552 = vld [vmem:[#allocation2 + $0x14] sm:$0xff]
        %v2553 = vld [vmem:[#allocation2 + $0x1c] sm:$0xf]
        %2554 = vset.pattern.permute.xlu0 4
        %2555 = vperm.xlu0 %2554, %v2354
        %v2556 = vpop.permute.xlu0 %2555
        %v2562 = vcombine.high %v2550, %v2550
        %v2563 = vcombine.high %v2551, %v2551
        %v2564 = vcombine.high %v2552, %v2552
        %2565 = vrot.lane.b32.xlu0 %v2550, 26
        %v2566 = vpop.permute.xlu0 %2565
        %2567 = vrot.lane.b32.xlu0 %v2562, 26
        %v2568 = vpop.permute.xlu0 %2567
        %2569 = vrot.lane.b32.xlu0 %v2551, 26
        %v2570 = vpop.permute.xlu0 %2569
        %2571 = vrot.lane.b32.xlu0 %v2563, 26
        %v2572 = vpop.permute.xlu0 %2571
        %2573 = vrot.lane.b32.xlu0 %v2552, 26
        %v2574 = vpop.permute.xlu0 %2573
        %2575 = vrot.lane.b32.xlu0 %v2564, 26
        %v2576 = vpop.permute.xlu0 %2575
        %2577 = vrot.lane.b32.xlu0 %v2553, 26
        %v2578 = vpop.permute.xlu0 %2577
        %v2579 = vsel %vm635, %v2566, %v2568
        %v2580 = vsel %vm635, %v2568, %v2570
        %v2581 = vsel %vm635, %v2570, %v2572
        %v2582 = vsel %vm635, %v2572, %v2574
        %v2583 = vsel %vm635, %v2574, %v2576
        %v2584 = vsel %vm635, %v2576, %v2578
        %v2591 = vmul.f32 %v2556, %v2579
        %v2592 = vmul.f32 %v2556, %v2580
        %v2593 = vmul.f32 %v2556, %v2581
        %v2594 = vmul.f32 %v2556, %v2582
        %v2595 = vmul.f32 %v2556, %v2583
        %v2596 = vmul.f32 %v2556, %v2584
        %v2597 = vadd.f32 %v2544, %v2591
        %v2598 = vadd.f32 %v2545, %v2592
        %v2599 = vadd.f32 %v2546, %v2593
        %v2600 = vadd.f32 %v2547, %v2594
        %v2601 = vadd.f32 %v2548, %v2595
        %v2602 = vadd.f32 %v2549, %v2596
        %v2603 = vld [vmem:[#allocation2 + $0x8] sm:$0xff]
        %v2604 = vld [vmem:[#allocation2 + $0x10] sm:$0xff]
        %v2605 = vld [vmem:[#allocation2 + $0x18] sm:$0xff]
        %2606 = vset.pattern.permute.xlu0 5
        %2607 = vperm.xlu0 %2606, %v2354
        %v2608 = vpop.permute.xlu0 %2607
        %v2613 = vcombine.high %v2603, %v2603
        %v2614 = vcombine.high %v2604, %v2604
        %v2615 = vcombine.high %v2605, %v2605
        %v2619 = vmul.f32 %v2608, %v2603
        %v2620 = vmul.f32 %v2608, %v2613
        %v2621 = vmul.f32 %v2608, %v2604
        %v2622 = vmul.f32 %v2608, %v2614
        %v2623 = vmul.f32 %v2608, %v2605
        %v2624 = vmul.f32 %v2608, %v2615
        %v2625 = vadd.f32 %v2597, %v2619
        %v2626 = vadd.f32 %v2598, %v2620
        %v2627 = vadd.f32 %v2599, %v2621
        %v2628 = vadd.f32 %v2600, %v2622
        %v2629 = vadd.f32 %v2601, %v2623
        %v2630 = vadd.f32 %v2602, %v2624
        %v2631 = vld [vmem:[#allocation2 + $0x8] sm:$0xff]
        %v2632 = vld [vmem:[#allocation2 + $0x10] sm:$0xff]
        %v2633 = vld [vmem:[#allocation2 + $0x18] sm:$0xff]
        %2634 = vset.pattern.permute.xlu0 6
        %2635 = vperm.xlu0 %2634, %v2354
        %v2636 = vpop.permute.xlu0 %2635
        %v2641 = vcombine.high %v2631, %v2631
        %v2642 = vcombine.high %v2632, %v2632
        %v2643 = vcombine.high %v2633, %v2633
        %2644 = vrot.lane.b32.xlu0 %v2631, 102
        %v2645 = vpop.permute.xlu0 %2644
        %2646 = vrot.lane.b32.xlu0 %v2641, 102
        %v2647 = vpop.permute.xlu0 %2646
        %2648 = vrot.lane.b32.xlu0 %v2632, 102
        %v2649 = vpop.permute.xlu0 %2648
        %2650 = vrot.lane.b32.xlu0 %v2642, 102
        %v2651 = vpop.permute.xlu0 %2650
        %2652 = vrot.lane.b32.xlu0 %v2633, 102
        %v2653 = vpop.permute.xlu0 %2652
        %2654 = vrot.lane.b32.xlu0 %v2643, 102
        %v2655 = vpop.permute.xlu0 %2654
        %v2656 = vsel %vm861, %v2645, %v2647
        %v2657 = vsel %vm861, %v2647, %v2649
        %v2658 = vsel %vm861, %v2649, %v2651
        %v2659 = vsel %vm861, %v2651, %v2653
        %v2660 = vsel %vm861, %v2653, %v2655
        %v2667 = vmul.f32 %v2636, %v2656
        %v2668 = vmul.f32 %v2636, %v2657
        %v2669 = vmul.f32 %v2636, %v2658
        %v2670 = vmul.f32 %v2636, %v2659
        %v2671 = vmul.f32 %v2636, %v2660
        %v2672 = vmul.f32 %v2636, %v2655
        %v2673 = vadd.f32 %v2625, %v2667
        %v2674 = vadd.f32 %v2626, %v2668
        %v2675 = vadd.f32 %v2627, %v2669
        %v2676 = vadd.f32 %v2628, %v2670
        %v2677 = vadd.f32 %v2629, %v2671
        %v2678 = vadd.f32 %v2630, %v2672
        %v2679 = vld [vmem:[#allocation2 + $0x8] sm:$0xff]
        %v2680 = vld [vmem:[#allocation2 + $0x10] sm:$0xff]
        %v2681 = vld [vmem:[#allocation2 + $0x18] sm:$0xff]
        %2682 = vset.pattern.permute.xlu0 7
        %2683 = vperm.xlu0 %2682, %v2354
        %v2684 = vpop.permute.xlu0 %2683
        %v2689 = vcombine.high %v2679, %v2679
        %v2690 = vcombine.high %v2680, %v2680
        %v2691 = vcombine.high %v2681, %v2681
        %2692 = vrot.lane.b32.xlu0 %v2679, 76
        %v2693 = vpop.permute.xlu0 %2692
        %2694 = vrot.lane.b32.xlu0 %v2689, 76
        %v2695 = vpop.permute.xlu0 %2694
        %2696 = vrot.lane.b32.xlu0 %v2680, 76
        %v2697 = vpop.permute.xlu0 %2696
        %2698 = vrot.lane.b32.xlu0 %v2690, 76
        %v2699 = vpop.permute.xlu0 %2698
        %2700 = vrot.lane.b32.xlu0 %v2681, 76
        %v2701 = vpop.permute.xlu0 %2700
        %2702 = vrot.lane.b32.xlu0 %v2691, 76
        %v2703 = vpop.permute.xlu0 %2702
        %v2704 = vsel %vm1438, %v2693, %v2695
        %v2705 = vsel %vm1438, %v2695, %v2697
        %v2706 = vsel %vm1438, %v2697, %v2699
        %v2707 = vsel %vm1438, %v2699, %v2701
        %v2708 = vsel %vm1438, %v2701, %v2703
        %v2715 = vmul.f32 %v2684, %v2704
        %v2716 = vmul.f32 %v2684, %v2705
        %v2717 = vmul.f32 %v2684, %v2706
        %v2718 = vmul.f32 %v2684, %v2707
        %v2719 = vmul.f32 %v2684, %v2708
        %v2720 = vmul.f32 %v2684, %v2703
        %v2721 = vadd.f32 %v2673, %v2715
        %v2722 = vadd.f32 %v2674, %v2716
        %v2723 = vadd.f32 %v2675, %v2717
        %v2724 = vadd.f32 %v2676, %v2718
        %v2725 = vadd.f32 %v2677, %v2719
        %v2726 = vadd.f32 %v2678, %v2720
        %v2727 = vld [vmem:[#allocation2 + $0x8] sm:$0xff]
        %v2728 = vld [vmem:[#allocation2 + $0x10] sm:$0xff]
        %v2729 = vld [vmem:[#allocation2 + $0x18] sm:$0xff]
        %2730 = vset.pattern.permute.xlu0 8
        %2731 = vperm.xlu0 %2730, %v2354
        %v2732 = vpop.permute.xlu0 %2731
        %v2737 = vcombine.high %v2727, %v2727
        %v2738 = vcombine.high %v2728, %v2728
        %v2739 = vcombine.high %v2729, %v2729
        %2740 = vrot.lane.b32.xlu0 %v2727, 50
        %v2741 = vpop.permute.xlu0 %2740
        %2742 = vrot.lane.b32.xlu0 %v2737, 50
        %v2743 = vpop.permute.xlu0 %2742
        %2744 = vrot.lane.b32.xlu0 %v2728, 50
        %v2745 = vpop.permute.xlu0 %2744
        %2746 = vrot.lane.b32.xlu0 %v2738, 50
        %v2747 = vpop.permute.xlu0 %2746
        %2748 = vrot.lane.b32.xlu0 %v2729, 50
        %v2749 = vpop.permute.xlu0 %2748
        %2750 = vrot.lane.b32.xlu0 %v2739, 50
        %v2751 = vpop.permute.xlu0 %2750
        %v2752 = vsel %vm1465, %v2741, %v2743
        %v2753 = vsel %vm1465, %v2743, %v2745
        %v2754 = vsel %vm1465, %v2745, %v2747
        %v2755 = vsel %vm1465, %v2747, %v2749
        %v2756 = vsel %vm1465, %v2749, %v2751
        %v2763 = vmul.f32 %v2732, %v2752
        %v2764 = vmul.f32 %v2732, %v2753
        %v2765 = vmul.f32 %v2732, %v2754
        %v2766 = vmul.f32 %v2732, %v2755
        %v2767 = vmul.f32 %v2732, %v2756
        %v2768 = vmul.f32 %v2732, %v2751
        %v2769 = vadd.f32 %v2721, %v2763
        %v2770 = vadd.f32 %v2722, %v2764
        %v2771 = vadd.f32 %v2723, %v2765
        %v2772 = vadd.f32 %v2724, %v2766
        %v2773 = vadd.f32 %v2725, %v2767
        %v2774 = vadd.f32 %v2726, %v2768
        %v2775 = vld [vmem:[#allocation2 + $0x8] sm:$0xff]
        %v2776 = vld [vmem:[#allocation2 + $0x10] sm:$0xff]
        %v2777 = vld [vmem:[#allocation2 + $0x18] sm:$0xff]
        %v2778 = vld [vmem:[#allocation2 + $0x20] sm:$0xf]
        %2779 = vset.pattern.permute.xlu0 9
        %2780 = vperm.xlu0 %2779, %v2354
        %v2781 = vpop.permute.xlu0 %2780
        %v2787 = vcombine.high %v2775, %v2775
        %v2788 = vcombine.high %v2776, %v2776
        %v2789 = vcombine.high %v2777, %v2777
        %2790 = vrot.lane.b32.xlu0 %v2775, 24
        %v2791 = vpop.permute.xlu0 %2790
        %2792 = vrot.lane.b32.xlu0 %v2787, 24
        %v2793 = vpop.permute.xlu0 %2792
        %2794 = vrot.lane.b32.xlu0 %v2776, 24
        %v2795 = vpop.permute.xlu0 %2794
        %2796 = vrot.lane.b32.xlu0 %v2788, 24
        %v2797 = vpop.permute.xlu0 %2796
        %2798 = vrot.lane.b32.xlu0 %v2777, 24
        %v2799 = vpop.permute.xlu0 %2798
        %2800 = vrot.lane.b32.xlu0 %v2789, 24
        %v2801 = vpop.permute.xlu0 %2800
        %2802 = vrot.lane.b32.xlu0 %v2778, 24
        %v2803 = vpop.permute.xlu0 %2802
        %v2804 = vsel %vm1486, %v2791, %v2793
        %v2805 = vsel %vm1486, %v2793, %v2795
        %v2806 = vsel %vm1486, %v2795, %v2797
        %v2807 = vsel %vm1486, %v2797, %v2799
        %v2808 = vsel %vm1486, %v2799, %v2801
        %v2809 = vsel %vm1486, %v2801, %v2803
        %v2816 = vmul.f32 %v2781, %v2804
        %v2817 = vmul.f32 %v2781, %v2805
        %v2818 = vmul.f32 %v2781, %v2806
        %v2819 = vmul.f32 %v2781, %v2807
        %v2820 = vmul.f32 %v2781, %v2808
        %v2821 = vmul.f32 %v2781, %v2809
        %v2822 = vadd.f32 %v2769, %v2816
        %v2823 = vadd.f32 %v2770, %v2817
        %v2824 = vadd.f32 %v2771, %v2818
        %v2825 = vadd.f32 %v2772, %v2819
        %v2826 = vadd.f32 %v2773, %v2820
        %v2827 = vadd.f32 %v2774, %v2821
        %v2828 = vld [vmem:[#allocation2 + $0xc] sm:$0xff]
        %v2829 = vld [vmem:[#allocation2 + $0x14] sm:$0xff]
        %v2830 = vld [vmem:[#allocation2 + $0x1c] sm:$0xff]
        %2831 = vset.pattern.permute.xlu0 10
        %2832 = vperm.xlu0 %2831, %v2354
        %v2833 = vpop.permute.xlu0 %2832
        %v2838 = vcombine.high %v2828, %v2828
        %v2839 = vcombine.high %v2829, %v2829
        %v2840 = vcombine.high %v2830, %v2830
        %2841 = vrot.lane.b32.xlu0 %v2828, 126
        %v2842 = vpop.permute.xlu0 %2841
        %2843 = vrot.lane.b32.xlu0 %v2838, 126
        %v2844 = vpop.permute.xlu0 %2843
        %2845 = vrot.lane.b32.xlu0 %v2829, 126
        %v2846 = vpop.permute.xlu0 %2845
        %2847 = vrot.lane.b32.xlu0 %v2839, 126
        %v2848 = vpop.permute.xlu0 %2847
        %2849 = vrot.lane.b32.xlu0 %v2830, 126
        %v2850 = vpop.permute.xlu0 %2849
        %2851 = vrot.lane.b32.xlu0 %v2840, 126
        %v2852 = vpop.permute.xlu0 %2851
        %v2853 = vsel %vm1256, %v2842, %v2844
        %v2854 = vsel %vm1256, %v2844, %v2846
        %v2855 = vsel %vm1256, %v2846, %v2848
        %v2856 = vsel %vm1256, %v2848, %v2850
        %v2857 = vsel %vm1256, %v2850, %v2852
        %v2864 = vmul.f32 %v2833, %v2853
        %v2865 = vmul.f32 %v2833, %v2854
        %v2866 = vmul.f32 %v2833, %v2855
        %v2867 = vmul.f32 %v2833, %v2856
        %v2868 = vmul.f32 %v2833, %v2857
        %v2869 = vmul.f32 %v2833, %v2852
        %v2870 = vadd.f32 %v2822, %v2864
        %v2871 = vadd.f32 %v2823, %v2865
        %v2872 = vadd.f32 %v2824, %v2866
        %v2873 = vadd.f32 %v2825, %v2867
        %v2874 = vadd.f32 %v2826, %v2868
        %v2875 = vadd.f32 %v2827, %v2869
        %v2876 = vld [vmem:[%s9] sm:$0xf]
        %2878 = vset.pattern.permute.xlu0 0
        %2879 = vperm.xlu0 %2878, %v2876
        %v2880 = vpop.permute.xlu0 %2879
        %v2882 = vadd.f32 %v2870, %v2880
        %v2883 = vadd.f32 %v2871, %v2880
        %v2884 = vadd.f32 %v2872, %v2880
        %v2885 = vadd.f32 %v2873, %v2880
        %v2886 = vadd.f32 %v2874, %v2880
        %v2887 = vadd.f32 %v2875, %v2880
        %v2888 = vld [vmem:[%s10] sm:$0x3]
        %v2889 = vpack.c.bf16 %v2882, %v2882
        %v2890 = vpack.c.bf16 %v2883, %v2883
        %v2891 = vpack.c.bf16 %v2884, %v2884
        %v2892 = vpack.c.bf16 %v2885, %v2885
        %v2893 = vpack.c.bf16 %v2886, %v2886
        %v2894 = vpack.c.bf16 %v2887, %v2887
        %v2895 = vld [vmem:[%s11] sm:$0xf]
        %2897 = vset.pattern.permute.xlu0 0
        %2898 = vperm.xlu0 %2897, %v2895
        %v2899 = vpop.permute.xlu0 %2898
        %v2902 = vsel %vm1588, %v2888, 0
        %v2905 = vsel %vm977, %v2889, 0
        %v2908 = vsel %vm977, %v2890, 0
        %v2911 = vsel %vm977, %v2891, 0
        %v2914 = vsel %vm977, %v2892, 0
        %v2917 = vsel %vm977, %v2893, 0
        %v2920 = vsel %vm977, %v2894, 0
        %2922 = vmatprep.subr.bf16.mxu0 0
        %2923 = vmatpush1.bf16.msra.mxu0 0
        %2924 = vmatprep.subr.bf16.mxu0 0
        %2925 = vmatpush1.bf16.msra.mxu0 0
        %2926 = vmatprep.subr.bf16.mxu0 0
        %2927 = vmatpush1.bf16.msra.mxu0 0
        %2928 = vmatprep.subr.bf16.mxu0 0
        %2929 = vmatpush1.bf16.msra.mxu0 0
        %2930 = vmatprep.subr.bf16.mxu0 0
        %2931 = vmatpush1.bf16.msra.mxu0 0
        %2932 = vmatprep.subr.bf16.mxu0 0
        %2933 = vmatpush1.bf16.msra.mxu0 0
        %2934 = vmatprep.subr.bf16.mxu0 0
        %2935 = vmatpush1.bf16.msra.mxu0 0
        %2936 = vmatprep.subr.bf16.mxu0 %v2908
        %2937 = vmatpush1.bf16.msra.mxu0 %v2905
        %2938 = vmatprep.subr.bf16.mxu0 0
        %2939 = vmatpush2.bf16.msra.mxu0 0
        %2940 = vmatprep.subr.bf16.mxu0 0
        %2941 = vmatpush2.bf16.msra.mxu0 0
        %2942 = vmatprep.subr.bf16.mxu0 0
        %2943 = vmatpush2.bf16.msra.mxu0 0
        %2944 = vmatprep.subr.bf16.mxu0 0
        %2945 = vmatpush2.bf16.msra.mxu0 0
        %2946 = vmatprep.subr.bf16.mxu0 0
        %2947 = vmatpush2.bf16.msra.mxu0 0
        %2948 = vmatprep.subr.bf16.mxu0 0
        %2949 = vmatpush2.bf16.msra.mxu0 0
        %2950 = vmatprep.subr.bf16.mxu0 0
        %2951 = vmatpush2.bf16.msra.mxu0 0
        %2952 = vmatprep.subr.bf16.mxu0 0
        %2953 = vmatpush2.bf16.msra.mxu0 0
        %2954 = vmatprep.mubr.bf16.mxu0 0
        %2955 = vmatmul.mubr.bf16.gmra.mxu0 %v2902
        %v2956 = vpop.f32.mrf.mxu0
        %v2957 = vadd.f32 %v2899, %v2956
        %v2958 = vpop.f32.mrf.mxu0
        %v2959 = vadd.f32 %v2899, %v2958
        %v2960 = vpop.f32.mrf.mxu0
        %v2961 = vpop.f32.mrf.mxu0
        %2962 = vdwg.mxu0
        %2963 = vmatprep.subr.bf16.mxu0 0
        %2964 = vmatpush1.bf16.msra.mxu0 0
        %2965 = vmatprep.subr.bf16.mxu0 0
        %2966 = vmatpush1.bf16.msra.mxu0 0
        %2967 = vmatprep.subr.bf16.mxu0 0
        %2968 = vmatpush1.bf16.msra.mxu0 0
        %2969 = vmatprep.subr.bf16.mxu0 0
        %2970 = vmatpush1.bf16.msra.mxu0 0
        %2971 = vmatprep.subr.bf16.mxu0 0
        %2972 = vmatpush1.bf16.msra.mxu0 0
        %2973 = vmatprep.subr.bf16.mxu0 0
        %2974 = vmatpush1.bf16.msra.mxu0 0
        %2975 = vmatprep.subr.bf16.mxu0 0
        %2976 = vmatpush1.bf16.msra.mxu0 0
        %2977 = vmatprep.subr.bf16.mxu0 %v2914
        %2978 = vmatpush1.bf16.msra.mxu0 %v2911
        %2979 = vmatprep.subr.bf16.mxu0 0
        %2980 = vmatpush2.bf16.msra.mxu0 0
        %2981 = vmatprep.subr.bf16.mxu0 0
        %2982 = vmatpush2.bf16.msra.mxu0 0
        %2983 = vmatprep.subr.bf16.mxu0 0
        %2984 = vmatpush2.bf16.msra.mxu0 0
        %2985 = vmatprep.subr.bf16.mxu0 0
        %2986 = vmatpush2.bf16.msra.mxu0 0
        %2987 = vmatprep.subr.bf16.mxu0 0
        %2988 = vmatpush2.bf16.msra.mxu0 0
        %2989 = vmatprep.subr.bf16.mxu0 0
        %2990 = vmatpush2.bf16.msra.mxu0 0
        %2991 = vmatprep.subr.bf16.mxu0 0
        %2992 = vmatpush2.bf16.msra.mxu0 0
        %2993 = vmatprep.subr.bf16.mxu0 0
        %2994 = vmatpush2.bf16.msra.mxu0 0
        %2995 = vmatprep.mubr.bf16.mxu0 0
        %2996 = vmatmul.mubr.bf16.gmra.mxu0 %v2902
        %v2997 = vpop.f32.mrf.mxu0
        %v2998 = vadd.f32 %v2899, %v2997
        %v2999 = vpop.f32.mrf.mxu0
        %v3000 = vadd.f32 %v2899, %v2999
        %v3001 = vpop.f32.mrf.mxu0
        %v3002 = vpop.f32.mrf.mxu0
        %3003 = vdwg.mxu0
        %3004 = vmatprep.subr.bf16.mxu0 0
        %3005 = vmatpush1.bf16.msra.mxu0 0
        %3006 = vmatprep.subr.bf16.mxu0 0
        %3007 = vmatpush1.bf16.msra.mxu0 0
        %3008 = vmatprep.subr.bf16.mxu0 0
        %3009 = vmatpush1.bf16.msra.mxu0 0
        %3010 = vmatprep.subr.bf16.mxu0 0
        %3011 = vmatpush1.bf16.msra.mxu0 0
        %3012 = vmatprep.subr.bf16.mxu0 0
        %3013 = vmatpush1.bf16.msra.mxu0 0
        %3014 = vmatprep.subr.bf16.mxu0 0
        %3015 = vmatpush1.bf16.msra.mxu0 0
        %3016 = vmatprep.subr.bf16.mxu0 0
        %3017 = vmatpush1.bf16.msra.mxu0 0
        %3018 = vmatprep.subr.bf16.mxu0 %v2920
        %3019 = vmatpush1.bf16.msra.mxu0 %v2917
        %3020 = vmatprep.subr.bf16.mxu0 0
        %3021 = vmatpush2.bf16.msra.mxu0 0
        %3022 = vmatprep.subr.bf16.mxu0 0
        %3023 = vmatpush2.bf16.msra.mxu0 0
        %3024 = vmatprep.subr.bf16.mxu0 0
        %3025 = vmatpush2.bf16.msra.mxu0 0
        %3026 = vmatprep.subr.bf16.mxu0 0
        %3027 = vmatpush2.bf16.msra.mxu0 0
        %3028 = vmatprep.subr.bf16.mxu0 0
        %3029 = vmatpush2.bf16.msra.mxu0 0
        %3030 = vmatprep.subr.bf16.mxu0 0
        %3031 = vmatpush2.bf16.msra.mxu0 0
        %3032 = vmatprep.subr.bf16.mxu0 0
        %3033 = vmatpush2.bf16.msra.mxu0 0
        %3034 = vmatprep.subr.bf16.mxu0 0
        %3035 = vmatpush2.bf16.msra.mxu0 0
        %3036 = vmatprep.mubr.bf16.mxu0 0
        %3037 = vmatmul.mubr.bf16.gmra.mxu0 %v2902
        %v3038 = vpop.f32.mrf.mxu0
        %v3039 = vadd.f32 %v2899, %v3038
        %v3040 = vpop.f32.mrf.mxu0
        %v3041 = vadd.f32 %v2899, %v3040
        %v3042 = vpop.f32.mrf.mxu0
        %v3043 = vpop.f32.mrf.mxu0
        %3044 = vdwg.mxu0
        %v3045 = vsub.f32 0.0, %v2957
        %v3046 = vsub.f32 0.0, %v2959
        %v3047 = vsub.f32 0.0, %v2998
        %v3048 = vsub.f32 0.0, %v3000
        %v3049 = vsub.f32 0.0, %v3039
        %v3050 = vsub.f32 0.0, %v3041
        %v3051 = vmul.f32 %v3045, 1.442695
        %v3052 = vpow.pop %v3051
        %v3053 = vmul.f32 %v3046, 1.442695
        %v3054 = vpow.pop %v3053
        %v3055 = vmul.f32 %v3047, 1.442695
        %v3056 = vpow.pop %v3055
        %v3057 = vmul.f32 %v3048, 1.442695
        %v3058 = vpow.pop %v3057
        %v3059 = vmul.f32 %v3049, 1.442695
        %v3060 = vpow.pop %v3059
        %v3061 = vmul.f32 %v3050, 1.442695
        %v3062 = vpow.pop %v3061
        %v3063 = vadd.f32 %v3052, 1.0
        %v3064 = vadd.f32 %v3054, 1.0
        %v3065 = vadd.f32 %v3056, 1.0
        %v3066 = vadd.f32 %v3058, 1.0
        %v3067 = vadd.f32 %v3060, 1.0
        %v3068 = vadd.f32 %v3062, 1.0
        %v3069 = vrcp.pop %v3063
        %v3070 = vrcp.pop %v3064
        %v3071 = vrcp.pop %v3065
        %v3072 = vrcp.pop %v3066
        %v3073 = vrcp.pop %v3067
        %v3074 = vrcp.pop %v3068
        %v3075 = vmul.f32 %v2957, %v3069
        %v3076 = vmul.f32 %v2959, %v3070
        %v3077 = vmul.f32 %v2998, %v3071
        %v3078 = vmul.f32 %v3000, %v3072
        %v3079 = vmul.f32 %v3039, %v3073
        %v3080 = vmul.f32 %v3041, %v3074
        %v3081 = vsub.f32 0.0, %v3075
        %v3082 = vsub.f32 0.0, %v3076
        %v3083 = vsub.f32 0.0, %v3077
        %v3084 = vsub.f32 0.0, %v3078
        %v3085 = vsub.f32 0.0, %v3079
        %v3086 = vsub.f32 0.0, %v3080
        %v3087 = vmul.f32 %v3081, 1.442695
        %v3088 = vpow.pop %v3087
        %v3089 = vmul.f32 %v3082, 1.442695
        %v3090 = vpow.pop %v3089
        %v3091 = vmul.f32 %v3083, 1.442695
        %v3092 = vpow.pop %v3091
        %v3093 = vmul.f32 %v3084, 1.442695
        %v3094 = vpow.pop %v3093
        %v3095 = vmul.f32 %v3085, 1.442695
        %v3096 = vpow.pop %v3095
        %v3097 = vmul.f32 %v3086, 1.442695
        %v3098 = vpow.pop %v3097
        %v3099 = vadd.f32 %v3088, 1.0
        %v3100 = vadd.f32 %v3090, 1.0
        %v3101 = vadd.f32 %v3092, 1.0
        %v3102 = vadd.f32 %v3094, 1.0
        %v3103 = vadd.f32 %v3096, 1.0
        %v3104 = vadd.f32 %v3098, 1.0
        %v3105 = vrcp.pop %v3099
        %v3106 = vrcp.pop %v3100
        %v3107 = vrcp.pop %v3101
        %v3108 = vrcp.pop %v3102
        %v3109 = vrcp.pop %v3103
        %v3110 = vrcp.pop %v3104
        %v3117 = vcombine.low %v3105, %v3106
        %v3118 = vcombine.low %v3107, %v3108
        %v3119 = vcombine.low %v3109, %v3110
        %3123 = vst [vmem:[#allocation3 + $0x8] sm:$0xff] %v3117
        %3124 = vst [vmem:[#allocation3 + $0x10] sm:$0xff] %v3118
        %3125 = vst.msk [vmem:[#allocation3 + $0x18] sm:$0xff] %vm1207, %v3119
        %v3126 = vld [vmem:[#allocation3 + $0xc] sm:$0xf]
        %v3127 = vld [vmem:[%s389] sm:$0xf]
        %3129 = vrot.lane.b32.xlu0 %v3127, 7
        %v3130 = vpop.permute.xlu0 %3129
        %v3132 = vadd.f32 %v3126, %v3130
        %3134 = vrot.lane.b32.xlu0 %v3132, 121
        %v3135 = vpop.permute.xlu0 %3134
        %vm3137 = vcmask 125952
        %3138 = vst.msk [vmem:[%s429] sm:$0xf] %vm3137, %v3135
        %v3139 = vld [vmem:[#allocation3 + $0xc] sm:$0xf]
        %v3140 = vld [vmem:[%s389] sm:$0xf]
        %3142 = vrot.lane.b32.xlu0 %v3140, 17
        %v3143 = vpop.permute.xlu0 %3142
        %v3145 = vadd.f32 %v3139, %v3143
        %3147 = vrot.lane.b32.xlu0 %v3145, 111
        %v3148 = vpop.permute.xlu0 %3147
        %vm3150 = vcmask 257152
        %3151 = vst.msk [vmem:[%s429] sm:$0xf] %vm3150, %v3148
        %v3152 = vld [vmem:[#allocation3 + $0xc] sm:$0xf]
        %v3153 = vld [vmem:[%s389] sm:$0xf]
        %3155 = vrot.lane.b32.xlu0 %v3153, 27
        %v3156 = vpop.permute.xlu0 %3155
        %v3158 = vadd.f32 %v3152, %v3156
        %3160 = vrot.lane.b32.xlu0 %v3158, 101
        %v3161 = vpop.permute.xlu0 %3160
        %vm3163 = vcmask 388352
        %3164 = vst.msk [vmem:[%s429] sm:$0xf] %vm3163, %v3161
        %v3165 = vld [vmem:[#allocation3 + $0xc] sm:$0xf]
        %v3166 = vld [vmem:[%s389] sm:$0xf]
        %3168 = vrot.lane.b32.xlu0 %v3166, 37
        %v3169 = vpop.permute.xlu0 %3168
        %v3171 = vadd.f32 %v3165, %v3169
        %3173 = vrot.lane.b32.xlu0 %v3171, 91
        %v3174 = vpop.permute.xlu0 %3173
        %vm3176 = vcmask 519552
        %3177 = vst.msk [vmem:[%s429] sm:$0xf] %vm3176, %v3174
        %v3178 = vld [vmem:[#allocation3 + $0xc] sm:$0xf]
        %v3179 = vld [vmem:[%s389] sm:$0xf]
        %3181 = vrot.lane.b32.xlu0 %v3179, 47
        %v3182 = vpop.permute.xlu0 %3181
        %v3184 = vadd.f32 %v3178, %v3182
        %3186 = vrot.lane.b32.xlu0 %v3184, 81
        %v3187 = vpop.permute.xlu0 %3186
        %vm3189 = vcmask 650752
        %3190 = vst.msk [vmem:[%s429] sm:$0xf] %vm3189, %v3187
        %v3191 = vld [vmem:[#allocation3 + $0x10] sm:$0xf]
        %v3192 = vld [vmem:[%s389] sm:$0xf]
        %3194 = vrot.lane.b32.xlu0 %v3192, 57
        %v3195 = vpop.permute.xlu0 %3194
        %v3197 = vadd.f32 %v3191, %v3195
        %3199 = vrot.lane.b32.xlu0 %v3197, 71
        %v3200 = vpop.permute.xlu0 %3199
        %vm3202 = vcmask 781952
        %3203 = vst.msk [vmem:[%s429] sm:$0xf] %vm3202, %v3200
        %v3204 = vld [vmem:[#allocation3 + $0x10] sm:$0xf]
        %v3205 = vld [vmem:[%s389] sm:$0xf]
        %3207 = vrot.lane.b32.xlu0 %v3205, 67
        %v3208 = vpop.permute.xlu0 %3207
        %v3210 = vadd.f32 %v3204, %v3208
        %3212 = vrot.lane.b32.xlu0 %v3210, 61
        %v3213 = vpop.permute.xlu0 %3212
        %vm3215 = vcmask 913152
        %3216 = vst.msk [vmem:[%s429] sm:$0xf] %vm3215, %v3213
        %v3217 = vld [vmem:[#allocation3 + $0x10] sm:$0xf]
        %v3218 = vld [vmem:[%s389] sm:$0xf]
        %3220 = vrot.lane.b32.xlu0 %v3218, 77
        %v3221 = vpop.permute.xlu0 %3220
        %v3223 = vadd.f32 %v3217, %v3221
        %3225 = vrot.lane.b32.xlu0 %v3223, 51
        %v3226 = vpop.permute.xlu0 %3225
        %vm3228 = vcmask 1044352
        %3229 = vst.msk [vmem:[%s429] sm:$0xf] %vm3228, %v3226
        %v3230 = vld [vmem:[#allocation3 + $0x10] sm:$0xf]
        %v3231 = vld [vmem:[%s389 + $0x4] sm:$0xf]
        %3233 = vrot.lane.b32.xlu0 %v3231, 87
        %v3234 = vpop.permute.xlu0 %3233
        %v3236 = vadd.f32 %v3230, %v3234
        %3238 = vrot.lane.b32.xlu0 %v3236, 41
        %v3239 = vpop.permute.xlu0 %3238
        %3241 = vst.msk [vmem:[%s429 + $0x4] sm:$0xf] %vm3137, %v3239
        %v3242 = vld [vmem:[#allocation3 + $0x10] sm:$0xff]
        %v3243 = vld [vmem:[%s389 + $0x4] sm:$0xf]
        %3245 = vrot.lane.b32.xlu0 %v3243, 97
        %v3246 = vpop.permute.xlu0 %3245
        %v3247 = vrot.slane %v3246, 4
        %v3248 = vsel %vm510, %v3247, %v3246
        %v3250 = vadd.f32 %v3242, %v3248
        %3252 = vrot.lane.b32.xlu0 %v3250, 31
        %v3253 = vpop.permute.xlu0 %3252
        %v3254 = vrot.slane %v3253, 4
        %vm3255 = vcmask 252928
        %v3256 = vsel %vm3255, %v3253, %v3254
        %3258 = vst.msk [vmem:[%s429 + $0x4] sm:$0xf] %vm3150, %v3256
        %v3259 = vld [vmem:[#allocation3 + $0x14] sm:$0xf]
        %v3260 = vld [vmem:[%s389 + $0x4] sm:$0xf]
        %3262 = vrot.lane.b32.xlu0 %v3260, 107
        %v3263 = vpop.permute.xlu0 %3262
        %v3265 = vadd.f32 %v3259, %v3263
        %3267 = vrot.lane.b32.xlu0 %v3265, 21
        %v3268 = vpop.permute.xlu0 %3267
        %3270 = vst.msk [vmem:[%s429 + $0x4] sm:$0xf] %vm3163, %v3268
        %v3271 = vld [vmem:[#allocation3 + $0x14] sm:$0xf]
        %v3272 = vld [vmem:[%s389 + $0x4] sm:$0xf]
        %3274 = vrot.lane.b32.xlu0 %v3272, 117
        %v3275 = vpop.permute.xlu0 %3274
        %v3277 = vadd.f32 %v3271, %v3275
        %3279 = vrot.lane.b32.xlu0 %v3277, 11
        %v3280 = vpop.permute.xlu0 %3279
        %3282 = vst.msk [vmem:[%s429 + $0x4] sm:$0xf] %vm3176, %v3280
        %v3283 = vld [vmem:[#allocation3 + $0x14] sm:$0xf]
        %v3284 = vld [vmem:[%s389 + $0x4] sm:$0xf]
        %3286 = vrot.lane.b32.xlu0 %v3284, 127
        %v3287 = vpop.permute.xlu0 %3286
        %v3289 = vadd.f32 %v3283, %v3287
        %3291 = vrot.lane.b32.xlu0 %v3289, 1
        %v3292 = vpop.permute.xlu0 %3291
        %3294 = vst.msk [vmem:[%s429 + $0x4] sm:$0xf] %vm3189, %v3292
        %v3295 = vld [vmem:[#allocation3 + $0x14] sm:$0xf]
        %v3296 = vld [vmem:[%s389 + $0x4] sm:$0xf]
        %3298 = vrot.lane.b32.xlu0 %v3296, 9
        %v3299 = vpop.permute.xlu0 %3298
        %v3301 = vadd.f32 %v3295, %v3299
        %3303 = vrot.lane.b32.xlu0 %v3301, 119
        %v3304 = vpop.permute.xlu0 %3303
        %3306 = vst.msk [vmem:[%s429 + $0x4] sm:$0xf] %vm3202, %v3304
        %v3307 = vld [vmem:[#allocation3 + $0x14] sm:$0xff]
        %v3308 = vld [vmem:[%s389 + $0x4] sm:$0xf]
        %3310 = vrot.lane.b32.xlu0 %v3308, 19
        %v3311 = vpop.permute.xlu0 %3310
        %v3312 = vrot.slane %v3311, 4
        %v3313 = vsel %vm550, %v3312, %v3311
        %v3315 = vadd.f32 %v3307, %v3313
        %3317 = vrot.lane.b32.xlu0 %v3315, 109
        %v3318 = vpop.permute.xlu0 %3317
        %v3319 = vrot.slane %v3318, 4
        %vm3320 = vcmask 891904
        %v3321 = vsel %vm3320, %v3318, %v3319
        %3323 = vst.msk [vmem:[%s429 + $0x4] sm:$0xf] %vm3215, %v3321
        %v3324 = vld [vmem:[#allocation3 + $0x18] sm:$0xf]
        %v3325 = vld [vmem:[%s389 + $0x4] sm:$0xf]
        %3327 = vrot.lane.b32.xlu0 %v3325, 29
        %v3328 = vpop.permute.xlu0 %3327
        %v3330 = vadd.f32 %v3324, %v3328
        %3332 = vrot.lane.b32.xlu0 %v3330, 99
        %v3333 = vpop.permute.xlu0 %3332
        %3335 = vst.msk [vmem:[%s429 + $0x4] sm:$0xf] %vm3228, %v3333
        %s3336 = sand.u32 %s294, 1
        %s3337 = scalar_lea.sflag [#allocation7], %s3336
        %s3338 = sand.u32 %s294, 1
        %s3339 = smul.addr %s3338, 8
        %s3340 = scalar_lea.vmem [#allocation8], %s3339
        // Predicated region
        $region73: #{tpu_custom_call.1} parent=67 // pred_check
          %p3341 = pneg %p304
        $region74: #{tpu_custom_call.1} parent=67 // pred_check_branch
          %3343 = sbr.rel (%p3341) target = $region76
        $region75: #{tpu_custom_call.1} parent=67 // pred_region
          %s3345 = ssub.s32 128, 128
          %3346 = vsyncadd %s3337, %s3345
          %s3347 = smul.addr %s29, 2
          %s3348 = smul.addr %s3347, 64
          %s3349 = scalar_lea.hbm %s12, %s3348
          %s3351 = sshll.u32 %s3340, 4
          %s3352 = int_to_ptr.vmem [resolvable:$true] %s3351
          %3354 = dma.vmem_to_hbm [thread:$0]  %s3352, 128, %s3349, %s3337
        $region76: #{tpu_custom_call.1} parent=67 // pred_fallthru
          _
      $region68: #{tpu_custom_call.1} parent=5 // pred_fallthru
        _
      %p3355 = scmp.le.s32.totalorder 2, %s24
      // Predicated region
      $region77: #{tpu_custom_call.1} parent=5 // pred_check
        %p3356 = pneg %p3355
      $region78: #{tpu_custom_call.1} parent=5 // pred_check_branch
        %3358 = sbr.rel (%p3356) target = $region80
      $region79: #{tpu_custom_call.1} parent=5 // pred_region
        %s3359 = ssub.s32 %s24, 2
        // Predicated region
        $region81: #{tpu_custom_call.1} parent=79 // pred_check
          %p3360 = pneg %p310
        $region82: #{tpu_custom_call.1} parent=79 // pred_check_branch
          %3362 = sbr.rel (%p3360) target = $region84
        $region83: #{tpu_custom_call.1} parent=79 // pred_region
          %s3363 = sand.u32 %s295, 1
          %s3364 = scalar_lea.sflag [#allocation7], %s3363
          %s3365 = sand.u32 %s295, 1
          %s3366 = smul.addr %s3365, 8
          %s3367 = scalar_lea.vmem [#allocation8], %s3366
          %3368 = dma.done %s3364, 128
        $region84: #{tpu_custom_call.1} parent=79 // pred_fallthru
          _
      $region80: #{tpu_custom_call.1} parent=5 // pred_fallthru
        _
    $region6: #{tpu_custom_call.1} parent=1 // loop_footer
      %s28 = sadd.s32 1, %s24
    $region7: #{tpu_custom_call.1} parent=1 // loop_footer_branch
      %23 = sbr.rel target = $region3
    $region8: #{tpu_custom_call.1} parent=1 // loop_exit
      _
    %3369 = vsyncpa [#allocation6], 1
    %s3370 = scalar_lea.sflag [#allocation6], 1
    %3371 = vsyncpa %s3370, 1
    %3372 = vsyncpa [#allocation7], 1
    %s3373 = scalar_lea.sflag [#allocation7], 1
    %3374 = vsyncpa %s3373, 1

</llo_original>
